<compile_context>
chip_gen: v6e
topology: v6e:2x2x1
jax: 0.10.0
libtpu: 0.0.40
codegen_flags: <defaults>
</compile_context>

<pallas_src>
import functools

import jax
import jax.numpy as jnp
from jax.experimental import pallas as pl
from jax.experimental.pallas import tpu as pltpu


def _round_up(x, m):
    return ((x + m - 1) // m) * m


def _device_vmem_bytes():
    """Best-effort device VMEM capacity; conservative 64 MiB (v7x) fallback."""
    try:
        info = pltpu.get_tpu_info()
        cap = getattr(info, "vmem_capacity_bytes", None)
        if cap:
            return int(cap)
    except Exception:
        pass
    return 64 * 1024 * 1024


def _siren_kernel(n_layers, x_ref, *refs):
    """Fused SIREN MLP, feature-major (lane-dense) layout.

    x_ref:  (in_feature, tile_n) -- batch points on the lane (last) axis.
    refs = (w_0, b_0, w_1, b_1, ..., w_{L-1}, b_{L-1}, out_ref)
      w_i: (out_i, in_i)  PyTorch nn.Linear layout, with w0 already folded in
           by the wrapper, so each layer is simply h = sin(W @ h + b).
      b_i: (out_i, 1), broadcast along the lane axis.
    The final sine output is passed through a sigmoid.
    """
    out_ref = refs[-1]
    param_refs = refs[:-1]
    assert len(param_refs) == 2 * n_layers

    h = x_ref[...]  # already f32
    for i in range(n_layers):
        w = param_refs[2 * i][...]
        b = param_refs[2 * i + 1][...]
        z = jnp.dot(
            w, h,
            preferred_element_type=jnp.float32,
            precision=jax.lax.Precision.HIGHEST,
        ) + b
        h = jnp.sin(z)
    out_ref[...] = jax.nn.sigmoid(h).astype(out_ref.dtype)


def siren_mlp_forward_feature_major(xt, weights, biases, *, tile_n=2048):
    """Fused SIREN MLP on feature-major data.

    Args:
      xt: [in_feature, N] float32 (batch on the lane axis; no relayout needed).
      weights: list of (out_i, in_i) float32 matrices (nn.Linear layout).
      biases: list of (out_i, 1) float32 column vectors.
      tile_n: max batch tile on the lane axis; multiple of 128 (256-multiples
        feed the v6e/v7x MXU fully). 2048-8192 are good sweep points.

    Returns:
      [out_feature, N] float32.
    """
    n_layers = len(weights)
    in_feature, N = xt.shape
    out_feature = weights[-1].shape[0]
    assert tile_n % 128 == 0, "tile_n must be a multiple of 128 (lane width)"

    # Fold w0 into the parameters once (layer 0 is is_first -> w0 = 1).
    w0s = [1.0] + [30.0] * (n_layers - 1)
    ws = [w * w0 for w, w0 in zip(weights, w0s)]
    bs = [b * w0 for b, w0 in zip(biases, w0s)]

    # Tile sizing: cap at tile_n, keep 128-lane alignment, and prefer >= 2
    # grid steps so the "parallel" axis shards across both v7x TensorCores.
    half = _round_up(pl.cdiv(N, 2), 128)
    tn = max(128, min(tile_n, half))
    padded_n = _round_up(N, tn)
    if padded_n != N:
        # Padded columns compute harmless values and are sliced off below.
        xt = jnp.pad(xt, ((0, 0), (0, padded_n - N)))
    grid = (padded_n // tn,)

    in_specs = [pl.BlockSpec((in_feature, tn), lambda i: (0, i))]
    operands = [xt]
    for w, b in zip(ws, bs):
        # Full-array resident blocks; constant index_map -> fetched once.
        in_specs.append(pl.BlockSpec(w.shape, lambda i: (0, 0)))
        in_specs.append(pl.BlockSpec(b.shape, lambda i: (0, 0)))
        operands.append(w)
        operands.append(b)

    out_specs = pl.BlockSpec((out_feature, tn), lambda i: (0, i))

    # VMEM budget: double-buffered in/out tiles + params + per-layer
    # activation temporaries, 2x headroom, clamped to 75% of device VMEM.
    max_width = max(max(w.shape[0] for w in ws), in_feature)
    param_bytes = 4 * sum(w.size + b.size for w, b in zip(ws, bs))
    est = 4 * (2 * (in_feature + out_feature) * tn + 4 * max_width * tn)
    est += 2 * param_bytes
    vmem_limit = min(int(0.75 * _device_vmem_bytes()),
                     max(2 * est, 16 * 1024 * 1024))

    # Advisory cost estimate: dominated by per-point sin/sigmoid work.
    flops = 0
    trans = 0
    for w in ws:
        out_i, in_i = w.shape
        flops += (2 * in_i + 1) * out_i * padded_n   # matmul + bias
        trans += out_i * padded_n                    # sin
    trans += out_feature * padded_n                  # sigmoid
    bytes_accessed = 4 * ((in_feature + out_feature) * padded_n) + param_bytes
    cost = pl.CostEstimate(flops=flops, transcendentals=trans,
                           bytes_accessed=bytes_accessed)

    kernel = functools.partial(_siren_kernel, n_layers)

    out_t = pl.pallas_call(
        kernel,
        out_shape=jax.ShapeDtypeStruct((out_feature, padded_n), jnp.float32),
        grid_spec=pltpu.PrefetchScalarGridSpec(
            num_scalar_prefetch=0,
            grid=grid,
            in_specs=in_specs,
            out_specs=out_specs,
        ),
        compiler_params=pltpu.CompilerParams(
            dimension_semantics=("parallel",),
            vmem_limit_bytes=vmem_limit,
        ),
        cost_estimate=cost,
    )(*operands)

    return out_t[:, :N]


def siren_mlp_forward(x, weights, biases, *, tile_n=2048):
    """PyTorch-layout wrapper: x is [N, in_feature], returns [N, out_feature].

    Note: the two transposes are extra HBM passes; callers that already hold
    feature-major data should use siren_mlp_forward_feature_major directly,
    and this wrapper should be called under jit so pad/transpose fuse.
    """
    out_t = siren_mlp_forward_feature_major(x.T, weights, biases, tile_n=tile_n)
    return out_t.T


def init_siren_params(key, in_feature, hidden_feature, hidden_layers, out_feature):
    """Canonical SIREN init; weight shapes match nn.Linear (out, in).

    First layer: U(-1/fan_in, 1/fan_in); later layers: U(+-sqrt(6/fan_in)/w0)
    with w0 = 30 (keeps pre-activations O(1), so the numerical comparison is
    well conditioned).
    """
    w0_hidden = 30.0
    dims = (
        [(in_feature, hidden_feature)]
        + [(hidden_feature, hidden_feature)] * hidden_layers
        + [(hidden_feature, out_feature)]
    )
    weights, biases = [], []
    for idx, (fan_in, fan_out) in enumerate(dims):
        key, wk, bk = jax.random.split(key, 3)
        if idx == 0:
            bound = 1.0 / fan_in
        else:
            bound = float(jnp.sqrt(6.0 / fan_in)) / w0_hidden
        w = jax.random.uniform(
            wk, (fan_out, fan_in), minval=-bound, maxval=bound, dtype=jnp.float32
        )
        # nn.Linear bias default init: U(-1/sqrt(fan_in), 1/sqrt(fan_in)).
        b_bound = 1.0 / float(jnp.sqrt(float(fan_in)))
        b = jax.random.uniform(
            bk, (fan_out, 1), minval=-b_bound, maxval=b_bound, dtype=jnp.float32
        )
        weights.append(w)
        biases.append(b)
    return weights, biases


def siren_mlp_reference(x, weights, biases):
    """Pure-JAX reference mirroring the PyTorch module (batch-major).

    Per layer: sin(w0 * (x @ W.T + b)); final sine output through a sigmoid,
    matching SIREN_MLP's Sequential([..., SineLayer, Sigmoid]).
    """
    h = x
    for i, (w, b) in enumerate(zip(weights, biases)):
        z = jnp.dot(h, w.T, precision=jax.lax.Precision.HIGHEST) + b[:, 0]
        w0 = 1.0 if i == 0 else 30.0
        h = jnp.sin(w0 * z)
    return jax.nn.sigmoid(h)


if __name__ == "__main__":
    # Small shapes consistent with a SIREN implicit-field MLP: N points with
    # 2-D coordinates, hidden width 32, 2 hidden layers, 3 outputs.  N is not
    # a tile multiple to exercise padding; the tile-sizing logic picks
    # tn=256 -> padded_n=512 -> a 2-step parallel grid (both v7x TCs used).
    in_feature = 2
    hidden_feature = 32
    hidden_layers = 2
    out_feature = 3
    N = 500

    key = jax.random.PRNGKey(0)
    key, xk = jax.random.split(key)
    x = jax.random.uniform(
        xk, (N, in_feature), minval=-1.0, maxval=1.0, dtype=jnp.float32
    )

    weights, biases = init_siren_params(
        key, in_feature, hidden_feature, hidden_layers, out_feature
    )

    # Jit the batch-major wrapper so pad/transpose/slice fuse around the call.
    fwd = jax.jit(siren_mlp_forward)
    out = jax.block_until_ready(fwd(x, weights, biases))

    ref = siren_mlp_reference(x, weights, biases)
    assert out.shape == (N, out_feature)
    # sin(30*z) chains amplify rounding differences between contraction
    # orders even at f32/HIGHEST precision; with canonical SIREN init the
    # residual error is ~1e-5, so 2e-3 is a safe yet bug-catching bound on
    # (0,1) sigmoid outputs.
    err = float(jnp.max(jnp.abs(out - ref)))
    assert err < 2e-3, f"mismatch vs reference: max abs err {err:.3e}"

    print("KERNEL_OK")
</pallas_src>

<mosaic_0001>
module attributes {stable_mosaic.version = 11 : i64} {
  func.func @_siren_kernel(%arg0: i32, %arg1: memref<2x256xf32, #tpu.memory_space<vmem>>, %arg2: memref<32x2xf32, #tpu.memory_space<vmem>>, %arg3: memref<32x1xf32, #tpu.memory_space<vmem>>, %arg4: memref<32x32xf32, #tpu.memory_space<vmem>>, %arg5: memref<32x1xf32, #tpu.memory_space<vmem>>, %arg6: memref<32x32xf32, #tpu.memory_space<vmem>>, %arg7: memref<32x1xf32, #tpu.memory_space<vmem>>, %arg8: memref<3x32xf32, #tpu.memory_space<vmem>>, %arg9: memref<3x1xf32, #tpu.memory_space<vmem>>, %arg10: memref<3x256xf32, #tpu.memory_space<vmem>>) attributes {dimension_semantics = [#tpu.dimension_semantics<parallel>], iteration_bounds = array<i64: 2>, scalar_prefetch = 0 : i64, scratch_operands = 0 : i64, tpu.core_type = #tpu.core_type<tc>, window_params = [{transform_indices = @transform_0, window_bounds = array<i64: 2, 256>}, {pipeline_mode = #tpu.pipeline_mode<synchronous>, transform_indices = @transform_1, window_bounds = array<i64: 32, 2>}, {pipeline_mode = #tpu.pipeline_mode<synchronous>, transform_indices = @transform_2, window_bounds = array<i64: 32, 1>}, {pipeline_mode = #tpu.pipeline_mode<synchronous>, transform_indices = @transform_3, window_bounds = array<i64: 32, 32>}, {pipeline_mode = #tpu.pipeline_mode<synchronous>, transform_indices = @transform_4, window_bounds = array<i64: 32, 1>}, {pipeline_mode = #tpu.pipeline_mode<synchronous>, transform_indices = @transform_5, window_bounds = array<i64: 32, 32>}, {pipeline_mode = #tpu.pipeline_mode<synchronous>, transform_indices = @transform_6, window_bounds = array<i64: 32, 1>}, {pipeline_mode = #tpu.pipeline_mode<synchronous>, transform_indices = @transform_7, window_bounds = array<i64: 3, 32>}, {pipeline_mode = #tpu.pipeline_mode<synchronous>, transform_indices = @transform_8, window_bounds = array<i64: 3, 1>}, {transform_indices = @transform_9, window_bounds = array<i64: 3, 256>}]} {
    %c0 = arith.constant 0 : index
    %c0_0 = arith.constant 0 : index
    %0 = vector.load %arg1[%c0, %c0_0] : memref<2x256xf32, #tpu.memory_space<vmem>>, vector<2x256xf32>
    %c0_1 = arith.constant 0 : index
    %c0_2 = arith.constant 0 : index
    %1 = vector.load %arg2[%c0_1, %c0_2] : memref<32x2xf32, #tpu.memory_space<vmem>>, vector<32x2xf32>
    %c0_3 = arith.constant 0 : index
    %c0_4 = arith.constant 0 : index
    %2 = vector.load %arg3[%c0_3, %c0_4] : memref<32x1xf32, #tpu.memory_space<vmem>>, vector<32x1xf32>
    %cst = arith.constant dense<0.000000e+00> : vector<32x256xf32>
    %3 = tpu.matmul %1, %0, %cst {dimension_numbers = #tpu.dot_dimension_numbers<[1], [0], [0], [1], [0, 0, 1, 1], [], []>, precision = #tpu.contract_precision<fp32>} : vector<32x2xf32>, vector<2x256xf32>, vector<32x256xf32> -> vector<32x256xf32>
    %4 = vector.broadcast %2 : vector<32x1xf32> to vector<32x256xf32>
    %5 = arith.addf %3, %4 : vector<32x256xf32>
    %6 = math.sin %5 : vector<32x256xf32>
    %c0_5 = arith.constant 0 : index
    %c0_6 = arith.constant 0 : index
    %7 = vector.load %arg4[%c0_5, %c0_6] : memref<32x32xf32, #tpu.memory_space<vmem>>, vector<32x32xf32>
    %c0_7 = arith.constant 0 : index
    %c0_8 = arith.constant 0 : index
    %8 = vector.load %arg5[%c0_7, %c0_8] : memref<32x1xf32, #tpu.memory_space<vmem>>, vector<32x1xf32>
    %cst_9 = arith.constant dense<0.000000e+00> : vector<32x256xf32>
    %9 = tpu.matmul %7, %6, %cst_9 {dimension_numbers = #tpu.dot_dimension_numbers<[1], [0], [0], [1], [0, 0, 1, 1], [], []>, precision = #tpu.contract_precision<fp32>} : vector<32x32xf32>, vector<32x256xf32>, vector<32x256xf32> -> vector<32x256xf32>
    %10 = vector.broadcast %8 : vector<32x1xf32> to vector<32x256xf32>
    %11 = arith.addf %9, %10 : vector<32x256xf32>
    %12 = math.sin %11 : vector<32x256xf32>
    %c0_10 = arith.constant 0 : index
    %c0_11 = arith.constant 0 : index
    %13 = vector.load %arg6[%c0_10, %c0_11] : memref<32x32xf32, #tpu.memory_space<vmem>>, vector<32x32xf32>
    %c0_12 = arith.constant 0 : index
    %c0_13 = arith.constant 0 : index
    %14 = vector.load %arg7[%c0_12, %c0_13] : memref<32x1xf32, #tpu.memory_space<vmem>>, vector<32x1xf32>
    %cst_14 = arith.constant dense<0.000000e+00> : vector<32x256xf32>
    %15 = tpu.matmul %13, %12, %cst_14 {dimension_numbers = #tpu.dot_dimension_numbers<[1], [0], [0], [1], [0, 0, 1, 1], [], []>, precision = #tpu.contract_precision<fp32>} : vector<32x32xf32>, vector<32x256xf32>, vector<32x256xf32> -> vector<32x256xf32>
    %16 = vector.broadcast %14 : vector<32x1xf32> to vector<32x256xf32>
    %17 = arith.addf %15, %16 : vector<32x256xf32>
    %18 = math.sin %17 : vector<32x256xf32>
    %c0_15 = arith.constant 0 : index
    %c0_16 = arith.constant 0 : index
    %19 = vector.load %arg8[%c0_15, %c0_16] : memref<3x32xf32, #tpu.memory_space<vmem>>, vector<3x32xf32>
    %c0_17 = arith.constant 0 : index
    %c0_18 = arith.constant 0 : index
    %20 = vector.load %arg9[%c0_17, %c0_18] : memref<3x1xf32, #tpu.memory_space<vmem>>, vector<3x1xf32>
    %cst_19 = arith.constant dense<0.000000e+00> : vector<3x256xf32>
    %21 = tpu.matmul %19, %18, %cst_19 {dimension_numbers = #tpu.dot_dimension_numbers<[1], [0], [0], [1], [0, 0, 1, 1], [], []>, precision = #tpu.contract_precision<fp32>} : vector<3x32xf32>, vector<32x256xf32>, vector<3x256xf32> -> vector<3x256xf32>
    %22 = vector.broadcast %20 : vector<3x1xf32> to vector<3x256xf32>
    %23 = arith.addf %21, %22 : vector<3x256xf32>
    %24 = math.sin %23 : vector<3x256xf32>
    %25 = arith.negf %24 : vector<3x256xf32>
    %26 = math.exp %25 : vector<3x256xf32>
    %cst_20 = arith.constant 1.000000e+00 : f32
    %27 = vector.broadcast %cst_20 : f32 to vector<3x256xf32>
    %28 = arith.addf %27, %26 : vector<3x256xf32>
    %29 = arith.divf %27, %28 : vector<3x256xf32>
    %c0_21 = arith.constant 0 : index
    %c0_22 = arith.constant 0 : index
    %30 = vector.load %arg10[%c0_21, %c0_22] : memref<3x256xf32, #tpu.memory_space<vmem>>, vector<3x256xf32>
    tpu.vector_store %arg10[%c0_21, %c0_22], %29 {strides = array<i32>} : memref<3x256xf32, #tpu.memory_space<vmem>>, vector<3x256xf32>,
    return
  }
  func.func @transform_0(%arg0: i32) -> (i32, i32) {
    %c0_i32 = arith.constant 0 : i32
    %c0_i32_0 = arith.constant 0 : i32
    return %c0_i32, %arg0 : i32, i32
  }
  func.func @transform_1(%arg0: i32) -> (i32, i32) {
    %c0_i32 = arith.constant 0 : i32
    %c0_i32_0 = arith.constant 0 : i32
    %c0_i32_1 = arith.constant 0 : i32
    return %c0_i32, %c0_i32_0 : i32, i32
  }
  func.func @transform_2(%arg0: i32) -> (i32, i32) {
    %c0_i32 = arith.constant 0 : i32
    %c0_i32_0 = arith.constant 0 : i32
    %c0_i32_1 = arith.constant 0 : i32
    return %c0_i32, %c0_i32_0 : i32, i32
  }
  func.func @transform_3(%arg0: i32) -> (i32, i32) {
    %c0_i32 = arith.constant 0 : i32
    %c0_i32_0 = arith.constant 0 : i32
    %c0_i32_1 = arith.constant 0 : i32
    return %c0_i32, %c0_i32_0 : i32, i32
  }
  func.func @transform_4(%arg0: i32) -> (i32, i32) {
    %c0_i32 = arith.constant 0 : i32
    %c0_i32_0 = arith.constant 0 : i32
    %c0_i32_1 = arith.constant 0 : i32
    return %c0_i32, %c0_i32_0 : i32, i32
  }
  func.func @transform_5(%arg0: i32) -> (i32, i32) {
    %c0_i32 = arith.constant 0 : i32
    %c0_i32_0 = arith.constant 0 : i32
    %c0_i32_1 = arith.constant 0 : i32
    return %c0_i32, %c0_i32_0 : i32, i32
  }
  func.func @transform_6(%arg0: i32) -> (i32, i32) {
    %c0_i32 = arith.constant 0 : i32
    %c0_i32_0 = arith.constant 0 : i32
    %c0_i32_1 = arith.constant 0 : i32
    return %c0_i32, %c0_i32_0 : i32, i32
  }
  func.func @transform_7(%arg0: i32) -> (i32, i32) {
    %c0_i32 = arith.constant 0 : i32
    %c0_i32_0 = arith.constant 0 : i32
    %c0_i32_1 = arith.constant 0 : i32
    return %c0_i32, %c0_i32_0 : i32, i32
  }
  func.func @transform_8(%arg0: i32) -> (i32, i32) {
    %c0_i32 = arith.constant 0 : i32
    %c0_i32_0 = arith.constant 0 : i32
    %c0_i32_1 = arith.constant 0 : i32
    return %c0_i32, %c0_i32_0 : i32, i32
  }
  func.func @transform_9(%arg0: i32) -> (i32, i32) {
    %c0_i32 = arith.constant 0 : i32
    %c0_i32_0 = arith.constant 0 : i32
    return %c0_i32, %arg0 : i32, i32
  }
}

</mosaic_0001>

<llo_original>
// kernel: siren_mlp_forward.1
$region0: #{siren_mlp_forward.1}
  #allocation0 [shape = 'u32[]', space=smem, size = 0x4, offset = 0x4, fixed_abs, tag = 'smem constant byte address 0x4 - core index']
  #allocation1 [shape = 'u32[144,128]{1,0:T(1,128)}', space=vmem, size = 0x12000, scoped, tag = 'internal scratch']
  %s0 = inlined_call_operand.vmem [shape: f32[2,512], index: 0, kind: input, shape index: {}]
  %s1 = inlined_call_operand.vmem [shape: f32[32,2], index: 1, kind: input, shape index: {}]
  %s2 = inlined_call_operand.vmem [shape: f32[32,1], index: 2, kind: input, shape index: {}]
  %s3 = inlined_call_operand.vmem [shape: f32[32,32], index: 3, kind: input, shape index: {}]
  %s4 = inlined_call_operand.vmem [shape: f32[32,1], index: 4, kind: input, shape index: {}]
  %s5 = inlined_call_operand.vmem [shape: f32[32,32], index: 5, kind: input, shape index: {}]
  %s6 = inlined_call_operand.vmem [shape: f32[32,1], index: 6, kind: input, shape index: {}]
  %s7 = inlined_call_operand.vmem [shape: f32[3,32], index: 7, kind: input, shape index: {}]
  %s8 = inlined_call_operand.vmem [shape: f32[3,1], index: 8, kind: input, shape index: {}]
  %s9 = inlined_call_operand.vmem [shape: f32[3,512], index: 9, kind: output, shape index: {}]
  %s10 = sld [smem:[#allocation0]]
  $region69: #{siren_mlp_forward.1} parent=0
    _
  %s12 = ssub.s32 1, %s10
  %s13 = scalar_select 0, %s12, %s10
  loop: start=0, step=1, limit=4
  $region2: #{siren_mlp_forward.1} parent=0 // loop_pre_header
    _
  $region3: #{siren_mlp_forward.1} parent=0 // loop_header
    %s15 = sphi 0, %s19
    %p16 = scmp.ge.s32.totalorder %s15, 4
    %s25 = sphi 0, %s27
    %s28 = sphi 0, %s25
    %s29 = sphi 0, %s28
    %s45 = sphi 0, %s29
    %s49 = sphi 0, %s49
    %s51 = sphi 0, %s49
    %s52 = sphi 0, %s51
    %s66 = sphi 0, %s52
    %s70 = sphi 0, %s70
    %s72 = sphi 0, %s70
    %s73 = sphi 0, %s72
    %s87 = sphi 0, %s73
    %s91 = sphi 0, %s91
    %s93 = sphi 0, %s91
    %s94 = sphi 0, %s93
    %s108 = sphi 0, %s94
    %s112 = sphi 0, %s112
    %s114 = sphi 0, %s112
    %s115 = sphi 0, %s114
    %s129 = sphi 0, %s115
    %s133 = sphi 0, %s133
    %s135 = sphi 0, %s133
    %s136 = sphi 0, %s135
    %s150 = sphi 0, %s136
    %s154 = sphi 0, %s154
    %s156 = sphi 0, %s154
    %s157 = sphi 0, %s156
    %s171 = sphi 0, %s157
    %s175 = sphi 0, %s175
    %s177 = sphi 0, %s175
    %s178 = sphi 0, %s177
    %s192 = sphi 0, %s178
    %s196 = sphi 0, %s196
    %s198 = sphi 0, %s196
    %s199 = sphi 0, %s198
    %s213 = sphi 0, %s199
    %s219 = sphi 0, %s221
    %s222 = sphi 0, %s219
    %s223 = sphi 0, %s222
    %s239 = sphi 0, %s223
  $region4: #{siren_mlp_forward.1} parent=0 // loop_header_branch
    %18 = sbr.rel (%p16) target = $region8
  $region5: #{siren_mlp_forward.1} parent=0 // loop_body
    %s20 = ssub.s32 %s15, 1
    %s21 = ssub.s32 %s15, 2
    %s22 = sadd.s32 %s15, 1
    %s23 = ssub.s32 %s15, %s22
    %p24 = scmp.eq.s32.totalorder %s23, 0
    %s26 = sadd.s32 %s25, 1
    %s27 = scalar_select %p24, %s25, %s26
    %p30 = pneg %p24
    %p31 = scmp.eq.s32.totalorder %s15, 1
    %p32 = por %p30, %p31
    %p33 = scmp.ne.s32.totalorder %s25, %s28
    %p34 = scmp.eq.s32.totalorder %s15, 0
    %p35 = por %p33, %p34
    %p36 = scmp.ne.s32.totalorder %s25, %s28
    %p37 = scmp.eq.s32.totalorder %s20, 1
    %p38 = por %p36, %p37
    %p39 = scmp.ne.s32.totalorder %s28, %s29
    %p40 = scmp.eq.s32.totalorder %s20, 0
    %p41 = por %p39, %p40
    %p42 = scmp.ne.s32.totalorder %s28, %s29
    %p43 = scmp.eq.s32.totalorder %s21, 1
    %p44 = por %p42, %p43
    %p46 = scmp.ne.s32.totalorder %s29, %s45
    %p47 = scmp.eq.s32.totalorder %s21, 0
    %p48 = por %p46, %p47
    %s50 = sadd.s32 %s49, 1
    %p53 = scmp.eq.s32.totalorder %s15, 1
    %p54 = scmp.ne.s32.totalorder %s49, %s51
    %p55 = scmp.eq.s32.totalorder %s15, 0
    %p56 = por %p54, %p55
    %p57 = scmp.ne.s32.totalorder %s49, %s51
    %p58 = scmp.eq.s32.totalorder %s20, 1
    %p59 = por %p57, %p58
    %p60 = scmp.ne.s32.totalorder %s51, %s52
    %p61 = scmp.eq.s32.totalorder %s20, 0
    %p62 = por %p60, %p61
    %p63 = scmp.ne.s32.totalorder %s51, %s52
    %p64 = scmp.eq.s32.totalorder %s21, 1
    %p65 = por %p63, %p64
    %p67 = scmp.ne.s32.totalorder %s52, %s66
    %p68 = scmp.eq.s32.totalorder %s21, 0
    %p69 = por %p67, %p68
    %s71 = sadd.s32 %s70, 1
    %p74 = scmp.eq.s32.totalorder %s15, 1
    %p75 = scmp.ne.s32.totalorder %s70, %s72
    %p76 = scmp.eq.s32.totalorder %s15, 0
    %p77 = por %p75, %p76
    %p78 = scmp.ne.s32.totalorder %s70, %s72
    %p79 = scmp.eq.s32.totalorder %s20, 1
    %p80 = por %p78, %p79
    %p81 = scmp.ne.s32.totalorder %s72, %s73
    %p82 = scmp.eq.s32.totalorder %s20, 0
    %p83 = por %p81, %p82
    %p84 = scmp.ne.s32.totalorder %s72, %s73
    %p85 = scmp.eq.s32.totalorder %s21, 1
    %p86 = por %p84, %p85
    %p88 = scmp.ne.s32.totalorder %s73, %s87
    %p89 = scmp.eq.s32.totalorder %s21, 0
    %p90 = por %p88, %p89
    %s92 = sadd.s32 %s91, 1
    %p95 = scmp.eq.s32.totalorder %s15, 1
    %p96 = scmp.ne.s32.totalorder %s91, %s93
    %p97 = scmp.eq.s32.totalorder %s15, 0
    %p98 = por %p96, %p97
    %p99 = scmp.ne.s32.totalorder %s91, %s93
    %p100 = scmp.eq.s32.totalorder %s20, 1
    %p101 = por %p99, %p100
    %p102 = scmp.ne.s32.totalorder %s93, %s94
    %p103 = scmp.eq.s32.totalorder %s20, 0
    %p104 = por %p102, %p103
    %p105 = scmp.ne.s32.totalorder %s93, %s94
    %p106 = scmp.eq.s32.totalorder %s21, 1
    %p107 = por %p105, %p106
    %p109 = scmp.ne.s32.totalorder %s94, %s108
    %p110 = scmp.eq.s32.totalorder %s21, 0
    %p111 = por %p109, %p110
    %s113 = sadd.s32 %s112, 1
    %p116 = scmp.eq.s32.totalorder %s15, 1
    %p117 = scmp.ne.s32.totalorder %s112, %s114
    %p118 = scmp.eq.s32.totalorder %s15, 0
    %p119 = por %p117, %p118
    %p120 = scmp.ne.s32.totalorder %s112, %s114
    %p121 = scmp.eq.s32.totalorder %s20, 1
    %p122 = por %p120, %p121
    %p123 = scmp.ne.s32.totalorder %s114, %s115
    %p124 = scmp.eq.s32.totalorder %s20, 0
    %p125 = por %p123, %p124
    %p126 = scmp.ne.s32.totalorder %s114, %s115
    %p127 = scmp.eq.s32.totalorder %s21, 1
    %p128 = por %p126, %p127
    %p130 = scmp.ne.s32.totalorder %s115, %s129
    %p131 = scmp.eq.s32.totalorder %s21, 0
    %p132 = por %p130, %p131
    %s134 = sadd.s32 %s133, 1
    %p137 = scmp.eq.s32.totalorder %s15, 1
    %p138 = scmp.ne.s32.totalorder %s133, %s135
    %p139 = scmp.eq.s32.totalorder %s15, 0
    %p140 = por %p138, %p139
    %p141 = scmp.ne.s32.totalorder %s133, %s135
    %p142 = scmp.eq.s32.totalorder %s20, 1
    %p143 = por %p141, %p142
    %p144 = scmp.ne.s32.totalorder %s135, %s136
    %p145 = scmp.eq.s32.totalorder %s20, 0
    %p146 = por %p144, %p145
    %p147 = scmp.ne.s32.totalorder %s135, %s136
    %p148 = scmp.eq.s32.totalorder %s21, 1
    %p149 = por %p147, %p148
    %p151 = scmp.ne.s32.totalorder %s136, %s150
    %p152 = scmp.eq.s32.totalorder %s21, 0
    %p153 = por %p151, %p152
    %s155 = sadd.s32 %s154, 1
    %p158 = scmp.eq.s32.totalorder %s15, 1
    %p159 = scmp.ne.s32.totalorder %s154, %s156
    %p160 = scmp.eq.s32.totalorder %s15, 0
    %p161 = por %p159, %p160
    %p162 = scmp.ne.s32.totalorder %s154, %s156
    %p163 = scmp.eq.s32.totalorder %s20, 1
    %p164 = por %p162, %p163
    %p165 = scmp.ne.s32.totalorder %s156, %s157
    %p166 = scmp.eq.s32.totalorder %s20, 0
    %p167 = por %p165, %p166
    %p168 = scmp.ne.s32.totalorder %s156, %s157
    %p169 = scmp.eq.s32.totalorder %s21, 1
    %p170 = por %p168, %p169
    %p172 = scmp.ne.s32.totalorder %s157, %s171
    %p173 = scmp.eq.s32.totalorder %s21, 0
    %p174 = por %p172, %p173
    %s176 = sadd.s32 %s175, 1
    %p179 = scmp.eq.s32.totalorder %s15, 1
    %p180 = scmp.ne.s32.totalorder %s175, %s177
    %p181 = scmp.eq.s32.totalorder %s15, 0
    %p182 = por %p180, %p181
    %p183 = scmp.ne.s32.totalorder %s175, %s177
    %p184 = scmp.eq.s32.totalorder %s20, 1
    %p185 = por %p183, %p184
    %p186 = scmp.ne.s32.totalorder %s177, %s178
    %p187 = scmp.eq.s32.totalorder %s20, 0
    %p188 = por %p186, %p187
    %p189 = scmp.ne.s32.totalorder %s177, %s178
    %p190 = scmp.eq.s32.totalorder %s21, 1
    %p191 = por %p189, %p190
    %p193 = scmp.ne.s32.totalorder %s178, %s192
    %p194 = scmp.eq.s32.totalorder %s21, 0
    %p195 = por %p193, %p194
    %s197 = sadd.s32 %s196, 1
    %p200 = scmp.eq.s32.totalorder %s15, 1
    %p201 = scmp.ne.s32.totalorder %s196, %s198
    %p202 = scmp.eq.s32.totalorder %s15, 0
    %p203 = por %p201, %p202
    %p204 = scmp.ne.s32.totalorder %s196, %s198
    %p205 = scmp.eq.s32.totalorder %s20, 1
    %p206 = por %p204, %p205
    %p207 = scmp.ne.s32.totalorder %s198, %s199
    %p208 = scmp.eq.s32.totalorder %s20, 0
    %p209 = por %p207, %p208
    %p210 = scmp.ne.s32.totalorder %s198, %s199
    %p211 = scmp.eq.s32.totalorder %s21, 1
    %p212 = por %p210, %p211
    %p214 = scmp.ne.s32.totalorder %s199, %s213
    %p215 = scmp.eq.s32.totalorder %s21, 0
    %p216 = por %p214, %p215
    %s217 = ssub.s32 %s15, %s22
    %p218 = scmp.eq.s32.totalorder %s217, 0
    %s220 = sadd.s32 %s219, 1
    %s221 = scalar_select %p218, %s219, %s220
    %p224 = pneg %p218
    %p225 = scmp.eq.s32.totalorder %s15, 1
    %p226 = por %p224, %p225
    %p227 = scmp.ne.s32.totalorder %s219, %s222
    %p228 = scmp.eq.s32.totalorder %s15, 0
    %p229 = por %p227, %p228
    %p230 = scmp.ne.s32.totalorder %s219, %s222
    %p231 = scmp.eq.s32.totalorder %s20, 1
    %p232 = por %p230, %p231
    %p233 = scmp.ne.s32.totalorder %s222, %s223
    %p234 = scmp.eq.s32.totalorder %s20, 0
    %p235 = por %p233, %p234
    %p236 = scmp.ne.s32.totalorder %s222, %s223
    %p237 = scmp.eq.s32.totalorder %s21, 1
    %p238 = por %p236, %p237
    %p240 = scmp.ne.s32.totalorder %s223, %s239
    %p241 = scmp.eq.s32.totalorder %s21, 0
    %p242 = por %p240, %p241
    %p243 = scmp.le.s32.totalorder 1, %s15
    %p244 = scmp.lt.s32.totalorder %s15, 3
    %p245 = pnand %p243, %p244
    %p246 = pneg %p245
    // Predicated region
    $region9: #{siren_mlp_forward.1} parent=5 // pred_check
      _
    $region10: #{siren_mlp_forward.1} parent=5 // pred_check_branch
      %248 = sbr.rel (%p245) target = $region12
    $region11: #{siren_mlp_forward.1} parent=5 // pred_region
      %s249 = ssub.s32 %s15, 1
      // Predicated region
      $region13: #{siren_mlp_forward.1} parent=11 // pred_check
        %p250 = pneg %p62
      $region14: #{siren_mlp_forward.1} parent=11 // pred_check_branch
        %252 = sbr.rel (%p250) target = $region16
      $region15: #{siren_mlp_forward.1} parent=11 // pred_region
        _
      $region16: #{siren_mlp_forward.1} parent=11 // pred_fallthru
        _
      // Predicated region
      $region17: #{siren_mlp_forward.1} parent=11 // pred_check
        %p253 = pneg %p83
      $region18: #{siren_mlp_forward.1} parent=11 // pred_check_branch
        %255 = sbr.rel (%p253) target = $region20
      $region19: #{siren_mlp_forward.1} parent=11 // pred_region
        _
      $region20: #{siren_mlp_forward.1} parent=11 // pred_fallthru
        _
      // Predicated region
      $region21: #{siren_mlp_forward.1} parent=11 // pred_check
        %p256 = pneg %p104
      $region22: #{siren_mlp_forward.1} parent=11 // pred_check_branch
        %258 = sbr.rel (%p256) target = $region24
      $region23: #{siren_mlp_forward.1} parent=11 // pred_region
        _
      $region24: #{siren_mlp_forward.1} parent=11 // pred_fallthru
        _
      // Predicated region
      $region25: #{siren_mlp_forward.1} parent=11 // pred_check
        %p259 = pneg %p125
      $region26: #{siren_mlp_forward.1} parent=11 // pred_check_branch
        %261 = sbr.rel (%p259) target = $region28
      $region27: #{siren_mlp_forward.1} parent=11 // pred_region
        _
      $region28: #{siren_mlp_forward.1} parent=11 // pred_fallthru
        _
      // Predicated region
      $region29: #{siren_mlp_forward.1} parent=11 // pred_check
        %p262 = pneg %p146
      $region30: #{siren_mlp_forward.1} parent=11 // pred_check_branch
        %264 = sbr.rel (%p262) target = $region32
      $region31: #{siren_mlp_forward.1} parent=11 // pred_region
        _
      $region32: #{siren_mlp_forward.1} parent=11 // pred_fallthru
        _
      // Predicated region
      $region33: #{siren_mlp_forward.1} parent=11 // pred_check
        %p265 = pneg %p167
      $region34: #{siren_mlp_forward.1} parent=11 // pred_check_branch
        %267 = sbr.rel (%p265) target = $region36
      $region35: #{siren_mlp_forward.1} parent=11 // pred_region
        _
      $region36: #{siren_mlp_forward.1} parent=11 // pred_fallthru
        _
      // Predicated region
      $region37: #{siren_mlp_forward.1} parent=11 // pred_check
        %p268 = pneg %p188
      $region38: #{siren_mlp_forward.1} parent=11 // pred_check_branch
        %270 = sbr.rel (%p268) target = $region40
      $region39: #{siren_mlp_forward.1} parent=11 // pred_region
        _
      $region40: #{siren_mlp_forward.1} parent=11 // pred_fallthru
        _
      // Predicated region
      $region41: #{siren_mlp_forward.1} parent=11 // pred_check
        %p271 = pneg %p209
      $region42: #{siren_mlp_forward.1} parent=11 // pred_check_branch
        %273 = sbr.rel (%p271) target = $region44
      $region43: #{siren_mlp_forward.1} parent=11 // pred_region
        _
      $region44: #{siren_mlp_forward.1} parent=11 // pred_fallthru
        _
    $region12: #{siren_mlp_forward.1} parent=5 // pred_fallthru
      _
    %p274 = scmp.lt.s32.totalorder %s15, 2
    // Predicated region
    $region45: #{siren_mlp_forward.1} parent=5 // pred_check
      %p275 = pneg %p274
    $region46: #{siren_mlp_forward.1} parent=5 // pred_check_branch
      %277 = sbr.rel (%p275) target = $region48
    $region47: #{siren_mlp_forward.1} parent=5 // pred_region
      // Predicated region
      $region49: #{siren_mlp_forward.1} parent=47 // pred_check
        %p278 = pneg %p35
      $region50: #{siren_mlp_forward.1} parent=47 // pred_check_branch
        %280 = sbr.rel (%p278) target = $region52
      $region51: #{siren_mlp_forward.1} parent=47 // pred_region
        %s281 = smul.u32 2, %s15
        %p282 = scmp.lt.s32.totalorder %s281, 3
        %s283 = scalar_select %p282, %s281, 3
        %s284 = smul.addr %s283, 2
        %s285 = scalar_lea.vmem %s0, %s284
        %s286 = smul.u32 2, %s15
      $region52: #{siren_mlp_forward.1} parent=47 // pred_fallthru
        _
    $region48: #{siren_mlp_forward.1} parent=5 // pred_fallthru
      _
    %p287 = scmp.le.s32.totalorder 1, %s15
    %p288 = scmp.lt.s32.totalorder %s15, 3
    %p289 = pnand %p287, %p288
    %p290 = pneg %p289
    // Predicated region
    $region53: #{siren_mlp_forward.1} parent=5 // pred_check
      _
    $region54: #{siren_mlp_forward.1} parent=5 // pred_check_branch
      %292 = sbr.rel (%p289) target = $region56
    $region55: #{siren_mlp_forward.1} parent=5 // pred_region
      %s293 = ssub.s32 %s15, 1
      %s294 = smul.u32 2, %s20
      %p295 = scmp.lt.s32.totalorder %s294, 3
      %s296 = scalar_select %p295, %s294, 3
      %s297 = smul.addr %s296, 2
      %s298 = scalar_lea.vmem %s0, %s297
      %p299 = pneg %p41
      %p300 = pneg %p38
      %p301 = pneg %p62
      %p302 = pneg %p59
      %p303 = pneg %p83
      %p304 = pneg %p80
      %p305 = pneg %p104
      %p306 = pneg %p101
      %p307 = pneg %p125
      %p308 = pneg %p122
      %p309 = pneg %p146
      %p310 = pneg %p143
      %p311 = pneg %p167
      %p312 = pneg %p164
      %p313 = pneg %p188
      %p314 = pneg %p185
      %p315 = pneg %p209
      %p316 = pneg %p206
      %p317 = pneg %p235
      %p318 = pneg %p232
      %s319 = smul.u32 2, %s20
      %p320 = scmp.lt.s32.totalorder %s319, 3
      %s321 = scalar_select %p320, %s319, 3
      %s322 = smul.addr %s321, 4
      %s323 = scalar_lea.vmem %s9, %s322
      %s324 = smul.u32 2, %s20
      %p325 = scmp.lt.s32.totalorder %s324, 3
      %s326 = scalar_select %p325, %s324, 3
      %s327 = smul.addr %s326, 2
      %s328 = scalar_lea.vmem %s0, %s327
      %s329 = smul.u32 2, %s20
      %s330 = smul.u32 2, %s20
      %p331 = scmp.lt.s32.totalorder %s330, 3
      %s332 = scalar_select %p331, %s330, 3
      %s333 = smul.addr %s332, 4
      %s334 = scalar_lea.vmem %s9, %s333
      %s335 = smul.u32 2, %s20
      %v336 = vld [vmem:[%s328] sm:$0xf]
      %v337 = vld [vmem:[%s1] sm:$0xff]
      %v338 = vld [vmem:[%s1 + $0x8] sm:$0xff]
      %v339 = vld [vmem:[%s1 + $0x10] sm:$0xff]
      %v340 = vld [vmem:[%s1 + $0x18] sm:$0xff]
      %v341 = vld [vmem:[%s2] sm:$0xff]
      %v342 = vld [vmem:[%s2 + $0x8] sm:$0xff]
      %v343 = vld [vmem:[%s2 + $0x10] sm:$0xff]
      %v344 = vld [vmem:[%s2 + $0x18] sm:$0xff]
      %346 = vset.pattern.permute.xlu0 0
      %347 = vperm.xlu0 %346, %v341
      %v348 = vpop.permute.xlu0 %347
      %351 = vset.pattern.permute.xlu0 0
      %352 = vperm.xlu0 %351, %v342
      %v353 = vpop.permute.xlu0 %352
      %356 = vset.pattern.permute.xlu0 0
      %357 = vperm.xlu0 %356, %v343
      %v358 = vpop.permute.xlu0 %357
      %361 = vset.pattern.permute.xlu0 0
      %362 = vperm.xlu0 %361, %v344
      %v363 = vpop.permute.xlu0 %362
      %v367 = vunpack.c.l.s4 1983009808
      %v368 = vunpack.c.0.s8 %v367
      %v369 = vlaneseq
      %v370 = vshrl.u32 %v369, 7
      %v371 = vsub.s32 %v368, %v370
      %v372 = vrot.slane %v336, %v371
      %v373 = vcombine.high %v372, %v372
      %vm374 = vcmask 15360
      %v376 = vsel %vm374, %v337, 0
      %v379 = vsel %vm374, %v338, 0
      %v382 = vsel %vm374, %v339, 0
      %v385 = vsel %vm374, %v340, 0
      %vm387 = vcmask 1041408
      %v388 = vsel %vm387, %v372, 0
      %v390 = vsel %vm387, %v373, 0
      %392 = vmatprep.subr.mxu0 0.0
      %393 = vmatpush1.msra.mxu0 0.0
      %394 = vmatprep.subr.mxu0 0.0
      %395 = vmatpush1.msra.mxu0 0.0
      %396 = vmatprep.subr.mxu0 0.0
      %397 = vmatpush1.msra.mxu0 0.0
      %398 = vmatprep.subr.mxu0 0.0
      %399 = vmatpush1.msra.mxu0 0.0
      %400 = vmatprep.subr.mxu0 0.0
      %401 = vmatpush1.msra.mxu0 0.0
      %402 = vmatprep.subr.mxu0 0.0
      %403 = vmatpush1.msra.mxu0 0.0
      %404 = vmatprep.subr.mxu0 0.0
      %405 = vmatpush1.msra.mxu0 0.0
      %406 = vmatprep.subr.mxu0 0.0
      %407 = vmatpush1.msra.mxu0 0.0
      %408 = vmatprep.subr.mxu0 0.0
      %409 = vmatpush1.msra.mxu0 0.0
      %410 = vmatprep.subr.mxu0 0.0
      %411 = vmatpush1.msra.mxu0 0.0
      %412 = vmatprep.subr.mxu0 0.0
      %413 = vmatpush1.msra.mxu0 0.0
      %414 = vmatprep.subr.mxu0 0.0
      %415 = vmatpush1.msra.mxu0 0.0
      %416 = vmatprep.subr.mxu0 0.0
      %417 = vmatpush1.msra.mxu0 0.0
      %418 = vmatprep.subr.mxu0 0.0
      %419 = vmatpush1.msra.mxu0 0.0
      %420 = vmatprep.subr.mxu0 0.0
      %421 = vmatpush1.msra.mxu0 0.0
      %v422 = vand.u32 %v390, 4294901760
      %423 = vmatprep.subr.mxu0 %v422
      %v424 = vand.u32 %v388, 4294901760
      %425 = vmatpush1.msra.mxu0 %v424
      %426 = vmatprep.subr.mxu0 0.0
      %427 = vmatpush2.msra.mxu0 0.0
      %428 = vmatprep.subr.mxu0 0.0
      %429 = vmatpush2.msra.mxu0 0.0
      %430 = vmatprep.subr.mxu0 0.0
      %431 = vmatpush2.msra.mxu0 0.0
      %432 = vmatprep.subr.mxu0 0.0
      %433 = vmatpush2.msra.mxu0 0.0
      %434 = vmatprep.subr.mxu0 0.0
      %435 = vmatpush2.msra.mxu0 0.0
      %436 = vmatprep.subr.mxu0 0.0
      %437 = vmatpush2.msra.mxu0 0.0
      %438 = vmatprep.subr.mxu0 0.0
      %439 = vmatpush2.msra.mxu0 0.0
      %440 = vmatprep.subr.mxu0 0.0
      %441 = vmatpush2.msra.mxu0 0.0
      %442 = vmatprep.subr.mxu0 0.0
      %443 = vmatpush2.msra.mxu0 0.0
      %444 = vmatprep.subr.mxu0 0.0
      %445 = vmatpush2.msra.mxu0 0.0
      %446 = vmatprep.subr.mxu0 0.0
      %447 = vmatpush2.msra.mxu0 0.0
      %448 = vmatprep.subr.mxu0 0.0
      %449 = vmatpush2.msra.mxu0 0.0
      %450 = vmatprep.subr.mxu0 0.0
      %451 = vmatpush2.msra.mxu0 0.0
      %452 = vmatprep.subr.mxu0 0.0
      %453 = vmatpush2.msra.mxu0 0.0
      %454 = vmatprep.subr.mxu0 0.0
      %455 = vmatpush2.msra.mxu0 0.0
      %456 = vmatprep.subr.mxu0 0.0
      %457 = vmatpush2.msra.mxu0 0.0
      %458 = vmatprep.mubr.f32.mxu0 0.0
      %v459 = vand.u32 %v376, 4294901760
      %v460 = vsub.f32 %v376, %v459
      %v461 = vand.u32 %v460, 4294901760
      %v462 = vsub.f32 %v460, %v461
      %v463 = vand.u32 %v462, 4294901760
      %464 = vmatmul.mubr.f32.gmra.mxu0 %v463
      %v465 = vpop.f32.mrf.mxu0
      %v466 = vadd.f32 %v348, %v465
      %v467 = vpop.f32.mrf.mxu0
      %v468 = vadd.f32 %v348, %v467
      %469 = vmatprep.mubr.f32.mxu0 0.0
      %v470 = vand.u32 %v379, 4294901760
      %v471 = vsub.f32 %v379, %v470
      %v472 = vand.u32 %v471, 4294901760
      %v473 = vsub.f32 %v471, %v472
      %v474 = vand.u32 %v473, 4294901760
      %475 = vmatmul.mubr.f32.gmra.mxu0 %v474
      %v476 = vpop.f32.mrf.mxu0
      %v477 = vadd.f32 %v353, %v476
      %v478 = vpop.f32.mrf.mxu0
      %v479 = vadd.f32 %v353, %v478
      %480 = vmatprep.mubr.f32.mxu0 0.0
      %v481 = vand.u32 %v382, 4294901760
      %v482 = vsub.f32 %v382, %v481
      %v483 = vand.u32 %v482, 4294901760
      %v484 = vsub.f32 %v482, %v483
      %v485 = vand.u32 %v484, 4294901760
      %486 = vmatmul.mubr.f32.gmra.mxu0 %v485
      %v487 = vpop.f32.mrf.mxu0
      %v488 = vadd.f32 %v358, %v487
      %v489 = vpop.f32.mrf.mxu0
      %v490 = vadd.f32 %v358, %v489
      %491 = vmatprep.mubr.f32.mxu0 0.0
      %v492 = vand.u32 %v385, 4294901760
      %v493 = vsub.f32 %v385, %v492
      %v494 = vand.u32 %v493, 4294901760
      %v495 = vsub.f32 %v493, %v494
      %v496 = vand.u32 %v495, 4294901760
      %497 = vmatmul.mubr.f32.gmra.mxu0 %v496
      %v498 = vpop.f32.mrf.mxu0
      %v499 = vadd.f32 %v363, %v498
      %v500 = vpop.f32.mrf.mxu0
      %v501 = vadd.f32 %v363, %v500
      %502 = vdwg.mxu0
      %503 = vmatprep.subr.mxu0 0.0
      %504 = vmatpush1.msra.mxu0 0.0
      %505 = vmatprep.subr.mxu0 0.0
      %506 = vmatpush1.msra.mxu0 0.0
      %507 = vmatprep.subr.mxu0 0.0
      %508 = vmatpush1.msra.mxu0 0.0
      %509 = vmatprep.subr.mxu0 0.0
      %510 = vmatpush1.msra.mxu0 0.0
      %511 = vmatprep.subr.mxu0 0.0
      %512 = vmatpush1.msra.mxu0 0.0
      %513 = vmatprep.subr.mxu0 0.0
      %514 = vmatpush1.msra.mxu0 0.0
      %515 = vmatprep.subr.mxu0 0.0
      %516 = vmatpush1.msra.mxu0 0.0
      %517 = vmatprep.subr.mxu0 0.0
      %518 = vmatpush1.msra.mxu0 0.0
      %519 = vmatprep.subr.mxu0 0.0
      %520 = vmatpush1.msra.mxu0 0.0
      %521 = vmatprep.subr.mxu0 0.0
      %522 = vmatpush1.msra.mxu0 0.0
      %523 = vmatprep.subr.mxu0 0.0
      %524 = vmatpush1.msra.mxu0 0.0
      %525 = vmatprep.subr.mxu0 0.0
      %526 = vmatpush1.msra.mxu0 0.0
      %527 = vmatprep.subr.mxu0 0.0
      %528 = vmatpush1.msra.mxu0 0.0
      %529 = vmatprep.subr.mxu0 0.0
      %530 = vmatpush1.msra.mxu0 0.0
      %531 = vmatprep.subr.mxu0 0.0
      %532 = vmatpush1.msra.mxu0 0.0
      %v533 = vand.u32 %v390, 4294901760
      %v534 = vsub.f32 %v390, %v533
      %v535 = vand.u32 %v534, 4294901760
      %v536 = vsub.f32 %v534, %v535
      %v537 = vand.u32 %v536, 4294901760
      %538 = vmatprep.subr.mxu0 %v537
      %v539 = vand.u32 %v388, 4294901760
      %v540 = vsub.f32 %v388, %v539
      %v541 = vand.u32 %v540, 4294901760
      %v542 = vsub.f32 %v540, %v541
      %v543 = vand.u32 %v542, 4294901760
      %544 = vmatpush1.msra.mxu0 %v543
      %545 = vmatprep.subr.mxu0 0.0
      %546 = vmatpush2.msra.mxu0 0.0
      %547 = vmatprep.subr.mxu0 0.0
      %548 = vmatpush2.msra.mxu0 0.0
      %549 = vmatprep.subr.mxu0 0.0
      %550 = vmatpush2.msra.mxu0 0.0
      %551 = vmatprep.subr.mxu0 0.0
      %552 = vmatpush2.msra.mxu0 0.0
      %553 = vmatprep.subr.mxu0 0.0
      %554 = vmatpush2.msra.mxu0 0.0
      %555 = vmatprep.subr.mxu0 0.0
      %556 = vmatpush2.msra.mxu0 0.0
      %557 = vmatprep.subr.mxu0 0.0
      %558 = vmatpush2.msra.mxu0 0.0
      %559 = vmatprep.subr.mxu0 0.0
      %560 = vmatpush2.msra.mxu0 0.0
      %561 = vmatprep.subr.mxu0 0.0
      %562 = vmatpush2.msra.mxu0 0.0
      %563 = vmatprep.subr.mxu0 0.0
      %564 = vmatpush2.msra.mxu0 0.0
      %565 = vmatprep.subr.mxu0 0.0
      %566 = vmatpush2.msra.mxu0 0.0
      %567 = vmatprep.subr.mxu0 0.0
      %568 = vmatpush2.msra.mxu0 0.0
      %569 = vmatprep.subr.mxu0 0.0
      %570 = vmatpush2.msra.mxu0 0.0
      %571 = vmatprep.subr.mxu0 0.0
      %572 = vmatpush2.msra.mxu0 0.0
      %573 = vmatprep.subr.mxu0 0.0
      %574 = vmatpush2.msra.mxu0 0.0
      %575 = vmatprep.subr.mxu0 0.0
      %576 = vmatpush2.msra.mxu0 0.0
      %577 = vmatprep.mubr.f32.mxu0 0.0
      %v578 = vand.u32 %v376, 4294901760
      %579 = vmatmul.mubr.f32.gmra.mxu0 %v578
      %v580 = vpop.f32.mrf.mxu0
      %v581 = vadd.f32 %v466, %v580
      %v582 = vpop.f32.mrf.mxu0
      %v583 = vadd.f32 %v468, %v582
      %584 = vmatprep.mubr.f32.mxu0 0.0
      %v585 = vand.u32 %v379, 4294901760
      %586 = vmatmul.mubr.f32.gmra.mxu0 %v585
      %v587 = vpop.f32.mrf.mxu0
      %v588 = vadd.f32 %v477, %v587
      %v589 = vpop.f32.mrf.mxu0
      %v590 = vadd.f32 %v479, %v589
      %591 = vmatprep.mubr.f32.mxu0 0.0
      %v592 = vand.u32 %v382, 4294901760
      %593 = vmatmul.mubr.f32.gmra.mxu0 %v592
      %v594 = vpop.f32.mrf.mxu0
      %v595 = vadd.f32 %v488, %v594
      %v596 = vpop.f32.mrf.mxu0
      %v597 = vadd.f32 %v490, %v596
      %598 = vmatprep.mubr.f32.mxu0 0.0
      %v599 = vand.u32 %v385, 4294901760
      %600 = vmatmul.mubr.f32.gmra.mxu0 %v599
      %v601 = vpop.f32.mrf.mxu0
      %v602 = vadd.f32 %v499, %v601
      %v603 = vpop.f32.mrf.mxu0
      %v604 = vadd.f32 %v501, %v603
      %605 = vdwg.mxu0
      %606 = vmatprep.subr.mxu0 0.0
      %607 = vmatpush1.msra.mxu0 0.0
      %608 = vmatprep.subr.mxu0 0.0
      %609 = vmatpush1.msra.mxu0 0.0
      %610 = vmatprep.subr.mxu0 0.0
      %611 = vmatpush1.msra.mxu0 0.0
      %612 = vmatprep.subr.mxu0 0.0
      %613 = vmatpush1.msra.mxu0 0.0
      %614 = vmatprep.subr.mxu0 0.0
      %615 = vmatpush1.msra.mxu0 0.0
      %616 = vmatprep.subr.mxu0 0.0
      %617 = vmatpush1.msra.mxu0 0.0
      %618 = vmatprep.subr.mxu0 0.0
      %619 = vmatpush1.msra.mxu0 0.0
      %620 = vmatprep.subr.mxu0 0.0
      %621 = vmatpush1.msra.mxu0 0.0
      %622 = vmatprep.subr.mxu0 0.0
      %623 = vmatpush1.msra.mxu0 0.0
      %624 = vmatprep.subr.mxu0 0.0
      %625 = vmatpush1.msra.mxu0 0.0
      %626 = vmatprep.subr.mxu0 0.0
      %627 = vmatpush1.msra.mxu0 0.0
      %628 = vmatprep.subr.mxu0 0.0
      %629 = vmatpush1.msra.mxu0 0.0
      %630 = vmatprep.subr.mxu0 0.0
      %631 = vmatpush1.msra.mxu0 0.0
      %632 = vmatprep.subr.mxu0 0.0
      %633 = vmatpush1.msra.mxu0 0.0
      %634 = vmatprep.subr.mxu0 0.0
      %635 = vmatpush1.msra.mxu0 0.0
      %v636 = vand.u32 %v390, 4294901760
      %v637 = vsub.f32 %v390, %v636
      %638 = vmatprep.subr.mxu0 %v637
      %v639 = vand.u32 %v388, 4294901760
      %v640 = vsub.f32 %v388, %v639
      %641 = vmatpush1.msra.mxu0 %v640
      %642 = vmatprep.subr.mxu0 0.0
      %643 = vmatpush2.msra.mxu0 0.0
      %644 = vmatprep.subr.mxu0 0.0
      %645 = vmatpush2.msra.mxu0 0.0
      %646 = vmatprep.subr.mxu0 0.0
      %647 = vmatpush2.msra.mxu0 0.0
      %648 = vmatprep.subr.mxu0 0.0
      %649 = vmatpush2.msra.mxu0 0.0
      %650 = vmatprep.subr.mxu0 0.0
      %651 = vmatpush2.msra.mxu0 0.0
      %652 = vmatprep.subr.mxu0 0.0
      %653 = vmatpush2.msra.mxu0 0.0
      %654 = vmatprep.subr.mxu0 0.0
      %655 = vmatpush2.msra.mxu0 0.0
      %656 = vmatprep.subr.mxu0 0.0
      %657 = vmatpush2.msra.mxu0 0.0
      %658 = vmatprep.subr.mxu0 0.0
      %659 = vmatpush2.msra.mxu0 0.0
      %660 = vmatprep.subr.mxu0 0.0
      %661 = vmatpush2.msra.mxu0 0.0
      %662 = vmatprep.subr.mxu0 0.0
      %663 = vmatpush2.msra.mxu0 0.0
      %664 = vmatprep.subr.mxu0 0.0
      %665 = vmatpush2.msra.mxu0 0.0
      %666 = vmatprep.subr.mxu0 0.0
      %667 = vmatpush2.msra.mxu0 0.0
      %668 = vmatprep.subr.mxu0 0.0
      %669 = vmatpush2.msra.mxu0 0.0
      %670 = vmatprep.subr.mxu0 0.0
      %671 = vmatpush2.msra.mxu0 0.0
      %672 = vmatprep.subr.mxu0 0.0
      %673 = vmatpush2.msra.mxu0 0.0
      %674 = vmatprep.mubr.f32.mxu0 0.0
      %v675 = vand.u32 %v376, 4294901760
      %v676 = vsub.f32 %v376, %v675
      %677 = vmatmul.mubr.f32.gmra.mxu0 %v676
      %v678 = vpop.f32.mrf.mxu0
      %v679 = vadd.f32 %v581, %v678
      %v680 = vpop.f32.mrf.mxu0
      %v681 = vadd.f32 %v583, %v680
      %682 = vmatprep.mubr.f32.mxu0 0.0
      %v683 = vand.u32 %v379, 4294901760
      %v684 = vsub.f32 %v379, %v683
      %685 = vmatmul.mubr.f32.gmra.mxu0 %v684
      %v686 = vpop.f32.mrf.mxu0
      %v687 = vadd.f32 %v588, %v686
      %v688 = vpop.f32.mrf.mxu0
      %v689 = vadd.f32 %v590, %v688
      %690 = vmatprep.mubr.f32.mxu0 0.0
      %v691 = vand.u32 %v382, 4294901760
      %v692 = vsub.f32 %v382, %v691
      %693 = vmatmul.mubr.f32.gmra.mxu0 %v692
      %v694 = vpop.f32.mrf.mxu0
      %v695 = vadd.f32 %v595, %v694
      %v696 = vpop.f32.mrf.mxu0
      %v697 = vadd.f32 %v597, %v696
      %698 = vmatprep.mubr.f32.mxu0 0.0
      %v699 = vand.u32 %v385, 4294901760
      %v700 = vsub.f32 %v385, %v699
      %701 = vmatmul.mubr.f32.gmra.mxu0 %v700
      %v702 = vpop.f32.mrf.mxu0
      %v703 = vadd.f32 %v602, %v702
      %v704 = vpop.f32.mrf.mxu0
      %v705 = vadd.f32 %v604, %v704
      %706 = vdwg.mxu0
      %707 = vmatprep.subr.mxu0 0.0
      %708 = vmatpush1.msra.mxu0 0.0
      %709 = vmatprep.subr.mxu0 0.0
      %710 = vmatpush1.msra.mxu0 0.0
      %711 = vmatprep.subr.mxu0 0.0
      %712 = vmatpush1.msra.mxu0 0.0
      %713 = vmatprep.subr.mxu0 0.0
      %714 = vmatpush1.msra.mxu0 0.0
      %715 = vmatprep.subr.mxu0 0.0
      %716 = vmatpush1.msra.mxu0 0.0
      %717 = vmatprep.subr.mxu0 0.0
      %718 = vmatpush1.msra.mxu0 0.0
      %719 = vmatprep.subr.mxu0 0.0
      %720 = vmatpush1.msra.mxu0 0.0
      %721 = vmatprep.subr.mxu0 0.0
      %722 = vmatpush1.msra.mxu0 0.0
      %723 = vmatprep.subr.mxu0 0.0
      %724 = vmatpush1.msra.mxu0 0.0
      %725 = vmatprep.subr.mxu0 0.0
      %726 = vmatpush1.msra.mxu0 0.0
      %727 = vmatprep.subr.mxu0 0.0
      %728 = vmatpush1.msra.mxu0 0.0
      %729 = vmatprep.subr.mxu0 0.0
      %730 = vmatpush1.msra.mxu0 0.0
      %731 = vmatprep.subr.mxu0 0.0
      %732 = vmatpush1.msra.mxu0 0.0
      %733 = vmatprep.subr.mxu0 0.0
      %734 = vmatpush1.msra.mxu0 0.0
      %735 = vmatprep.subr.mxu0 0.0
      %736 = vmatpush1.msra.mxu0 0.0
      %v737 = vand.u32 %v390, 4294901760
      %738 = vmatprep.subr.mxu0 %v737
      %v739 = vand.u32 %v388, 4294901760
      %740 = vmatpush1.msra.mxu0 %v739
      %741 = vmatprep.subr.mxu0 0.0
      %742 = vmatpush2.msra.mxu0 0.0
      %743 = vmatprep.subr.mxu0 0.0
      %744 = vmatpush2.msra.mxu0 0.0
      %745 = vmatprep.subr.mxu0 0.0
      %746 = vmatpush2.msra.mxu0 0.0
      %747 = vmatprep.subr.mxu0 0.0
      %748 = vmatpush2.msra.mxu0 0.0
      %749 = vmatprep.subr.mxu0 0.0
      %750 = vmatpush2.msra.mxu0 0.0
      %751 = vmatprep.subr.mxu0 0.0
      %752 = vmatpush2.msra.mxu0 0.0
      %753 = vmatprep.subr.mxu0 0.0
      %754 = vmatpush2.msra.mxu0 0.0
      %755 = vmatprep.subr.mxu0 0.0
      %756 = vmatpush2.msra.mxu0 0.0
      %757 = vmatprep.subr.mxu0 0.0
      %758 = vmatpush2.msra.mxu0 0.0
      %759 = vmatprep.subr.mxu0 0.0
      %760 = vmatpush2.msra.mxu0 0.0
      %761 = vmatprep.subr.mxu0 0.0
      %762 = vmatpush2.msra.mxu0 0.0
      %763 = vmatprep.subr.mxu0 0.0
      %764 = vmatpush2.msra.mxu0 0.0
      %765 = vmatprep.subr.mxu0 0.0
      %766 = vmatpush2.msra.mxu0 0.0
      %767 = vmatprep.subr.mxu0 0.0
      %768 = vmatpush2.msra.mxu0 0.0
      %769 = vmatprep.subr.mxu0 0.0
      %770 = vmatpush2.msra.mxu0 0.0
      %771 = vmatprep.subr.mxu0 0.0
      %772 = vmatpush2.msra.mxu0 0.0
      %773 = vmatprep.mubr.f32.mxu0 0.0
      %v774 = vand.u32 %v376, 4294901760
      %v775 = vsub.f32 %v376, %v774
      %v776 = vand.u32 %v775, 4294901760
      %777 = vmatmul.mubr.f32.gmra.mxu0 %v776
      %v778 = vpop.f32.mrf.mxu0
      %v779 = vadd.f32 %v679, %v778
      %v780 = vpop.f32.mrf.mxu0
      %v781 = vadd.f32 %v681, %v780
      %782 = vmatprep.mubr.f32.mxu0 0.0
      %v783 = vand.u32 %v379, 4294901760
      %v784 = vsub.f32 %v379, %v783
      %v785 = vand.u32 %v784, 4294901760
      %786 = vmatmul.mubr.f32.gmra.mxu0 %v785
      %v787 = vpop.f32.mrf.mxu0
      %v788 = vadd.f32 %v687, %v787
      %v789 = vpop.f32.mrf.mxu0
      %v790 = vadd.f32 %v689, %v789
      %791 = vmatprep.mubr.f32.mxu0 0.0
      %v792 = vand.u32 %v382, 4294901760
      %v793 = vsub.f32 %v382, %v792
      %v794 = vand.u32 %v793, 4294901760
      %795 = vmatmul.mubr.f32.gmra.mxu0 %v794
      %v796 = vpop.f32.mrf.mxu0
      %v797 = vadd.f32 %v695, %v796
      %v798 = vpop.f32.mrf.mxu0
      %v799 = vadd.f32 %v697, %v798
      %800 = vmatprep.mubr.f32.mxu0 0.0
      %v801 = vand.u32 %v385, 4294901760
      %v802 = vsub.f32 %v385, %v801
      %v803 = vand.u32 %v802, 4294901760
      %804 = vmatmul.mubr.f32.gmra.mxu0 %v803
      %v805 = vpop.f32.mrf.mxu0
      %v806 = vadd.f32 %v703, %v805
      %v807 = vpop.f32.mrf.mxu0
      %v808 = vadd.f32 %v705, %v807
      %809 = vdwg.mxu0
      %810 = vmatprep.subr.mxu0 0.0
      %811 = vmatpush1.msra.mxu0 0.0
      %812 = vmatprep.subr.mxu0 0.0
      %813 = vmatpush1.msra.mxu0 0.0
      %814 = vmatprep.subr.mxu0 0.0
      %815 = vmatpush1.msra.mxu0 0.0
      %816 = vmatprep.subr.mxu0 0.0
      %817 = vmatpush1.msra.mxu0 0.0
      %818 = vmatprep.subr.mxu0 0.0
      %819 = vmatpush1.msra.mxu0 0.0
      %820 = vmatprep.subr.mxu0 0.0
      %821 = vmatpush1.msra.mxu0 0.0
      %822 = vmatprep.subr.mxu0 0.0
      %823 = vmatpush1.msra.mxu0 0.0
      %824 = vmatprep.subr.mxu0 0.0
      %825 = vmatpush1.msra.mxu0 0.0
      %826 = vmatprep.subr.mxu0 0.0
      %827 = vmatpush1.msra.mxu0 0.0
      %828 = vmatprep.subr.mxu0 0.0
      %829 = vmatpush1.msra.mxu0 0.0
      %830 = vmatprep.subr.mxu0 0.0
      %831 = vmatpush1.msra.mxu0 0.0
      %832 = vmatprep.subr.mxu0 0.0
      %833 = vmatpush1.msra.mxu0 0.0
      %834 = vmatprep.subr.mxu0 0.0
      %835 = vmatpush1.msra.mxu0 0.0
      %836 = vmatprep.subr.mxu0 0.0
      %837 = vmatpush1.msra.mxu0 0.0
      %838 = vmatprep.subr.mxu0 0.0
      %839 = vmatpush1.msra.mxu0 0.0
      %v840 = vand.u32 %v390, 4294901760
      %v841 = vsub.f32 %v390, %v840
      %v842 = vand.u32 %v841, 4294901760
      %843 = vmatprep.subr.mxu0 %v842
      %v844 = vand.u32 %v388, 4294901760
      %v845 = vsub.f32 %v388, %v844
      %v846 = vand.u32 %v845, 4294901760
      %847 = vmatpush1.msra.mxu0 %v846
      %848 = vmatprep.subr.mxu0 0.0
      %849 = vmatpush2.msra.mxu0 0.0
      %850 = vmatprep.subr.mxu0 0.0
      %851 = vmatpush2.msra.mxu0 0.0
      %852 = vmatprep.subr.mxu0 0.0
      %853 = vmatpush2.msra.mxu0 0.0
      %854 = vmatprep.subr.mxu0 0.0
      %855 = vmatpush2.msra.mxu0 0.0
      %856 = vmatprep.subr.mxu0 0.0
      %857 = vmatpush2.msra.mxu0 0.0
      %858 = vmatprep.subr.mxu0 0.0
      %859 = vmatpush2.msra.mxu0 0.0
      %860 = vmatprep.subr.mxu0 0.0
      %861 = vmatpush2.msra.mxu0 0.0
      %862 = vmatprep.subr.mxu0 0.0
      %863 = vmatpush2.msra.mxu0 0.0
      %864 = vmatprep.subr.mxu0 0.0
      %865 = vmatpush2.msra.mxu0 0.0
      %866 = vmatprep.subr.mxu0 0.0
      %867 = vmatpush2.msra.mxu0 0.0
      %868 = vmatprep.subr.mxu0 0.0
      %869 = vmatpush2.msra.mxu0 0.0
      %870 = vmatprep.subr.mxu0 0.0
      %871 = vmatpush2.msra.mxu0 0.0
      %872 = vmatprep.subr.mxu0 0.0
      %873 = vmatpush2.msra.mxu0 0.0
      %874 = vmatprep.subr.mxu0 0.0
      %875 = vmatpush2.msra.mxu0 0.0
      %876 = vmatprep.subr.mxu0 0.0
      %877 = vmatpush2.msra.mxu0 0.0
      %878 = vmatprep.subr.mxu0 0.0
      %879 = vmatpush2.msra.mxu0 0.0
      %880 = vmatprep.mubr.f32.mxu0 0.0
      %v881 = vand.u32 %v376, 4294901760
      %882 = vmatmul.mubr.f32.gmra.mxu0 %v881
      %v883 = vpop.f32.mrf.mxu0
      %v884 = vadd.f32 %v779, %v883
      %v885 = vpop.f32.mrf.mxu0
      %v886 = vadd.f32 %v781, %v885
      %887 = vmatprep.mubr.f32.mxu0 0.0
      %v888 = vand.u32 %v379, 4294901760
      %889 = vmatmul.mubr.f32.gmra.mxu0 %v888
      %v890 = vpop.f32.mrf.mxu0
      %v891 = vadd.f32 %v788, %v890
      %v892 = vpop.f32.mrf.mxu0
      %v893 = vadd.f32 %v790, %v892
      %894 = vmatprep.mubr.f32.mxu0 0.0
      %v895 = vand.u32 %v382, 4294901760
      %896 = vmatmul.mubr.f32.gmra.mxu0 %v895
      %v897 = vpop.f32.mrf.mxu0
      %v898 = vadd.f32 %v797, %v897
      %v899 = vpop.f32.mrf.mxu0
      %v900 = vadd.f32 %v799, %v899
      %901 = vmatprep.mubr.f32.mxu0 0.0
      %v902 = vand.u32 %v385, 4294901760
      %903 = vmatmul.mubr.f32.gmra.mxu0 %v902
      %v904 = vpop.f32.mrf.mxu0
      %v905 = vadd.f32 %v806, %v904
      %v906 = vpop.f32.mrf.mxu0
      %v907 = vadd.f32 %v808, %v906
      %908 = vdwg.mxu0
      %909 = vmatprep.subr.mxu0 0.0
      %910 = vmatpush1.msra.mxu0 0.0
      %911 = vmatprep.subr.mxu0 0.0
      %912 = vmatpush1.msra.mxu0 0.0
      %913 = vmatprep.subr.mxu0 0.0
      %914 = vmatpush1.msra.mxu0 0.0
      %915 = vmatprep.subr.mxu0 0.0
      %916 = vmatpush1.msra.mxu0 0.0
      %917 = vmatprep.subr.mxu0 0.0
      %918 = vmatpush1.msra.mxu0 0.0
      %919 = vmatprep.subr.mxu0 0.0
      %920 = vmatpush1.msra.mxu0 0.0
      %921 = vmatprep.subr.mxu0 0.0
      %922 = vmatpush1.msra.mxu0 0.0
      %923 = vmatprep.subr.mxu0 0.0
      %924 = vmatpush1.msra.mxu0 0.0
      %925 = vmatprep.subr.mxu0 0.0
      %926 = vmatpush1.msra.mxu0 0.0
      %927 = vmatprep.subr.mxu0 0.0
      %928 = vmatpush1.msra.mxu0 0.0
      %929 = vmatprep.subr.mxu0 0.0
      %930 = vmatpush1.msra.mxu0 0.0
      %931 = vmatprep.subr.mxu0 0.0
      %932 = vmatpush1.msra.mxu0 0.0
      %933 = vmatprep.subr.mxu0 0.0
      %934 = vmatpush1.msra.mxu0 0.0
      %935 = vmatprep.subr.mxu0 0.0
      %936 = vmatpush1.msra.mxu0 0.0
      %937 = vmatprep.subr.mxu0 0.0
      %938 = vmatpush1.msra.mxu0 0.0
      %v939 = vand.u32 %v390, 4294901760
      %940 = vmatprep.subr.mxu0 %v939
      %v941 = vand.u32 %v388, 4294901760
      %942 = vmatpush1.msra.mxu0 %v941
      %943 = vmatprep.subr.mxu0 0.0
      %944 = vmatpush2.msra.mxu0 0.0
      %945 = vmatprep.subr.mxu0 0.0
      %946 = vmatpush2.msra.mxu0 0.0
      %947 = vmatprep.subr.mxu0 0.0
      %948 = vmatpush2.msra.mxu0 0.0
      %949 = vmatprep.subr.mxu0 0.0
      %950 = vmatpush2.msra.mxu0 0.0
      %951 = vmatprep.subr.mxu0 0.0
      %952 = vmatpush2.msra.mxu0 0.0
      %953 = vmatprep.subr.mxu0 0.0
      %954 = vmatpush2.msra.mxu0 0.0
      %955 = vmatprep.subr.mxu0 0.0
      %956 = vmatpush2.msra.mxu0 0.0
      %957 = vmatprep.subr.mxu0 0.0
      %958 = vmatpush2.msra.mxu0 0.0
      %959 = vmatprep.subr.mxu0 0.0
      %960 = vmatpush2.msra.mxu0 0.0
      %961 = vmatprep.subr.mxu0 0.0
      %962 = vmatpush2.msra.mxu0 0.0
      %963 = vmatprep.subr.mxu0 0.0
      %964 = vmatpush2.msra.mxu0 0.0
      %965 = vmatprep.subr.mxu0 0.0
      %966 = vmatpush2.msra.mxu0 0.0
      %967 = vmatprep.subr.mxu0 0.0
      %968 = vmatpush2.msra.mxu0 0.0
      %969 = vmatprep.subr.mxu0 0.0
      %970 = vmatpush2.msra.mxu0 0.0
      %971 = vmatprep.subr.mxu0 0.0
      %972 = vmatpush2.msra.mxu0 0.0
      %973 = vmatprep.subr.mxu0 0.0
      %974 = vmatpush2.msra.mxu0 0.0
      %975 = vmatprep.mubr.f32.mxu0 0.0
      %v976 = vand.u32 %v376, 4294901760
      %977 = vmatmul.mubr.f32.gmra.mxu0 %v976
      %v978 = vpop.f32.mrf.mxu0
      %v979 = vadd.f32 %v884, %v978
      %v980 = vpop.f32.mrf.mxu0
      %v981 = vadd.f32 %v886, %v980
      %982 = vmatprep.mubr.f32.mxu0 0.0
      %v983 = vand.u32 %v379, 4294901760
      %984 = vmatmul.mubr.f32.gmra.mxu0 %v983
      %v985 = vpop.f32.mrf.mxu0
      %v986 = vadd.f32 %v891, %v985
      %v987 = vpop.f32.mrf.mxu0
      %v988 = vadd.f32 %v893, %v987
      %989 = vmatprep.mubr.f32.mxu0 0.0
      %v990 = vand.u32 %v382, 4294901760
      %991 = vmatmul.mubr.f32.gmra.mxu0 %v990
      %v992 = vpop.f32.mrf.mxu0
      %v993 = vadd.f32 %v898, %v992
      %v994 = vpop.f32.mrf.mxu0
      %v995 = vadd.f32 %v900, %v994
      %996 = vmatprep.mubr.f32.mxu0 0.0
      %v997 = vand.u32 %v385, 4294901760
      %998 = vmatmul.mubr.f32.gmra.mxu0 %v997
      %v999 = vpop.f32.mrf.mxu0
      %v1000 = vadd.f32 %v905, %v999
      %v1001 = vpop.f32.mrf.mxu0
      %v1002 = vadd.f32 %v907, %v1001
      %1003 = vdwg.mxu0
      %v1004 = vand.u32 2147483647, %v979
      %vm1005 = vcmp.le.f32.partialorder %v1004, 0.7853982
      %vm1006 = vcmp.lt.s32.totalorder %v979, 0
      %v1007 = vand.u32 %v979, 2139095040
      %v1008 = vshrl.u32 %v1007, 23
      %v1009 = vsub.s32 %v1008, 127
      %v1010 = vand.u32 2147483647, %v979
      %v1011 = vand.u32 %v1010, 8388607
      %v1012 = vor.u32 %v1011, 8388608
      %v1013 = vsub.s32 0, %v1012
      %v1014 = vadd.s32 %v1009, 1
      %vm1015 = vcmp.gt.s32.totalorder %v1014, 0
      %v1016 = vsel %vm1015, %v1014, 0
      %v1017 = vshrl.u32 %v1016, 5
      %v1018 = vand.u32 %v1016, 31
      %v1019 = vsub.s32 32, %v1018
      %v1020 = vshrl.u32 683565275, %v1019
      %v1021 = vshll.u32 683565275, %v1018
      %v1022 = vshrl.u32 2475754826, %v1019
      %v1023 = vor.u32 %v1021, %v1022
      %v1024 = vshll.u32 2475754826, %v1018
      %v1025 = vshrl.u32 2131351028, %v1019
      %v1026 = vor.u32 %v1024, %v1025
      %v1027 = vshll.u32 2131351028, %v1018
      %v1028 = vshrl.u32 2102212464, %v1019
      %v1029 = vor.u32 %v1027, %v1028
      %v1030 = vshll.u32 2102212464, %v1018
      %v1031 = vshrl.u32 920167782, %v1019
      %v1032 = vor.u32 %v1030, %v1031
      %v1033 = vshll.u32 920167782, %v1018
      %v1034 = vshrl.u32 1326507024, %v1019
      %v1035 = vor.u32 %v1033, %v1034
      %vm1036 = vcmp.lt.s32.totalorder %v1017, 1
      %vm1037 = vcmp.lt.s32.totalorder %v1017, 2
      %vm1038 = vcmp.lt.s32.totalorder %v1017, 3
      %vm1039 = vcmp.lt.s32.totalorder %v1017, 4
      %v1040 = vsel %vm1036, %v1020, %v1023
      %v1041 = vsel %vm1039, %v1029, 2102212464
      %v1042 = vsel %vm1038, %v1026, %v1041
      %v1043 = vsel %vm1037, %v1040, %v1042
      %v1044 = vsel %vm1036, %v1023, %v1026
      %v1045 = vsel %vm1039, %v1032, 920167782
      %v1046 = vsel %vm1038, %v1029, %v1045
      %v1047 = vsel %vm1037, %v1044, %v1046
      %v1048 = vsel %vm1036, %v1026, %v1029
      %v1049 = vsel %vm1039, %v1035, 1326507024
      %v1050 = vsel %vm1038, %v1032, %v1049
      %v1051 = vsel %vm1037, %v1048, %v1050
      %v1052 = vshll.u32 %v1012, 8
      %v1053 = vmul.u32.u64.compose %v1052, %v1051
      %v1054 = vextract.low.u32 %v1053
      %v1055 = vextract.high.u32 %v1053
      %v1056 = vmul.u32.u64.compose %v1052, %v1047
      %v1057 = vextract.low.u32 %v1056
      %v1058 = vextract.high.u32 %v1056
      %v1059 = vmul.u32 %v1052, %v1043
      %v1060 = vadd.s32 %v1055, %v1057
      %vm1061 = vc.u32 %v1055, %v1057
      %v1062 = vadd.s32 %v1058, 1
      %v1063 = vsel %vm1061, %v1062, %v1058
      %v1064 = vadd.s32 %v1059, %v1063
      %v1065 = vadd.s32 %v1064, 536870912
      %v1066 = vshrl.u32 %v1065, 30
      %v1067 = vshll.u32 %v1066, 30
      %v1068 = vsub.s32 %v1064, %v1067
      %vm1069 = vcmp.lt.s32.totalorder %v1068, 0
      %v1070 = vsub.s32 0, %v1068
      %v1071 = vsel %vm1069, %v1070, %v1068
      %v1072 = vclz %v1071
      %v1073 = vsub.s32 %v1072, 2
      %vm1074 = vcmp.gt.s32.totalorder 0, %v1073
      %v1075 = vsel %vm1074, 0, %v1073
      %v1076 = vsub.s32 32, %v1075
      %v1077 = vshll.u32 %v1068, %v1075
      %v1078 = vshrl.u32 %v1060, %v1076
      %v1079 = vor.u32 %v1077, %v1078
      %v1080 = vsub.s32 4294967266, %v1075
      %v1081 = vadd.s32 %v1080, 127
      %v1082 = vshll.u32 %v1081, 23
      %v1083 = vor.u32 4788187, %v1082
      %v1084 = vand.u32 2147483647, %v1083
      %v1086 = vcvt.s32.f32 %v1079
      %v1087 = vmul.f32 %v1086, %v1084
      %v1088 = vxor.u32 %v1087, 2147483648
      %v1089 = vsel %vm1006, %v1088, %v1087
      %v1090 = vsub.s32 4, %v1066
      %v1091 = vsel %vm1006, %v1090, %v1066
      %v1092 = vsel %vm1005, %v979, %v1089
      %v1093 = vsel %vm1005, 0, %v1091
      %v1094 = vcosq.f32.pop %v1092
      %v1095 = vsinq.f32.pop %v1092
      %vm1096 = vweird.f32 %v979
      %v1097 = vadd.s32 %v1093, 3
      %v1098 = vand.u32 %v1097, 3
      %vm1099 = vcmp.lt.s32.totalorder %v1098, 2
      %vm1100 = vcmp.eq.s32.totalorder %v1098, 0
      %v1101 = vxor.u32 %v1095, 2147483648
      %v1102 = vsel %vm1100, %v1094, %v1101
      %vm1103 = vcmp.eq.s32.totalorder %v1098, 2
      %v1104 = vxor.u32 %v1094, 2147483648
      %v1105 = vsel %vm1103, %v1104, %v1095
      %v1106 = vsel %vm1099, %v1102, %v1105
      %v1107 = vsel %vm1096, nan, %v1106
      %v1108 = vand.u32 2147483647, %v981
      %vm1109 = vcmp.le.f32.partialorder %v1108, 0.7853982
      %vm1110 = vcmp.lt.s32.totalorder %v981, 0
      %v1111 = vand.u32 %v981, 2139095040
      %v1112 = vshrl.u32 %v1111, 23
      %v1113 = vsub.s32 %v1112, 127
      %v1114 = vand.u32 2147483647, %v981
      %v1115 = vand.u32 %v1114, 8388607
      %v1116 = vor.u32 %v1115, 8388608
      %v1117 = vsub.s32 0, %v1116
      %v1118 = vadd.s32 %v1113, 1
      %vm1119 = vcmp.gt.s32.totalorder %v1118, 0
      %v1120 = vsel %vm1119, %v1118, 0
      %v1121 = vshrl.u32 %v1120, 5
      %v1122 = vand.u32 %v1120, 31
      %v1123 = vsub.s32 32, %v1122
      %v1124 = vshrl.u32 683565275, %v1123
      %v1125 = vshll.u32 683565275, %v1122
      %v1126 = vshrl.u32 2475754826, %v1123
      %v1127 = vor.u32 %v1125, %v1126
      %v1128 = vshll.u32 2475754826, %v1122
      %v1129 = vshrl.u32 2131351028, %v1123
      %v1130 = vor.u32 %v1128, %v1129
      %v1131 = vshll.u32 2131351028, %v1122
      %v1132 = vshrl.u32 2102212464, %v1123
      %v1133 = vor.u32 %v1131, %v1132
      %v1134 = vshll.u32 2102212464, %v1122
      %v1135 = vshrl.u32 920167782, %v1123
      %v1136 = vor.u32 %v1134, %v1135
      %v1137 = vshll.u32 920167782, %v1122
      %v1138 = vshrl.u32 1326507024, %v1123
      %v1139 = vor.u32 %v1137, %v1138
      %vm1140 = vcmp.lt.s32.totalorder %v1121, 1
      %vm1141 = vcmp.lt.s32.totalorder %v1121, 2
      %vm1142 = vcmp.lt.s32.totalorder %v1121, 3
      %vm1143 = vcmp.lt.s32.totalorder %v1121, 4
      %v1144 = vsel %vm1140, %v1124, %v1127
      %v1145 = vsel %vm1143, %v1133, 2102212464
      %v1146 = vsel %vm1142, %v1130, %v1145
      %v1147 = vsel %vm1141, %v1144, %v1146
      %v1148 = vsel %vm1140, %v1127, %v1130
      %v1149 = vsel %vm1143, %v1136, 920167782
      %v1150 = vsel %vm1142, %v1133, %v1149
      %v1151 = vsel %vm1141, %v1148, %v1150
      %v1152 = vsel %vm1140, %v1130, %v1133
      %v1153 = vsel %vm1143, %v1139, 1326507024
      %v1154 = vsel %vm1142, %v1136, %v1153
      %v1155 = vsel %vm1141, %v1152, %v1154
      %v1156 = vshll.u32 %v1116, 8
      %v1157 = vmul.u32.u64.compose %v1156, %v1155
      %v1158 = vextract.low.u32 %v1157
      %v1159 = vextract.high.u32 %v1157
      %v1160 = vmul.u32.u64.compose %v1156, %v1151
      %v1161 = vextract.low.u32 %v1160
      %v1162 = vextract.high.u32 %v1160
      %v1163 = vmul.u32 %v1156, %v1147
      %v1164 = vadd.s32 %v1159, %v1161
      %vm1165 = vc.u32 %v1159, %v1161
      %v1166 = vadd.s32 %v1162, 1
      %v1167 = vsel %vm1165, %v1166, %v1162
      %v1168 = vadd.s32 %v1163, %v1167
      %v1169 = vadd.s32 %v1168, 536870912
      %v1170 = vshrl.u32 %v1169, 30
      %v1171 = vshll.u32 %v1170, 30
      %v1172 = vsub.s32 %v1168, %v1171
      %vm1173 = vcmp.lt.s32.totalorder %v1172, 0
      %v1174 = vsub.s32 0, %v1172
      %v1175 = vsel %vm1173, %v1174, %v1172
      %v1176 = vclz %v1175
      %v1177 = vsub.s32 %v1176, 2
      %vm1178 = vcmp.gt.s32.totalorder 0, %v1177
      %v1179 = vsel %vm1178, 0, %v1177
      %v1180 = vsub.s32 32, %v1179
      %v1181 = vshll.u32 %v1172, %v1179
      %v1182 = vshrl.u32 %v1164, %v1180
      %v1183 = vor.u32 %v1181, %v1182
      %v1184 = vsub.s32 4294967266, %v1179
      %v1185 = vadd.s32 %v1184, 127
      %v1186 = vshll.u32 %v1185, 23
      %v1187 = vor.u32 4788187, %v1186
      %v1188 = vand.u32 2147483647, %v1187
      %v1190 = vcvt.s32.f32 %v1183
      %v1191 = vmul.f32 %v1190, %v1188
      %v1192 = vxor.u32 %v1191, 2147483648
      %v1193 = vsel %vm1110, %v1192, %v1191
      %v1194 = vsub.s32 4, %v1170
      %v1195 = vsel %vm1110, %v1194, %v1170
      %v1196 = vsel %vm1109, %v981, %v1193
      %v1197 = vsel %vm1109, 0, %v1195
      %v1198 = vcosq.f32.pop %v1196
      %v1199 = vsinq.f32.pop %v1196
      %vm1200 = vweird.f32 %v981
      %v1201 = vadd.s32 %v1197, 3
      %v1202 = vand.u32 %v1201, 3
      %vm1203 = vcmp.lt.s32.totalorder %v1202, 2
      %vm1204 = vcmp.eq.s32.totalorder %v1202, 0
      %v1205 = vxor.u32 %v1199, 2147483648
      %v1206 = vsel %vm1204, %v1198, %v1205
      %vm1207 = vcmp.eq.s32.totalorder %v1202, 2
      %v1208 = vxor.u32 %v1198, 2147483648
      %v1209 = vsel %vm1207, %v1208, %v1199
      %v1210 = vsel %vm1203, %v1206, %v1209
      %v1211 = vsel %vm1200, nan, %v1210
      %v1212 = vand.u32 2147483647, %v986
      %vm1213 = vcmp.le.f32.partialorder %v1212, 0.7853982
      %vm1214 = vcmp.lt.s32.totalorder %v986, 0
      %v1215 = vand.u32 %v986, 2139095040
      %v1216 = vshrl.u32 %v1215, 23
      %v1217 = vsub.s32 %v1216, 127
      %v1218 = vand.u32 2147483647, %v986
      %v1219 = vand.u32 %v1218, 8388607
      %v1220 = vor.u32 %v1219, 8388608
      %v1221 = vsub.s32 0, %v1220
      %v1222 = vadd.s32 %v1217, 1
      %vm1223 = vcmp.gt.s32.totalorder %v1222, 0
      %v1224 = vsel %vm1223, %v1222, 0
      %v1225 = vshrl.u32 %v1224, 5
      %v1226 = vand.u32 %v1224, 31
      %v1227 = vsub.s32 32, %v1226
      %v1228 = vshrl.u32 683565275, %v1227
      %v1229 = vshll.u32 683565275, %v1226
      %v1230 = vshrl.u32 2475754826, %v1227
      %v1231 = vor.u32 %v1229, %v1230
      %v1232 = vshll.u32 2475754826, %v1226
      %v1233 = vshrl.u32 2131351028, %v1227
      %v1234 = vor.u32 %v1232, %v1233
      %v1235 = vshll.u32 2131351028, %v1226
      %v1236 = vshrl.u32 2102212464, %v1227
      %v1237 = vor.u32 %v1235, %v1236
      %v1238 = vshll.u32 2102212464, %v1226
      %v1239 = vshrl.u32 920167782, %v1227
      %v1240 = vor.u32 %v1238, %v1239
      %v1241 = vshll.u32 920167782, %v1226
      %v1242 = vshrl.u32 1326507024, %v1227
      %v1243 = vor.u32 %v1241, %v1242
      %vm1244 = vcmp.lt.s32.totalorder %v1225, 1
      %vm1245 = vcmp.lt.s32.totalorder %v1225, 2
      %vm1246 = vcmp.lt.s32.totalorder %v1225, 3
      %vm1247 = vcmp.lt.s32.totalorder %v1225, 4
      %v1248 = vsel %vm1244, %v1228, %v1231
      %v1249 = vsel %vm1247, %v1237, 2102212464
      %v1250 = vsel %vm1246, %v1234, %v1249
      %v1251 = vsel %vm1245, %v1248, %v1250
      %v1252 = vsel %vm1244, %v1231, %v1234
      %v1253 = vsel %vm1247, %v1240, 920167782
      %v1254 = vsel %vm1246, %v1237, %v1253
      %v1255 = vsel %vm1245, %v1252, %v1254
      %v1256 = vsel %vm1244, %v1234, %v1237
      %v1257 = vsel %vm1247, %v1243, 1326507024
      %v1258 = vsel %vm1246, %v1240, %v1257
      %v1259 = vsel %vm1245, %v1256, %v1258
      %v1260 = vshll.u32 %v1220, 8
      %v1261 = vmul.u32.u64.compose %v1260, %v1259
      %v1262 = vextract.low.u32 %v1261
      %v1263 = vextract.high.u32 %v1261
      %v1264 = vmul.u32.u64.compose %v1260, %v1255
      %v1265 = vextract.low.u32 %v1264
      %v1266 = vextract.high.u32 %v1264
      %v1267 = vmul.u32 %v1260, %v1251
      %v1268 = vadd.s32 %v1263, %v1265
      %vm1269 = vc.u32 %v1263, %v1265
      %v1270 = vadd.s32 %v1266, 1
      %v1271 = vsel %vm1269, %v1270, %v1266
      %v1272 = vadd.s32 %v1267, %v1271
      %v1273 = vadd.s32 %v1272, 536870912
      %v1274 = vshrl.u32 %v1273, 30
      %v1275 = vshll.u32 %v1274, 30
      %v1276 = vsub.s32 %v1272, %v1275
      %vm1277 = vcmp.lt.s32.totalorder %v1276, 0
      %v1278 = vsub.s32 0, %v1276
      %v1279 = vsel %vm1277, %v1278, %v1276
      %v1280 = vclz %v1279
      %v1281 = vsub.s32 %v1280, 2
      %vm1282 = vcmp.gt.s32.totalorder 0, %v1281
      %v1283 = vsel %vm1282, 0, %v1281
      %v1284 = vsub.s32 32, %v1283
      %v1285 = vshll.u32 %v1276, %v1283
      %v1286 = vshrl.u32 %v1268, %v1284
      %v1287 = vor.u32 %v1285, %v1286
      %v1288 = vsub.s32 4294967266, %v1283
      %v1289 = vadd.s32 %v1288, 127
      %v1290 = vshll.u32 %v1289, 23
      %v1291 = vor.u32 4788187, %v1290
      %v1292 = vand.u32 2147483647, %v1291
      %v1294 = vcvt.s32.f32 %v1287
      %v1295 = vmul.f32 %v1294, %v1292
      %v1296 = vxor.u32 %v1295, 2147483648
      %v1297 = vsel %vm1214, %v1296, %v1295
      %v1298 = vsub.s32 4, %v1274
      %v1299 = vsel %vm1214, %v1298, %v1274
      %v1300 = vsel %vm1213, %v986, %v1297
      %v1301 = vsel %vm1213, 0, %v1299
      %v1302 = vcosq.f32.pop %v1300
      %v1303 = vsinq.f32.pop %v1300
      %vm1304 = vweird.f32 %v986
      %v1305 = vadd.s32 %v1301, 3
      %v1306 = vand.u32 %v1305, 3
      %vm1307 = vcmp.lt.s32.totalorder %v1306, 2
      %vm1308 = vcmp.eq.s32.totalorder %v1306, 0
      %v1309 = vxor.u32 %v1303, 2147483648
      %v1310 = vsel %vm1308, %v1302, %v1309
      %vm1311 = vcmp.eq.s32.totalorder %v1306, 2
      %v1312 = vxor.u32 %v1302, 2147483648
      %v1313 = vsel %vm1311, %v1312, %v1303
      %v1314 = vsel %vm1307, %v1310, %v1313
      %v1315 = vsel %vm1304, nan, %v1314
      %v1316 = vand.u32 2147483647, %v988
      %vm1317 = vcmp.le.f32.partialorder %v1316, 0.7853982
      %vm1318 = vcmp.lt.s32.totalorder %v988, 0
      %v1319 = vand.u32 %v988, 2139095040
      %v1320 = vshrl.u32 %v1319, 23
      %v1321 = vsub.s32 %v1320, 127
      %v1322 = vand.u32 2147483647, %v988
      %v1323 = vand.u32 %v1322, 8388607
      %v1324 = vor.u32 %v1323, 8388608
      %v1325 = vsub.s32 0, %v1324
      %v1326 = vadd.s32 %v1321, 1
      %vm1327 = vcmp.gt.s32.totalorder %v1326, 0
      %v1328 = vsel %vm1327, %v1326, 0
      %v1329 = vshrl.u32 %v1328, 5
      %v1330 = vand.u32 %v1328, 31
      %v1331 = vsub.s32 32, %v1330
      %v1332 = vshrl.u32 683565275, %v1331
      %v1333 = vshll.u32 683565275, %v1330
      %v1334 = vshrl.u32 2475754826, %v1331
      %v1335 = vor.u32 %v1333, %v1334
      %v1336 = vshll.u32 2475754826, %v1330
      %v1337 = vshrl.u32 2131351028, %v1331
      %v1338 = vor.u32 %v1336, %v1337
      %v1339 = vshll.u32 2131351028, %v1330
      %v1340 = vshrl.u32 2102212464, %v1331
      %v1341 = vor.u32 %v1339, %v1340
      %v1342 = vshll.u32 2102212464, %v1330
      %v1343 = vshrl.u32 920167782, %v1331
      %v1344 = vor.u32 %v1342, %v1343
      %v1345 = vshll.u32 920167782, %v1330
      %v1346 = vshrl.u32 1326507024, %v1331
      %v1347 = vor.u32 %v1345, %v1346
      %vm1348 = vcmp.lt.s32.totalorder %v1329, 1
      %vm1349 = vcmp.lt.s32.totalorder %v1329, 2
      %vm1350 = vcmp.lt.s32.totalorder %v1329, 3
      %vm1351 = vcmp.lt.s32.totalorder %v1329, 4
      %v1352 = vsel %vm1348, %v1332, %v1335
      %v1353 = vsel %vm1351, %v1341, 2102212464
      %v1354 = vsel %vm1350, %v1338, %v1353
      %v1355 = vsel %vm1349, %v1352, %v1354
      %v1356 = vsel %vm1348, %v1335, %v1338
      %v1357 = vsel %vm1351, %v1344, 920167782
      %v1358 = vsel %vm1350, %v1341, %v1357
      %v1359 = vsel %vm1349, %v1356, %v1358
      %v1360 = vsel %vm1348, %v1338, %v1341
      %v1361 = vsel %vm1351, %v1347, 1326507024
      %v1362 = vsel %vm1350, %v1344, %v1361
      %v1363 = vsel %vm1349, %v1360, %v1362
      %v1364 = vshll.u32 %v1324, 8
      %v1365 = vmul.u32.u64.compose %v1364, %v1363
      %v1366 = vextract.low.u32 %v1365
      %v1367 = vextract.high.u32 %v1365
      %v1368 = vmul.u32.u64.compose %v1364, %v1359
      %v1369 = vextract.low.u32 %v1368
      %v1370 = vextract.high.u32 %v1368
      %v1371 = vmul.u32 %v1364, %v1355
      %v1372 = vadd.s32 %v1367, %v1369
      %vm1373 = vc.u32 %v1367, %v1369
      %v1374 = vadd.s32 %v1370, 1
      %v1375 = vsel %vm1373, %v1374, %v1370
      %v1376 = vadd.s32 %v1371, %v1375
      %v1377 = vadd.s32 %v1376, 536870912
      %v1378 = vshrl.u32 %v1377, 30
      %v1379 = vshll.u32 %v1378, 30
      %v1380 = vsub.s32 %v1376, %v1379
      %vm1381 = vcmp.lt.s32.totalorder %v1380, 0
      %v1382 = vsub.s32 0, %v1380
      %v1383 = vsel %vm1381, %v1382, %v1380
      %v1384 = vclz %v1383
      %v1385 = vsub.s32 %v1384, 2
      %vm1386 = vcmp.gt.s32.totalorder 0, %v1385
      %v1387 = vsel %vm1386, 0, %v1385
      %v1388 = vsub.s32 32, %v1387
      %v1389 = vshll.u32 %v1380, %v1387
      %v1390 = vshrl.u32 %v1372, %v1388
      %v1391 = vor.u32 %v1389, %v1390
      %v1392 = vsub.s32 4294967266, %v1387
      %v1393 = vadd.s32 %v1392, 127
      %v1394 = vshll.u32 %v1393, 23
      %v1395 = vor.u32 4788187, %v1394
      %v1396 = vand.u32 2147483647, %v1395
      %v1398 = vcvt.s32.f32 %v1391
      %v1399 = vmul.f32 %v1398, %v1396
      %v1400 = vxor.u32 %v1399, 2147483648
      %v1401 = vsel %vm1318, %v1400, %v1399
      %v1402 = vsub.s32 4, %v1378
      %v1403 = vsel %vm1318, %v1402, %v1378
      %v1404 = vsel %vm1317, %v988, %v1401
      %v1405 = vsel %vm1317, 0, %v1403
      %v1406 = vcosq.f32.pop %v1404
      %v1407 = vsinq.f32.pop %v1404
      %vm1408 = vweird.f32 %v988
      %v1409 = vadd.s32 %v1405, 3
      %v1410 = vand.u32 %v1409, 3
      %vm1411 = vcmp.lt.s32.totalorder %v1410, 2
      %vm1412 = vcmp.eq.s32.totalorder %v1410, 0
      %v1413 = vxor.u32 %v1407, 2147483648
      %v1414 = vsel %vm1412, %v1406, %v1413
      %vm1415 = vcmp.eq.s32.totalorder %v1410, 2
      %v1416 = vxor.u32 %v1406, 2147483648
      %v1417 = vsel %vm1415, %v1416, %v1407
      %v1418 = vsel %vm1411, %v1414, %v1417
      %v1419 = vsel %vm1408, nan, %v1418
      %v1420 = vand.u32 2147483647, %v993
      %vm1421 = vcmp.le.f32.partialorder %v1420, 0.7853982
      %vm1422 = vcmp.lt.s32.totalorder %v993, 0
      %v1423 = vand.u32 %v993, 2139095040
      %v1424 = vshrl.u32 %v1423, 23
      %v1425 = vsub.s32 %v1424, 127
      %v1426 = vand.u32 2147483647, %v993
      %v1427 = vand.u32 %v1426, 8388607
      %v1428 = vor.u32 %v1427, 8388608
      %v1429 = vsub.s32 0, %v1428
      %v1430 = vadd.s32 %v1425, 1
      %vm1431 = vcmp.gt.s32.totalorder %v1430, 0
      %v1432 = vsel %vm1431, %v1430, 0
      %v1433 = vshrl.u32 %v1432, 5
      %v1434 = vand.u32 %v1432, 31
      %v1435 = vsub.s32 32, %v1434
      %v1436 = vshrl.u32 683565275, %v1435
      %v1437 = vshll.u32 683565275, %v1434
      %v1438 = vshrl.u32 2475754826, %v1435
      %v1439 = vor.u32 %v1437, %v1438
      %v1440 = vshll.u32 2475754826, %v1434
      %v1441 = vshrl.u32 2131351028, %v1435
      %v1442 = vor.u32 %v1440, %v1441
      %v1443 = vshll.u32 2131351028, %v1434
      %v1444 = vshrl.u32 2102212464, %v1435
      %v1445 = vor.u32 %v1443, %v1444
      %v1446 = vshll.u32 2102212464, %v1434
      %v1447 = vshrl.u32 920167782, %v1435
      %v1448 = vor.u32 %v1446, %v1447
      %v1449 = vshll.u32 920167782, %v1434
      %v1450 = vshrl.u32 1326507024, %v1435
      %v1451 = vor.u32 %v1449, %v1450
      %vm1452 = vcmp.lt.s32.totalorder %v1433, 1
      %vm1453 = vcmp.lt.s32.totalorder %v1433, 2
      %vm1454 = vcmp.lt.s32.totalorder %v1433, 3
      %vm1455 = vcmp.lt.s32.totalorder %v1433, 4
      %v1456 = vsel %vm1452, %v1436, %v1439
      %v1457 = vsel %vm1455, %v1445, 2102212464
      %v1458 = vsel %vm1454, %v1442, %v1457
      %v1459 = vsel %vm1453, %v1456, %v1458
      %v1460 = vsel %vm1452, %v1439, %v1442
      %v1461 = vsel %vm1455, %v1448, 920167782
      %v1462 = vsel %vm1454, %v1445, %v1461
      %v1463 = vsel %vm1453, %v1460, %v1462
      %v1464 = vsel %vm1452, %v1442, %v1445
      %v1465 = vsel %vm1455, %v1451, 1326507024
      %v1466 = vsel %vm1454, %v1448, %v1465
      %v1467 = vsel %vm1453, %v1464, %v1466
      %v1468 = vshll.u32 %v1428, 8
      %v1469 = vmul.u32.u64.compose %v1468, %v1467
      %v1470 = vextract.low.u32 %v1469
      %v1471 = vextract.high.u32 %v1469
      %v1472 = vmul.u32.u64.compose %v1468, %v1463
      %v1473 = vextract.low.u32 %v1472
      %v1474 = vextract.high.u32 %v1472
      %v1475 = vmul.u32 %v1468, %v1459
      %v1476 = vadd.s32 %v1471, %v1473
      %vm1477 = vc.u32 %v1471, %v1473
      %v1478 = vadd.s32 %v1474, 1
      %v1479 = vsel %vm1477, %v1478, %v1474
      %v1480 = vadd.s32 %v1475, %v1479
      %v1481 = vadd.s32 %v1480, 536870912
      %v1482 = vshrl.u32 %v1481, 30
      %v1483 = vshll.u32 %v1482, 30
      %v1484 = vsub.s32 %v1480, %v1483
      %vm1485 = vcmp.lt.s32.totalorder %v1484, 0
      %v1486 = vsub.s32 0, %v1484
      %v1487 = vsel %vm1485, %v1486, %v1484
      %v1488 = vclz %v1487
      %v1489 = vsub.s32 %v1488, 2
      %vm1490 = vcmp.gt.s32.totalorder 0, %v1489
      %v1491 = vsel %vm1490, 0, %v1489
      %v1492 = vsub.s32 32, %v1491
      %v1493 = vshll.u32 %v1484, %v1491
      %v1494 = vshrl.u32 %v1476, %v1492
      %v1495 = vor.u32 %v1493, %v1494
      %v1496 = vsub.s32 4294967266, %v1491
      %v1497 = vadd.s32 %v1496, 127
      %v1498 = vshll.u32 %v1497, 23
      %v1499 = vor.u32 4788187, %v1498
      %v1500 = vand.u32 2147483647, %v1499
      %v1502 = vcvt.s32.f32 %v1495
      %v1503 = vmul.f32 %v1502, %v1500
      %v1504 = vxor.u32 %v1503, 2147483648
      %v1505 = vsel %vm1422, %v1504, %v1503
      %v1506 = vsub.s32 4, %v1482
      %v1507 = vsel %vm1422, %v1506, %v1482
      %v1508 = vsel %vm1421, %v993, %v1505
      %v1509 = vsel %vm1421, 0, %v1507
      %v1510 = vcosq.f32.pop %v1508
      %v1511 = vsinq.f32.pop %v1508
      %vm1512 = vweird.f32 %v993
      %v1513 = vadd.s32 %v1509, 3
      %v1514 = vand.u32 %v1513, 3
      %vm1515 = vcmp.lt.s32.totalorder %v1514, 2
      %vm1516 = vcmp.eq.s32.totalorder %v1514, 0
      %v1517 = vxor.u32 %v1511, 2147483648
      %v1518 = vsel %vm1516, %v1510, %v1517
      %vm1519 = vcmp.eq.s32.totalorder %v1514, 2
      %v1520 = vxor.u32 %v1510, 2147483648
      %v1521 = vsel %vm1519, %v1520, %v1511
      %v1522 = vsel %vm1515, %v1518, %v1521
      %v1523 = vsel %vm1512, nan, %v1522
      %v1524 = vand.u32 2147483647, %v995
      %vm1525 = vcmp.le.f32.partialorder %v1524, 0.7853982
      %vm1526 = vcmp.lt.s32.totalorder %v995, 0
      %v1527 = vand.u32 %v995, 2139095040
      %v1528 = vshrl.u32 %v1527, 23
      %v1529 = vsub.s32 %v1528, 127
      %v1530 = vand.u32 2147483647, %v995
      %v1531 = vand.u32 %v1530, 8388607
      %v1532 = vor.u32 %v1531, 8388608
      %v1533 = vsub.s32 0, %v1532
      %v1534 = vadd.s32 %v1529, 1
      %vm1535 = vcmp.gt.s32.totalorder %v1534, 0
      %v1536 = vsel %vm1535, %v1534, 0
      %v1537 = vshrl.u32 %v1536, 5
      %v1538 = vand.u32 %v1536, 31
      %v1539 = vsub.s32 32, %v1538
      %v1540 = vshrl.u32 683565275, %v1539
      %v1541 = vshll.u32 683565275, %v1538
      %v1542 = vshrl.u32 2475754826, %v1539
      %v1543 = vor.u32 %v1541, %v1542
      %v1544 = vshll.u32 2475754826, %v1538
      %v1545 = vshrl.u32 2131351028, %v1539
      %v1546 = vor.u32 %v1544, %v1545
      %v1547 = vshll.u32 2131351028, %v1538
      %v1548 = vshrl.u32 2102212464, %v1539
      %v1549 = vor.u32 %v1547, %v1548
      %v1550 = vshll.u32 2102212464, %v1538
      %v1551 = vshrl.u32 920167782, %v1539
      %v1552 = vor.u32 %v1550, %v1551
      %v1553 = vshll.u32 920167782, %v1538
      %v1554 = vshrl.u32 1326507024, %v1539
      %v1555 = vor.u32 %v1553, %v1554
      %vm1556 = vcmp.lt.s32.totalorder %v1537, 1
      %vm1557 = vcmp.lt.s32.totalorder %v1537, 2
      %vm1558 = vcmp.lt.s32.totalorder %v1537, 3
      %vm1559 = vcmp.lt.s32.totalorder %v1537, 4
      %v1560 = vsel %vm1556, %v1540, %v1543
      %v1561 = vsel %vm1559, %v1549, 2102212464
      %v1562 = vsel %vm1558, %v1546, %v1561
      %v1563 = vsel %vm1557, %v1560, %v1562
      %v1564 = vsel %vm1556, %v1543, %v1546
      %v1565 = vsel %vm1559, %v1552, 920167782
      %v1566 = vsel %vm1558, %v1549, %v1565
      %v1567 = vsel %vm1557, %v1564, %v1566
      %v1568 = vsel %vm1556, %v1546, %v1549
      %v1569 = vsel %vm1559, %v1555, 1326507024
      %v1570 = vsel %vm1558, %v1552, %v1569
      %v1571 = vsel %vm1557, %v1568, %v1570
      %v1572 = vshll.u32 %v1532, 8
      %v1573 = vmul.u32.u64.compose %v1572, %v1571
      %v1574 = vextract.low.u32 %v1573
      %v1575 = vextract.high.u32 %v1573
      %v1576 = vmul.u32.u64.compose %v1572, %v1567
      %v1577 = vextract.low.u32 %v1576
      %v1578 = vextract.high.u32 %v1576
      %v1579 = vmul.u32 %v1572, %v1563
      %v1580 = vadd.s32 %v1575, %v1577
      %vm1581 = vc.u32 %v1575, %v1577
      %v1582 = vadd.s32 %v1578, 1
      %v1583 = vsel %vm1581, %v1582, %v1578
      %v1584 = vadd.s32 %v1579, %v1583
      %v1585 = vadd.s32 %v1584, 536870912
      %v1586 = vshrl.u32 %v1585, 30
      %v1587 = vshll.u32 %v1586, 30
      %v1588 = vsub.s32 %v1584, %v1587
      %vm1589 = vcmp.lt.s32.totalorder %v1588, 0
      %v1590 = vsub.s32 0, %v1588
      %v1591 = vsel %vm1589, %v1590, %v1588
      %v1592 = vclz %v1591
      %v1593 = vsub.s32 %v1592, 2
      %vm1594 = vcmp.gt.s32.totalorder 0, %v1593
      %v1595 = vsel %vm1594, 0, %v1593
      %v1596 = vsub.s32 32, %v1595
      %v1597 = vshll.u32 %v1588, %v1595
      %v1598 = vshrl.u32 %v1580, %v1596
      %v1599 = vor.u32 %v1597, %v1598
      %v1600 = vsub.s32 4294967266, %v1595
      %v1601 = vadd.s32 %v1600, 127
      %v1602 = vshll.u32 %v1601, 23
      %v1603 = vor.u32 4788187, %v1602
      %v1604 = vand.u32 2147483647, %v1603
      %v1606 = vcvt.s32.f32 %v1599
      %v1607 = vmul.f32 %v1606, %v1604
      %v1608 = vxor.u32 %v1607, 2147483648
      %v1609 = vsel %vm1526, %v1608, %v1607
      %v1610 = vsub.s32 4, %v1586
      %v1611 = vsel %vm1526, %v1610, %v1586
      %v1612 = vsel %vm1525, %v995, %v1609
      %v1613 = vsel %vm1525, 0, %v1611
      %v1614 = vcosq.f32.pop %v1612
      %v1615 = vsinq.f32.pop %v1612
      %vm1616 = vweird.f32 %v995
      %v1617 = vadd.s32 %v1613, 3
      %v1618 = vand.u32 %v1617, 3
      %vm1619 = vcmp.lt.s32.totalorder %v1618, 2
      %vm1620 = vcmp.eq.s32.totalorder %v1618, 0
      %v1621 = vxor.u32 %v1615, 2147483648
      %v1622 = vsel %vm1620, %v1614, %v1621
      %vm1623 = vcmp.eq.s32.totalorder %v1618, 2
      %v1624 = vxor.u32 %v1614, 2147483648
      %v1625 = vsel %vm1623, %v1624, %v1615
      %v1626 = vsel %vm1619, %v1622, %v1625
      %v1627 = vsel %vm1616, nan, %v1626
      %v1628 = vand.u32 2147483647, %v1000
      %vm1629 = vcmp.le.f32.partialorder %v1628, 0.7853982
      %vm1630 = vcmp.lt.s32.totalorder %v1000, 0
      %v1631 = vand.u32 %v1000, 2139095040
      %v1632 = vshrl.u32 %v1631, 23
      %v1633 = vsub.s32 %v1632, 127
      %v1634 = vand.u32 2147483647, %v1000
      %v1635 = vand.u32 %v1634, 8388607
      %v1636 = vor.u32 %v1635, 8388608
      %v1637 = vsub.s32 0, %v1636
      %v1638 = vadd.s32 %v1633, 1
      %vm1639 = vcmp.gt.s32.totalorder %v1638, 0
      %v1640 = vsel %vm1639, %v1638, 0
      %v1641 = vshrl.u32 %v1640, 5
      %v1642 = vand.u32 %v1640, 31
      %v1643 = vsub.s32 32, %v1642
      %v1644 = vshrl.u32 683565275, %v1643
      %v1645 = vshll.u32 683565275, %v1642
      %v1646 = vshrl.u32 2475754826, %v1643
      %v1647 = vor.u32 %v1645, %v1646
      %v1648 = vshll.u32 2475754826, %v1642
      %v1649 = vshrl.u32 2131351028, %v1643
      %v1650 = vor.u32 %v1648, %v1649
      %v1651 = vshll.u32 2131351028, %v1642
      %v1652 = vshrl.u32 2102212464, %v1643
      %v1653 = vor.u32 %v1651, %v1652
      %v1654 = vshll.u32 2102212464, %v1642
      %v1655 = vshrl.u32 920167782, %v1643
      %v1656 = vor.u32 %v1654, %v1655
      %v1657 = vshll.u32 920167782, %v1642
      %v1658 = vshrl.u32 1326507024, %v1643
      %v1659 = vor.u32 %v1657, %v1658
      %vm1660 = vcmp.lt.s32.totalorder %v1641, 1
      %vm1661 = vcmp.lt.s32.totalorder %v1641, 2
      %vm1662 = vcmp.lt.s32.totalorder %v1641, 3
      %vm1663 = vcmp.lt.s32.totalorder %v1641, 4
      %v1664 = vsel %vm1660, %v1644, %v1647
      %v1665 = vsel %vm1663, %v1653, 2102212464
      %v1666 = vsel %vm1662, %v1650, %v1665
      %v1667 = vsel %vm1661, %v1664, %v1666
      %v1668 = vsel %vm1660, %v1647, %v1650
      %v1669 = vsel %vm1663, %v1656, 920167782
      %v1670 = vsel %vm1662, %v1653, %v1669
      %v1671 = vsel %vm1661, %v1668, %v1670
      %v1672 = vsel %vm1660, %v1650, %v1653
      %v1673 = vsel %vm1663, %v1659, 1326507024
      %v1674 = vsel %vm1662, %v1656, %v1673
      %v1675 = vsel %vm1661, %v1672, %v1674
      %v1676 = vshll.u32 %v1636, 8
      %v1677 = vmul.u32.u64.compose %v1676, %v1675
      %v1678 = vextract.low.u32 %v1677
      %v1679 = vextract.high.u32 %v1677
      %v1680 = vmul.u32.u64.compose %v1676, %v1671
      %v1681 = vextract.low.u32 %v1680
      %v1682 = vextract.high.u32 %v1680
      %v1683 = vmul.u32 %v1676, %v1667
      %v1684 = vadd.s32 %v1679, %v1681
      %vm1685 = vc.u32 %v1679, %v1681
      %v1686 = vadd.s32 %v1682, 1
      %v1687 = vsel %vm1685, %v1686, %v1682
      %v1688 = vadd.s32 %v1683, %v1687
      %v1689 = vadd.s32 %v1688, 536870912
      %v1690 = vshrl.u32 %v1689, 30
      %v1691 = vshll.u32 %v1690, 30
      %v1692 = vsub.s32 %v1688, %v1691
      %vm1693 = vcmp.lt.s32.totalorder %v1692, 0
      %v1694 = vsub.s32 0, %v1692
      %v1695 = vsel %vm1693, %v1694, %v1692
      %v1696 = vclz %v1695
      %v1697 = vsub.s32 %v1696, 2
      %vm1698 = vcmp.gt.s32.totalorder 0, %v1697
      %v1699 = vsel %vm1698, 0, %v1697
      %v1700 = vsub.s32 32, %v1699
      %v1701 = vshll.u32 %v1692, %v1699
      %v1702 = vshrl.u32 %v1684, %v1700
      %v1703 = vor.u32 %v1701, %v1702
      %v1704 = vsub.s32 4294967266, %v1699
      %v1705 = vadd.s32 %v1704, 127
      %v1706 = vshll.u32 %v1705, 23
      %v1707 = vor.u32 4788187, %v1706
      %v1708 = vand.u32 2147483647, %v1707
      %v1710 = vcvt.s32.f32 %v1703
      %v1711 = vmul.f32 %v1710, %v1708
      %v1712 = vxor.u32 %v1711, 2147483648
      %v1713 = vsel %vm1630, %v1712, %v1711
      %v1714 = vsub.s32 4, %v1690
      %v1715 = vsel %vm1630, %v1714, %v1690
      %v1716 = vsel %vm1629, %v1000, %v1713
      %v1717 = vsel %vm1629, 0, %v1715
      %v1718 = vcosq.f32.pop %v1716
      %v1719 = vsinq.f32.pop %v1716
      %vm1720 = vweird.f32 %v1000
      %v1721 = vadd.s32 %v1717, 3
      %v1722 = vand.u32 %v1721, 3
      %vm1723 = vcmp.lt.s32.totalorder %v1722, 2
      %vm1724 = vcmp.eq.s32.totalorder %v1722, 0
      %v1725 = vxor.u32 %v1719, 2147483648
      %v1726 = vsel %vm1724, %v1718, %v1725
      %vm1727 = vcmp.eq.s32.totalorder %v1722, 2
      %v1728 = vxor.u32 %v1718, 2147483648
      %v1729 = vsel %vm1727, %v1728, %v1719
      %v1730 = vsel %vm1723, %v1726, %v1729
      %v1731 = vsel %vm1720, nan, %v1730
      %v1732 = vand.u32 2147483647, %v1002
      %vm1733 = vcmp.le.f32.partialorder %v1732, 0.7853982
      %vm1734 = vcmp.lt.s32.totalorder %v1002, 0
      %v1735 = vand.u32 %v1002, 2139095040
      %v1736 = vshrl.u32 %v1735, 23
      %v1737 = vsub.s32 %v1736, 127
      %v1738 = vand.u32 2147483647, %v1002
      %v1739 = vand.u32 %v1738, 8388607
      %v1740 = vor.u32 %v1739, 8388608
      %v1741 = vsub.s32 0, %v1740
      %v1742 = vadd.s32 %v1737, 1
      %vm1743 = vcmp.gt.s32.totalorder %v1742, 0
      %v1744 = vsel %vm1743, %v1742, 0
      %v1745 = vshrl.u32 %v1744, 5
      %v1746 = vand.u32 %v1744, 31
      %v1747 = vsub.s32 32, %v1746
      %v1748 = vshrl.u32 683565275, %v1747
      %v1749 = vshll.u32 683565275, %v1746
      %v1750 = vshrl.u32 2475754826, %v1747
      %v1751 = vor.u32 %v1749, %v1750
      %v1752 = vshll.u32 2475754826, %v1746
      %v1753 = vshrl.u32 2131351028, %v1747
      %v1754 = vor.u32 %v1752, %v1753
      %v1755 = vshll.u32 2131351028, %v1746
      %v1756 = vshrl.u32 2102212464, %v1747
      %v1757 = vor.u32 %v1755, %v1756
      %v1758 = vshll.u32 2102212464, %v1746
      %v1759 = vshrl.u32 920167782, %v1747
      %v1760 = vor.u32 %v1758, %v1759
      %v1761 = vshll.u32 920167782, %v1746
      %v1762 = vshrl.u32 1326507024, %v1747
      %v1763 = vor.u32 %v1761, %v1762
      %vm1764 = vcmp.lt.s32.totalorder %v1745, 1
      %vm1765 = vcmp.lt.s32.totalorder %v1745, 2
      %vm1766 = vcmp.lt.s32.totalorder %v1745, 3
      %vm1767 = vcmp.lt.s32.totalorder %v1745, 4
      %v1768 = vsel %vm1764, %v1748, %v1751
      %v1769 = vsel %vm1767, %v1757, 2102212464
      %v1770 = vsel %vm1766, %v1754, %v1769
      %v1771 = vsel %vm1765, %v1768, %v1770
      %v1772 = vsel %vm1764, %v1751, %v1754
      %v1773 = vsel %vm1767, %v1760, 920167782
      %v1774 = vsel %vm1766, %v1757, %v1773
      %v1775 = vsel %vm1765, %v1772, %v1774
      %v1776 = vsel %vm1764, %v1754, %v1757
      %v1777 = vsel %vm1767, %v1763, 1326507024
      %v1778 = vsel %vm1766, %v1760, %v1777
      %v1779 = vsel %vm1765, %v1776, %v1778
      %v1780 = vshll.u32 %v1740, 8
      %v1781 = vmul.u32.u64.compose %v1780, %v1779
      %v1782 = vextract.low.u32 %v1781
      %v1783 = vextract.high.u32 %v1781
      %v1784 = vmul.u32.u64.compose %v1780, %v1775
      %v1785 = vextract.low.u32 %v1784
      %v1786 = vextract.high.u32 %v1784
      %v1787 = vmul.u32 %v1780, %v1771
      %v1788 = vadd.s32 %v1783, %v1785
      %vm1789 = vc.u32 %v1783, %v1785
      %v1790 = vadd.s32 %v1786, 1
      %v1791 = vsel %vm1789, %v1790, %v1786
      %v1792 = vadd.s32 %v1787, %v1791
      %v1793 = vadd.s32 %v1792, 536870912
      %v1794 = vshrl.u32 %v1793, 30
      %v1795 = vshll.u32 %v1794, 30
      %v1796 = vsub.s32 %v1792, %v1795
      %vm1797 = vcmp.lt.s32.totalorder %v1796, 0
      %v1798 = vsub.s32 0, %v1796
      %v1799 = vsel %vm1797, %v1798, %v1796
      %v1800 = vclz %v1799
      %v1801 = vsub.s32 %v1800, 2
      %vm1802 = vcmp.gt.s32.totalorder 0, %v1801
      %v1803 = vsel %vm1802, 0, %v1801
      %v1804 = vsub.s32 32, %v1803
      %v1805 = vshll.u32 %v1796, %v1803
      %v1806 = vshrl.u32 %v1788, %v1804
      %v1807 = vor.u32 %v1805, %v1806
      %v1808 = vsub.s32 4294967266, %v1803
      %v1809 = vadd.s32 %v1808, 127
      %v1810 = vshll.u32 %v1809, 23
      %v1811 = vor.u32 4788187, %v1810
      %v1812 = vand.u32 2147483647, %v1811
      %v1814 = vcvt.s32.f32 %v1807
      %v1815 = vmul.f32 %v1814, %v1812
      %v1816 = vxor.u32 %v1815, 2147483648
      %v1817 = vsel %vm1734, %v1816, %v1815
      %v1818 = vsub.s32 4, %v1794
      %v1819 = vsel %vm1734, %v1818, %v1794
      %v1820 = vsel %vm1733, %v1002, %v1817
      %v1821 = vsel %vm1733, 0, %v1819
      %v1822 = vcosq.f32.pop %v1820
      %v1823 = vsinq.f32.pop %v1820
      %vm1824 = vweird.f32 %v1002
      %v1825 = vadd.s32 %v1821, 3
      %v1826 = vand.u32 %v1825, 3
      %vm1827 = vcmp.lt.s32.totalorder %v1826, 2
      %vm1828 = vcmp.eq.s32.totalorder %v1826, 0
      %v1829 = vxor.u32 %v1823, 2147483648
      %v1830 = vsel %vm1828, %v1822, %v1829
      %vm1831 = vcmp.eq.s32.totalorder %v1826, 2
      %v1832 = vxor.u32 %v1822, 2147483648
      %v1833 = vsel %vm1831, %v1832, %v1823
      %v1834 = vsel %vm1827, %v1830, %v1833
      %v1835 = vsel %vm1824, nan, %v1834
      %v1836 = vld [vmem:[%s3] sm:$0xff]
      %v1837 = vld [vmem:[%s3 + $0x8] sm:$0xff]
      %v1838 = vld [vmem:[%s3 + $0x10] sm:$0xff]
      %v1839 = vld [vmem:[%s3 + $0x18] sm:$0xff]
      %v1840 = vld [vmem:[%s4] sm:$0xff]
      %v1841 = vld [vmem:[%s4 + $0x8] sm:$0xff]
      %v1842 = vld [vmem:[%s4 + $0x10] sm:$0xff]
      %v1843 = vld [vmem:[%s4 + $0x18] sm:$0xff]
      %1845 = vset.pattern.permute.xlu0 0
      %1846 = vperm.xlu0 %1845, %v1840
      %v1847 = vpop.permute.xlu0 %1846
      %1850 = vset.pattern.permute.xlu0 0
      %1851 = vperm.xlu0 %1850, %v1841
      %v1852 = vpop.permute.xlu0 %1851
      %1855 = vset.pattern.permute.xlu0 0
      %1856 = vperm.xlu0 %1855, %v1842
      %v1857 = vpop.permute.xlu0 %1856
      %1860 = vset.pattern.permute.xlu0 0
      %1861 = vperm.xlu0 %1860, %v1843
      %v1862 = vpop.permute.xlu0 %1861
      %vm1864 = vcmask 261120
      %v1866 = vsel %vm1864, %v1836, 0
      %v1869 = vsel %vm1864, %v1837, 0
      %v1872 = vsel %vm1864, %v1838, 0
      %v1875 = vsel %vm1864, %v1839, 0
      %1877 = vmatprep.subr.mxu0 0.0
      %1878 = vmatpush1.msra.mxu0 0.0
      %1879 = vmatprep.subr.mxu0 0.0
      %1880 = vmatpush1.msra.mxu0 0.0
      %1881 = vmatprep.subr.mxu0 0.0
      %1882 = vmatpush1.msra.mxu0 0.0
      %1883 = vmatprep.subr.mxu0 0.0
      %1884 = vmatpush1.msra.mxu0 0.0
      %1885 = vmatprep.subr.mxu0 0.0
      %1886 = vmatpush1.msra.mxu0 0.0
      %1887 = vmatprep.subr.mxu0 0.0
      %1888 = vmatpush1.msra.mxu0 0.0
      %1889 = vmatprep.subr.mxu0 0.0
      %1890 = vmatpush1.msra.mxu0 0.0
      %1891 = vmatprep.subr.mxu0 0.0
      %1892 = vmatpush1.msra.mxu0 0.0
      %1893 = vmatprep.subr.mxu0 0.0
      %1894 = vmatpush1.msra.mxu0 0.0
      %1895 = vmatprep.subr.mxu0 0.0
      %1896 = vmatpush1.msra.mxu0 0.0
      %1897 = vmatprep.subr.mxu0 0.0
      %1898 = vmatpush1.msra.mxu0 0.0
      %1899 = vmatprep.subr.mxu0 0.0
      %1900 = vmatpush1.msra.mxu0 0.0
      %v1901 = vand.u32 %v1835, 4294901760
      %1902 = vmatprep.subr.mxu0 %v1901
      %v1903 = vand.u32 %v1731, 4294901760
      %1904 = vmatpush1.msra.mxu0 %v1903
      %v1905 = vand.u32 %v1627, 4294901760
      %1906 = vmatprep.subr.mxu0 %v1905
      %v1907 = vand.u32 %v1523, 4294901760
      %1908 = vmatpush1.msra.mxu0 %v1907
      %v1909 = vand.u32 %v1419, 4294901760
      %1910 = vmatprep.subr.mxu0 %v1909
      %v1911 = vand.u32 %v1315, 4294901760
      %1912 = vmatpush1.msra.mxu0 %v1911
      %v1913 = vand.u32 %v1211, 4294901760
      %1914 = vmatprep.subr.mxu0 %v1913
      %v1915 = vand.u32 %v1107, 4294901760
      %1916 = vmatpush1.msra.mxu0 %v1915
      %1917 = vmatprep.subr.mxu0 0.0
      %1918 = vmatpush2.msra.mxu0 0.0
      %1919 = vmatprep.subr.mxu0 0.0
      %1920 = vmatpush2.msra.mxu0 0.0
      %1921 = vmatprep.subr.mxu0 0.0
      %1922 = vmatpush2.msra.mxu0 0.0
      %1923 = vmatprep.subr.mxu0 0.0
      %1924 = vmatpush2.msra.mxu0 0.0
      %1925 = vmatprep.subr.mxu0 0.0
      %1926 = vmatpush2.msra.mxu0 0.0
      %1927 = vmatprep.subr.mxu0 0.0
      %1928 = vmatpush2.msra.mxu0 0.0
      %1929 = vmatprep.subr.mxu0 0.0
      %1930 = vmatpush2.msra.mxu0 0.0
      %1931 = vmatprep.subr.mxu0 0.0
      %1932 = vmatpush2.msra.mxu0 0.0
      %1933 = vmatprep.subr.mxu0 0.0
      %1934 = vmatpush2.msra.mxu0 0.0
      %1935 = vmatprep.subr.mxu0 0.0
      %1936 = vmatpush2.msra.mxu0 0.0
      %1937 = vmatprep.subr.mxu0 0.0
      %1938 = vmatpush2.msra.mxu0 0.0
      %1939 = vmatprep.subr.mxu0 0.0
      %1940 = vmatpush2.msra.mxu0 0.0
      %1941 = vmatprep.subr.mxu0 0.0
      %1942 = vmatpush2.msra.mxu0 0.0
      %1943 = vmatprep.subr.mxu0 0.0
      %1944 = vmatpush2.msra.mxu0 0.0
      %1945 = vmatprep.subr.mxu0 0.0
      %1946 = vmatpush2.msra.mxu0 0.0
      %1947 = vmatprep.subr.mxu0 0.0
      %1948 = vmatpush2.msra.mxu0 0.0
      %1949 = vmatprep.mubr.f32.mxu0 0.0
      %v1950 = vand.u32 %v1866, 4294901760
      %v1951 = vsub.f32 %v1866, %v1950
      %v1952 = vand.u32 %v1951, 4294901760
      %v1953 = vsub.f32 %v1951, %v1952
      %v1954 = vand.u32 %v1953, 4294901760
      %1955 = vmatmul.mubr.f32.gmra.mxu0 %v1954
      %v1956 = vpop.f32.mrf.mxu0
      %v1957 = vadd.f32 %v1847, %v1956
      %v1958 = vpop.f32.mrf.mxu0
      %v1959 = vadd.f32 %v1847, %v1958
      %1960 = vmatprep.mubr.f32.mxu0 0.0
      %v1961 = vand.u32 %v1869, 4294901760
      %v1962 = vsub.f32 %v1869, %v1961
      %v1963 = vand.u32 %v1962, 4294901760
      %v1964 = vsub.f32 %v1962, %v1963
      %v1965 = vand.u32 %v1964, 4294901760
      %1966 = vmatmul.mubr.f32.gmra.mxu0 %v1965
      %v1967 = vpop.f32.mrf.mxu0
      %v1968 = vadd.f32 %v1852, %v1967
      %v1969 = vpop.f32.mrf.mxu0
      %v1970 = vadd.f32 %v1852, %v1969
      %1971 = vmatprep.mubr.f32.mxu0 0.0
      %v1972 = vand.u32 %v1872, 4294901760
      %v1973 = vsub.f32 %v1872, %v1972
      %v1974 = vand.u32 %v1973, 4294901760
      %v1975 = vsub.f32 %v1973, %v1974
      %v1976 = vand.u32 %v1975, 4294901760
      %1977 = vmatmul.mubr.f32.gmra.mxu0 %v1976
      %v1978 = vpop.f32.mrf.mxu0
      %v1979 = vadd.f32 %v1857, %v1978
      %v1980 = vpop.f32.mrf.mxu0
      %v1981 = vadd.f32 %v1857, %v1980
      %1982 = vmatprep.mubr.f32.mxu0 0.0
      %v1983 = vand.u32 %v1875, 4294901760
      %v1984 = vsub.f32 %v1875, %v1983
      %v1985 = vand.u32 %v1984, 4294901760
      %v1986 = vsub.f32 %v1984, %v1985
      %v1987 = vand.u32 %v1986, 4294901760
      %1988 = vmatmul.mubr.f32.gmra.mxu0 %v1987
      %v1989 = vpop.f32.mrf.mxu0
      %v1990 = vadd.f32 %v1862, %v1989
      %v1991 = vpop.f32.mrf.mxu0
      %v1992 = vadd.f32 %v1862, %v1991
      %1993 = vdwg.mxu0
      %1994 = vmatprep.subr.mxu0 0.0
      %1995 = vmatpush1.msra.mxu0 0.0
      %1996 = vmatprep.subr.mxu0 0.0
      %1997 = vmatpush1.msra.mxu0 0.0
      %1998 = vmatprep.subr.mxu0 0.0
      %1999 = vmatpush1.msra.mxu0 0.0
      %2000 = vmatprep.subr.mxu0 0.0
      %2001 = vmatpush1.msra.mxu0 0.0
      %2002 = vmatprep.subr.mxu0 0.0
      %2003 = vmatpush1.msra.mxu0 0.0
      %2004 = vmatprep.subr.mxu0 0.0
      %2005 = vmatpush1.msra.mxu0 0.0
      %2006 = vmatprep.subr.mxu0 0.0
      %2007 = vmatpush1.msra.mxu0 0.0
      %2008 = vmatprep.subr.mxu0 0.0
      %2009 = vmatpush1.msra.mxu0 0.0
      %2010 = vmatprep.subr.mxu0 0.0
      %2011 = vmatpush1.msra.mxu0 0.0
      %2012 = vmatprep.subr.mxu0 0.0
      %2013 = vmatpush1.msra.mxu0 0.0
      %2014 = vmatprep.subr.mxu0 0.0
      %2015 = vmatpush1.msra.mxu0 0.0
      %2016 = vmatprep.subr.mxu0 0.0
      %2017 = vmatpush1.msra.mxu0 0.0
      %v2018 = vand.u32 %v1835, 4294901760
      %v2019 = vsub.f32 %v1835, %v2018
      %v2020 = vand.u32 %v2019, 4294901760
      %v2021 = vsub.f32 %v2019, %v2020
      %v2022 = vand.u32 %v2021, 4294901760
      %2023 = vmatprep.subr.mxu0 %v2022
      %v2024 = vand.u32 %v1731, 4294901760
      %v2025 = vsub.f32 %v1731, %v2024
      %v2026 = vand.u32 %v2025, 4294901760
      %v2027 = vsub.f32 %v2025, %v2026
      %v2028 = vand.u32 %v2027, 4294901760
      %2029 = vmatpush1.msra.mxu0 %v2028
      %v2030 = vand.u32 %v1627, 4294901760
      %v2031 = vsub.f32 %v1627, %v2030
      %v2032 = vand.u32 %v2031, 4294901760
      %v2033 = vsub.f32 %v2031, %v2032
      %v2034 = vand.u32 %v2033, 4294901760
      %2035 = vmatprep.subr.mxu0 %v2034
      %v2036 = vand.u32 %v1523, 4294901760
      %v2037 = vsub.f32 %v1523, %v2036
      %v2038 = vand.u32 %v2037, 4294901760
      %v2039 = vsub.f32 %v2037, %v2038
      %v2040 = vand.u32 %v2039, 4294901760
      %2041 = vmatpush1.msra.mxu0 %v2040
      %v2042 = vand.u32 %v1419, 4294901760
      %v2043 = vsub.f32 %v1419, %v2042
      %v2044 = vand.u32 %v2043, 4294901760
      %v2045 = vsub.f32 %v2043, %v2044
      %v2046 = vand.u32 %v2045, 4294901760
      %2047 = vmatprep.subr.mxu0 %v2046
      %v2048 = vand.u32 %v1315, 4294901760
      %v2049 = vsub.f32 %v1315, %v2048
      %v2050 = vand.u32 %v2049, 4294901760
      %v2051 = vsub.f32 %v2049, %v2050
      %v2052 = vand.u32 %v2051, 4294901760
      %2053 = vmatpush1.msra.mxu0 %v2052
      %v2054 = vand.u32 %v1211, 4294901760
      %v2055 = vsub.f32 %v1211, %v2054
      %v2056 = vand.u32 %v2055, 4294901760
      %v2057 = vsub.f32 %v2055, %v2056
      %v2058 = vand.u32 %v2057, 4294901760
      %2059 = vmatprep.subr.mxu0 %v2058
      %v2060 = vand.u32 %v1107, 4294901760
      %v2061 = vsub.f32 %v1107, %v2060
      %v2062 = vand.u32 %v2061, 4294901760
      %v2063 = vsub.f32 %v2061, %v2062
      %v2064 = vand.u32 %v2063, 4294901760
      %2065 = vmatpush1.msra.mxu0 %v2064
      %2066 = vmatprep.subr.mxu0 0.0
      %2067 = vmatpush2.msra.mxu0 0.0
      %2068 = vmatprep.subr.mxu0 0.0
      %2069 = vmatpush2.msra.mxu0 0.0
      %2070 = vmatprep.subr.mxu0 0.0
      %2071 = vmatpush2.msra.mxu0 0.0
      %2072 = vmatprep.subr.mxu0 0.0
      %2073 = vmatpush2.msra.mxu0 0.0
      %2074 = vmatprep.subr.mxu0 0.0
      %2075 = vmatpush2.msra.mxu0 0.0
      %2076 = vmatprep.subr.mxu0 0.0
      %2077 = vmatpush2.msra.mxu0 0.0
      %2078 = vmatprep.subr.mxu0 0.0
      %2079 = vmatpush2.msra.mxu0 0.0
      %2080 = vmatprep.subr.mxu0 0.0
      %2081 = vmatpush2.msra.mxu0 0.0
      %2082 = vmatprep.subr.mxu0 0.0
      %2083 = vmatpush2.msra.mxu0 0.0
      %2084 = vmatprep.subr.mxu0 0.0
      %2085 = vmatpush2.msra.mxu0 0.0
      %2086 = vmatprep.subr.mxu0 0.0
      %2087 = vmatpush2.msra.mxu0 0.0
      %2088 = vmatprep.subr.mxu0 0.0
      %2089 = vmatpush2.msra.mxu0 0.0
      %2090 = vmatprep.subr.mxu0 0.0
      %2091 = vmatpush2.msra.mxu0 0.0
      %2092 = vmatprep.subr.mxu0 0.0
      %2093 = vmatpush2.msra.mxu0 0.0
      %2094 = vmatprep.subr.mxu0 0.0
      %2095 = vmatpush2.msra.mxu0 0.0
      %2096 = vmatprep.subr.mxu0 0.0
      %2097 = vmatpush2.msra.mxu0 0.0
      %2098 = vmatprep.mubr.f32.mxu0 0.0
      %v2099 = vand.u32 %v1866, 4294901760
      %2100 = vmatmul.mubr.f32.gmra.mxu0 %v2099
      %v2101 = vpop.f32.mrf.mxu0
      %v2102 = vadd.f32 %v1957, %v2101
      %v2103 = vpop.f32.mrf.mxu0
      %v2104 = vadd.f32 %v1959, %v2103
      %2105 = vmatprep.mubr.f32.mxu0 0.0
      %v2106 = vand.u32 %v1869, 4294901760
      %2107 = vmatmul.mubr.f32.gmra.mxu0 %v2106
      %v2108 = vpop.f32.mrf.mxu0
      %v2109 = vadd.f32 %v1968, %v2108
      %v2110 = vpop.f32.mrf.mxu0
      %v2111 = vadd.f32 %v1970, %v2110
      %2112 = vmatprep.mubr.f32.mxu0 0.0
      %v2113 = vand.u32 %v1872, 4294901760
      %2114 = vmatmul.mubr.f32.gmra.mxu0 %v2113
      %v2115 = vpop.f32.mrf.mxu0
      %v2116 = vadd.f32 %v1979, %v2115
      %v2117 = vpop.f32.mrf.mxu0
      %v2118 = vadd.f32 %v1981, %v2117
      %2119 = vmatprep.mubr.f32.mxu0 0.0
      %v2120 = vand.u32 %v1875, 4294901760
      %2121 = vmatmul.mubr.f32.gmra.mxu0 %v2120
      %v2122 = vpop.f32.mrf.mxu0
      %v2123 = vadd.f32 %v1990, %v2122
      %v2124 = vpop.f32.mrf.mxu0
      %v2125 = vadd.f32 %v1992, %v2124
      %2126 = vdwg.mxu0
      %2127 = vmatprep.subr.mxu0 0.0
      %2128 = vmatpush1.msra.mxu0 0.0
      %2129 = vmatprep.subr.mxu0 0.0
      %2130 = vmatpush1.msra.mxu0 0.0
      %2131 = vmatprep.subr.mxu0 0.0
      %2132 = vmatpush1.msra.mxu0 0.0
      %2133 = vmatprep.subr.mxu0 0.0
      %2134 = vmatpush1.msra.mxu0 0.0
      %2135 = vmatprep.subr.mxu0 0.0
      %2136 = vmatpush1.msra.mxu0 0.0
      %2137 = vmatprep.subr.mxu0 0.0
      %2138 = vmatpush1.msra.mxu0 0.0
      %2139 = vmatprep.subr.mxu0 0.0
      %2140 = vmatpush1.msra.mxu0 0.0
      %2141 = vmatprep.subr.mxu0 0.0
      %2142 = vmatpush1.msra.mxu0 0.0
      %2143 = vmatprep.subr.mxu0 0.0
      %2144 = vmatpush1.msra.mxu0 0.0
      %2145 = vmatprep.subr.mxu0 0.0
      %2146 = vmatpush1.msra.mxu0 0.0
      %2147 = vmatprep.subr.mxu0 0.0
      %2148 = vmatpush1.msra.mxu0 0.0
      %2149 = vmatprep.subr.mxu0 0.0
      %2150 = vmatpush1.msra.mxu0 0.0
      %v2151 = vand.u32 %v1835, 4294901760
      %v2152 = vsub.f32 %v1835, %v2151
      %2153 = vmatprep.subr.mxu0 %v2152
      %v2154 = vand.u32 %v1731, 4294901760
      %v2155 = vsub.f32 %v1731, %v2154
      %2156 = vmatpush1.msra.mxu0 %v2155
      %v2157 = vand.u32 %v1627, 4294901760
      %v2158 = vsub.f32 %v1627, %v2157
      %2159 = vmatprep.subr.mxu0 %v2158
      %v2160 = vand.u32 %v1523, 4294901760
      %v2161 = vsub.f32 %v1523, %v2160
      %2162 = vmatpush1.msra.mxu0 %v2161
      %v2163 = vand.u32 %v1419, 4294901760
      %v2164 = vsub.f32 %v1419, %v2163
      %2165 = vmatprep.subr.mxu0 %v2164
      %v2166 = vand.u32 %v1315, 4294901760
      %v2167 = vsub.f32 %v1315, %v2166
      %2168 = vmatpush1.msra.mxu0 %v2167
      %v2169 = vand.u32 %v1211, 4294901760
      %v2170 = vsub.f32 %v1211, %v2169
      %2171 = vmatprep.subr.mxu0 %v2170
      %v2172 = vand.u32 %v1107, 4294901760
      %v2173 = vsub.f32 %v1107, %v2172
      %2174 = vmatpush1.msra.mxu0 %v2173
      %2175 = vmatprep.subr.mxu0 0.0
      %2176 = vmatpush2.msra.mxu0 0.0
      %2177 = vmatprep.subr.mxu0 0.0
      %2178 = vmatpush2.msra.mxu0 0.0
      %2179 = vmatprep.subr.mxu0 0.0
      %2180 = vmatpush2.msra.mxu0 0.0
      %2181 = vmatprep.subr.mxu0 0.0
      %2182 = vmatpush2.msra.mxu0 0.0
      %2183 = vmatprep.subr.mxu0 0.0
      %2184 = vmatpush2.msra.mxu0 0.0
      %2185 = vmatprep.subr.mxu0 0.0
      %2186 = vmatpush2.msra.mxu0 0.0
      %2187 = vmatprep.subr.mxu0 0.0
      %2188 = vmatpush2.msra.mxu0 0.0
      %2189 = vmatprep.subr.mxu0 0.0
      %2190 = vmatpush2.msra.mxu0 0.0
      %2191 = vmatprep.subr.mxu0 0.0
      %2192 = vmatpush2.msra.mxu0 0.0
      %2193 = vmatprep.subr.mxu0 0.0
      %2194 = vmatpush2.msra.mxu0 0.0
      %2195 = vmatprep.subr.mxu0 0.0
      %2196 = vmatpush2.msra.mxu0 0.0
      %2197 = vmatprep.subr.mxu0 0.0
      %2198 = vmatpush2.msra.mxu0 0.0
      %2199 = vmatprep.subr.mxu0 0.0
      %2200 = vmatpush2.msra.mxu0 0.0
      %2201 = vmatprep.subr.mxu0 0.0
      %2202 = vmatpush2.msra.mxu0 0.0
      %2203 = vmatprep.subr.mxu0 0.0
      %2204 = vmatpush2.msra.mxu0 0.0
      %2205 = vmatprep.subr.mxu0 0.0
      %2206 = vmatpush2.msra.mxu0 0.0
      %2207 = vmatprep.mubr.f32.mxu0 0.0
      %v2208 = vand.u32 %v1866, 4294901760
      %v2209 = vsub.f32 %v1866, %v2208
      %2210 = vmatmul.mubr.f32.gmra.mxu0 %v2209
      %v2211 = vpop.f32.mrf.mxu0
      %v2212 = vadd.f32 %v2102, %v2211
      %v2213 = vpop.f32.mrf.mxu0
      %v2214 = vadd.f32 %v2104, %v2213
      %2215 = vmatprep.mubr.f32.mxu0 0.0
      %v2216 = vand.u32 %v1869, 4294901760
      %v2217 = vsub.f32 %v1869, %v2216
      %2218 = vmatmul.mubr.f32.gmra.mxu0 %v2217
      %v2219 = vpop.f32.mrf.mxu0
      %v2220 = vadd.f32 %v2109, %v2219
      %v2221 = vpop.f32.mrf.mxu0
      %v2222 = vadd.f32 %v2111, %v2221
      %2223 = vmatprep.mubr.f32.mxu0 0.0
      %v2224 = vand.u32 %v1872, 4294901760
      %v2225 = vsub.f32 %v1872, %v2224
      %2226 = vmatmul.mubr.f32.gmra.mxu0 %v2225
      %v2227 = vpop.f32.mrf.mxu0
      %v2228 = vadd.f32 %v2116, %v2227
      %v2229 = vpop.f32.mrf.mxu0
      %v2230 = vadd.f32 %v2118, %v2229
      %2231 = vmatprep.mubr.f32.mxu0 0.0
      %v2232 = vand.u32 %v1875, 4294901760
      %v2233 = vsub.f32 %v1875, %v2232
      %2234 = vmatmul.mubr.f32.gmra.mxu0 %v2233
      %v2235 = vpop.f32.mrf.mxu0
      %v2236 = vadd.f32 %v2123, %v2235
      %v2237 = vpop.f32.mrf.mxu0
      %v2238 = vadd.f32 %v2125, %v2237
      %2239 = vdwg.mxu0
      %2240 = vmatprep.subr.mxu0 0.0
      %2241 = vmatpush1.msra.mxu0 0.0
      %2242 = vmatprep.subr.mxu0 0.0
      %2243 = vmatpush1.msra.mxu0 0.0
      %2244 = vmatprep.subr.mxu0 0.0
      %2245 = vmatpush1.msra.mxu0 0.0
      %2246 = vmatprep.subr.mxu0 0.0
      %2247 = vmatpush1.msra.mxu0 0.0
      %2248 = vmatprep.subr.mxu0 0.0
      %2249 = vmatpush1.msra.mxu0 0.0
      %2250 = vmatprep.subr.mxu0 0.0
      %2251 = vmatpush1.msra.mxu0 0.0
      %2252 = vmatprep.subr.mxu0 0.0
      %2253 = vmatpush1.msra.mxu0 0.0
      %2254 = vmatprep.subr.mxu0 0.0
      %2255 = vmatpush1.msra.mxu0 0.0
      %2256 = vmatprep.subr.mxu0 0.0
      %2257 = vmatpush1.msra.mxu0 0.0
      %2258 = vmatprep.subr.mxu0 0.0
      %2259 = vmatpush1.msra.mxu0 0.0
      %2260 = vmatprep.subr.mxu0 0.0
      %2261 = vmatpush1.msra.mxu0 0.0
      %2262 = vmatprep.subr.mxu0 0.0
      %2263 = vmatpush1.msra.mxu0 0.0
      %v2264 = vand.u32 %v1835, 4294901760
      %2265 = vmatprep.subr.mxu0 %v2264
      %v2266 = vand.u32 %v1731, 4294901760
      %2267 = vmatpush1.msra.mxu0 %v2266
      %v2268 = vand.u32 %v1627, 4294901760
      %2269 = vmatprep.subr.mxu0 %v2268
      %v2270 = vand.u32 %v1523, 4294901760
      %2271 = vmatpush1.msra.mxu0 %v2270
      %v2272 = vand.u32 %v1419, 4294901760
      %2273 = vmatprep.subr.mxu0 %v2272
      %v2274 = vand.u32 %v1315, 4294901760
      %2275 = vmatpush1.msra.mxu0 %v2274
      %v2276 = vand.u32 %v1211, 4294901760
      %2277 = vmatprep.subr.mxu0 %v2276
      %v2278 = vand.u32 %v1107, 4294901760
      %2279 = vmatpush1.msra.mxu0 %v2278
      %2280 = vmatprep.subr.mxu0 0.0
      %2281 = vmatpush2.msra.mxu0 0.0
      %2282 = vmatprep.subr.mxu0 0.0
      %2283 = vmatpush2.msra.mxu0 0.0
      %2284 = vmatprep.subr.mxu0 0.0
      %2285 = vmatpush2.msra.mxu0 0.0
      %2286 = vmatprep.subr.mxu0 0.0
      %2287 = vmatpush2.msra.mxu0 0.0
      %2288 = vmatprep.subr.mxu0 0.0
      %2289 = vmatpush2.msra.mxu0 0.0
      %2290 = vmatprep.subr.mxu0 0.0
      %2291 = vmatpush2.msra.mxu0 0.0
      %2292 = vmatprep.subr.mxu0 0.0
      %2293 = vmatpush2.msra.mxu0 0.0
      %2294 = vmatprep.subr.mxu0 0.0
      %2295 = vmatpush2.msra.mxu0 0.0
      %2296 = vmatprep.subr.mxu0 0.0
      %2297 = vmatpush2.msra.mxu0 0.0
      %2298 = vmatprep.subr.mxu0 0.0
      %2299 = vmatpush2.msra.mxu0 0.0
      %2300 = vmatprep.subr.mxu0 0.0
      %2301 = vmatpush2.msra.mxu0 0.0
      %2302 = vmatprep.subr.mxu0 0.0
      %2303 = vmatpush2.msra.mxu0 0.0
      %2304 = vmatprep.subr.mxu0 0.0
      %2305 = vmatpush2.msra.mxu0 0.0
      %2306 = vmatprep.subr.mxu0 0.0
      %2307 = vmatpush2.msra.mxu0 0.0
      %2308 = vmatprep.subr.mxu0 0.0
      %2309 = vmatpush2.msra.mxu0 0.0
      %2310 = vmatprep.subr.mxu0 0.0
      %2311 = vmatpush2.msra.mxu0 0.0
      %2312 = vmatprep.mubr.f32.mxu0 0.0
      %v2313 = vand.u32 %v1866, 4294901760
      %v2314 = vsub.f32 %v1866, %v2313
      %v2315 = vand.u32 %v2314, 4294901760
      %2316 = vmatmul.mubr.f32.gmra.mxu0 %v2315
      %v2317 = vpop.f32.mrf.mxu0
      %v2318 = vadd.f32 %v2212, %v2317
      %v2319 = vpop.f32.mrf.mxu0
      %v2320 = vadd.f32 %v2214, %v2319
      %2321 = vmatprep.mubr.f32.mxu0 0.0
      %v2322 = vand.u32 %v1869, 4294901760
      %v2323 = vsub.f32 %v1869, %v2322
      %v2324 = vand.u32 %v2323, 4294901760
      %2325 = vmatmul.mubr.f32.gmra.mxu0 %v2324
      %v2326 = vpop.f32.mrf.mxu0
      %v2327 = vadd.f32 %v2220, %v2326
      %v2328 = vpop.f32.mrf.mxu0
      %v2329 = vadd.f32 %v2222, %v2328
      %2330 = vmatprep.mubr.f32.mxu0 0.0
      %v2331 = vand.u32 %v1872, 4294901760
      %v2332 = vsub.f32 %v1872, %v2331
      %v2333 = vand.u32 %v2332, 4294901760
      %2334 = vmatmul.mubr.f32.gmra.mxu0 %v2333
      %v2335 = vpop.f32.mrf.mxu0
      %v2336 = vadd.f32 %v2228, %v2335
      %v2337 = vpop.f32.mrf.mxu0
      %v2338 = vadd.f32 %v2230, %v2337
      %2339 = vmatprep.mubr.f32.mxu0 0.0
      %v2340 = vand.u32 %v1875, 4294901760
      %v2341 = vsub.f32 %v1875, %v2340
      %v2342 = vand.u32 %v2341, 4294901760
      %2343 = vmatmul.mubr.f32.gmra.mxu0 %v2342
      %v2344 = vpop.f32.mrf.mxu0
      %v2345 = vadd.f32 %v2236, %v2344
      %v2346 = vpop.f32.mrf.mxu0
      %v2347 = vadd.f32 %v2238, %v2346
      %2348 = vdwg.mxu0
      %2349 = vmatprep.subr.mxu0 0.0
      %2350 = vmatpush1.msra.mxu0 0.0
      %2351 = vmatprep.subr.mxu0 0.0
      %2352 = vmatpush1.msra.mxu0 0.0
      %2353 = vmatprep.subr.mxu0 0.0
      %2354 = vmatpush1.msra.mxu0 0.0
      %2355 = vmatprep.subr.mxu0 0.0
      %2356 = vmatpush1.msra.mxu0 0.0
      %2357 = vmatprep.subr.mxu0 0.0
      %2358 = vmatpush1.msra.mxu0 0.0
      %2359 = vmatprep.subr.mxu0 0.0
      %2360 = vmatpush1.msra.mxu0 0.0
      %2361 = vmatprep.subr.mxu0 0.0
      %2362 = vmatpush1.msra.mxu0 0.0
      %2363 = vmatprep.subr.mxu0 0.0
      %2364 = vmatpush1.msra.mxu0 0.0
      %2365 = vmatprep.subr.mxu0 0.0
      %2366 = vmatpush1.msra.mxu0 0.0
      %2367 = vmatprep.subr.mxu0 0.0
      %2368 = vmatpush1.msra.mxu0 0.0
      %2369 = vmatprep.subr.mxu0 0.0
      %2370 = vmatpush1.msra.mxu0 0.0
      %2371 = vmatprep.subr.mxu0 0.0
      %2372 = vmatpush1.msra.mxu0 0.0
      %v2373 = vand.u32 %v1835, 4294901760
      %v2374 = vsub.f32 %v1835, %v2373
      %v2375 = vand.u32 %v2374, 4294901760
      %2376 = vmatprep.subr.mxu0 %v2375
      %v2377 = vand.u32 %v1731, 4294901760
      %v2378 = vsub.f32 %v1731, %v2377
      %v2379 = vand.u32 %v2378, 4294901760
      %2380 = vmatpush1.msra.mxu0 %v2379
      %v2381 = vand.u32 %v1627, 4294901760
      %v2382 = vsub.f32 %v1627, %v2381
      %v2383 = vand.u32 %v2382, 4294901760
      %2384 = vmatprep.subr.mxu0 %v2383
      %v2385 = vand.u32 %v1523, 4294901760
      %v2386 = vsub.f32 %v1523, %v2385
      %v2387 = vand.u32 %v2386, 4294901760
      %2388 = vmatpush1.msra.mxu0 %v2387
      %v2389 = vand.u32 %v1419, 4294901760
      %v2390 = vsub.f32 %v1419, %v2389
      %v2391 = vand.u32 %v2390, 4294901760
      %2392 = vmatprep.subr.mxu0 %v2391
      %v2393 = vand.u32 %v1315, 4294901760
      %v2394 = vsub.f32 %v1315, %v2393
      %v2395 = vand.u32 %v2394, 4294901760
      %2396 = vmatpush1.msra.mxu0 %v2395
      %v2397 = vand.u32 %v1211, 4294901760
      %v2398 = vsub.f32 %v1211, %v2397
      %v2399 = vand.u32 %v2398, 4294901760
      %2400 = vmatprep.subr.mxu0 %v2399
      %v2401 = vand.u32 %v1107, 4294901760
      %v2402 = vsub.f32 %v1107, %v2401
      %v2403 = vand.u32 %v2402, 4294901760
      %2404 = vmatpush1.msra.mxu0 %v2403
      %2405 = vmatprep.subr.mxu0 0.0
      %2406 = vmatpush2.msra.mxu0 0.0
      %2407 = vmatprep.subr.mxu0 0.0
      %2408 = vmatpush2.msra.mxu0 0.0
      %2409 = vmatprep.subr.mxu0 0.0
      %2410 = vmatpush2.msra.mxu0 0.0
      %2411 = vmatprep.subr.mxu0 0.0
      %2412 = vmatpush2.msra.mxu0 0.0
      %2413 = vmatprep.subr.mxu0 0.0
      %2414 = vmatpush2.msra.mxu0 0.0
      %2415 = vmatprep.subr.mxu0 0.0
      %2416 = vmatpush2.msra.mxu0 0.0
      %2417 = vmatprep.subr.mxu0 0.0
      %2418 = vmatpush2.msra.mxu0 0.0
      %2419 = vmatprep.subr.mxu0 0.0
      %2420 = vmatpush2.msra.mxu0 0.0
      %2421 = vmatprep.subr.mxu0 0.0
      %2422 = vmatpush2.msra.mxu0 0.0
      %2423 = vmatprep.subr.mxu0 0.0
      %2424 = vmatpush2.msra.mxu0 0.0
      %2425 = vmatprep.subr.mxu0 0.0
      %2426 = vmatpush2.msra.mxu0 0.0
      %2427 = vmatprep.subr.mxu0 0.0
      %2428 = vmatpush2.msra.mxu0 0.0
      %2429 = vmatprep.subr.mxu0 0.0
      %2430 = vmatpush2.msra.mxu0 0.0
      %2431 = vmatprep.subr.mxu0 0.0
      %2432 = vmatpush2.msra.mxu0 0.0
      %2433 = vmatprep.subr.mxu0 0.0
      %2434 = vmatpush2.msra.mxu0 0.0
      %2435 = vmatprep.subr.mxu0 0.0
      %2436 = vmatpush2.msra.mxu0 0.0
      %2437 = vmatprep.mubr.f32.mxu0 0.0
      %v2438 = vand.u32 %v1866, 4294901760
      %2439 = vmatmul.mubr.f32.gmra.mxu0 %v2438
      %v2440 = vpop.f32.mrf.mxu0
      %v2441 = vadd.f32 %v2318, %v2440
      %v2442 = vpop.f32.mrf.mxu0
      %v2443 = vadd.f32 %v2320, %v2442
      %2444 = vmatprep.mubr.f32.mxu0 0.0
      %v2445 = vand.u32 %v1869, 4294901760
      %2446 = vmatmul.mubr.f32.gmra.mxu0 %v2445
      %v2447 = vpop.f32.mrf.mxu0
      %v2448 = vadd.f32 %v2327, %v2447
      %v2449 = vpop.f32.mrf.mxu0
      %v2450 = vadd.f32 %v2329, %v2449
      %2451 = vmatprep.mubr.f32.mxu0 0.0
      %v2452 = vand.u32 %v1872, 4294901760
      %2453 = vmatmul.mubr.f32.gmra.mxu0 %v2452
      %v2454 = vpop.f32.mrf.mxu0
      %v2455 = vadd.f32 %v2336, %v2454
      %v2456 = vpop.f32.mrf.mxu0
      %v2457 = vadd.f32 %v2338, %v2456
      %2458 = vmatprep.mubr.f32.mxu0 0.0
      %v2459 = vand.u32 %v1875, 4294901760
      %2460 = vmatmul.mubr.f32.gmra.mxu0 %v2459
      %v2461 = vpop.f32.mrf.mxu0
      %v2462 = vadd.f32 %v2345, %v2461
      %v2463 = vpop.f32.mrf.mxu0
      %v2464 = vadd.f32 %v2347, %v2463
      %2465 = vdwg.mxu0
      %2466 = vmatprep.subr.mxu0 0.0
      %2467 = vmatpush1.msra.mxu0 0.0
      %2468 = vmatprep.subr.mxu0 0.0
      %2469 = vmatpush1.msra.mxu0 0.0
      %2470 = vmatprep.subr.mxu0 0.0
      %2471 = vmatpush1.msra.mxu0 0.0
      %2472 = vmatprep.subr.mxu0 0.0
      %2473 = vmatpush1.msra.mxu0 0.0
      %2474 = vmatprep.subr.mxu0 0.0
      %2475 = vmatpush1.msra.mxu0 0.0
      %2476 = vmatprep.subr.mxu0 0.0
      %2477 = vmatpush1.msra.mxu0 0.0
      %2478 = vmatprep.subr.mxu0 0.0
      %2479 = vmatpush1.msra.mxu0 0.0
      %2480 = vmatprep.subr.mxu0 0.0
      %2481 = vmatpush1.msra.mxu0 0.0
      %2482 = vmatprep.subr.mxu0 0.0
      %2483 = vmatpush1.msra.mxu0 0.0
      %2484 = vmatprep.subr.mxu0 0.0
      %2485 = vmatpush1.msra.mxu0 0.0
      %2486 = vmatprep.subr.mxu0 0.0
      %2487 = vmatpush1.msra.mxu0 0.0
      %2488 = vmatprep.subr.mxu0 0.0
      %2489 = vmatpush1.msra.mxu0 0.0
      %v2490 = vand.u32 %v1835, 4294901760
      %2491 = vmatprep.subr.mxu0 %v2490
      %v2492 = vand.u32 %v1731, 4294901760
      %2493 = vmatpush1.msra.mxu0 %v2492
      %v2494 = vand.u32 %v1627, 4294901760
      %2495 = vmatprep.subr.mxu0 %v2494
      %v2496 = vand.u32 %v1523, 4294901760
      %2497 = vmatpush1.msra.mxu0 %v2496
      %v2498 = vand.u32 %v1419, 4294901760
      %2499 = vmatprep.subr.mxu0 %v2498
      %v2500 = vand.u32 %v1315, 4294901760
      %2501 = vmatpush1.msra.mxu0 %v2500
      %v2502 = vand.u32 %v1211, 4294901760
      %2503 = vmatprep.subr.mxu0 %v2502
      %v2504 = vand.u32 %v1107, 4294901760
      %2505 = vmatpush1.msra.mxu0 %v2504
      %2506 = vmatprep.subr.mxu0 0.0
      %2507 = vmatpush2.msra.mxu0 0.0
      %2508 = vmatprep.subr.mxu0 0.0
      %2509 = vmatpush2.msra.mxu0 0.0
      %2510 = vmatprep.subr.mxu0 0.0
      %2511 = vmatpush2.msra.mxu0 0.0
      %2512 = vmatprep.subr.mxu0 0.0
      %2513 = vmatpush2.msra.mxu0 0.0
      %2514 = vmatprep.subr.mxu0 0.0
      %2515 = vmatpush2.msra.mxu0 0.0
      %2516 = vmatprep.subr.mxu0 0.0
      %2517 = vmatpush2.msra.mxu0 0.0
      %2518 = vmatprep.subr.mxu0 0.0
      %2519 = vmatpush2.msra.mxu0 0.0
      %2520 = vmatprep.subr.mxu0 0.0
      %2521 = vmatpush2.msra.mxu0 0.0
      %2522 = vmatprep.subr.mxu0 0.0
      %2523 = vmatpush2.msra.mxu0 0.0
      %2524 = vmatprep.subr.mxu0 0.0
      %2525 = vmatpush2.msra.mxu0 0.0
      %2526 = vmatprep.subr.mxu0 0.0
      %2527 = vmatpush2.msra.mxu0 0.0
      %2528 = vmatprep.subr.mxu0 0.0
      %2529 = vmatpush2.msra.mxu0 0.0
      %2530 = vmatprep.subr.mxu0 0.0
      %2531 = vmatpush2.msra.mxu0 0.0
      %2532 = vmatprep.subr.mxu0 0.0
      %2533 = vmatpush2.msra.mxu0 0.0
      %2534 = vmatprep.subr.mxu0 0.0
      %2535 = vmatpush2.msra.mxu0 0.0
      %2536 = vmatprep.subr.mxu0 0.0
      %2537 = vmatpush2.msra.mxu0 0.0
      %2538 = vmatprep.mubr.f32.mxu0 0.0
      %v2539 = vand.u32 %v1866, 4294901760
      %2540 = vmatmul.mubr.f32.gmra.mxu0 %v2539
      %v2541 = vpop.f32.mrf.mxu0
      %v2542 = vadd.f32 %v2441, %v2541
      %v2543 = vpop.f32.mrf.mxu0
      %v2544 = vadd.f32 %v2443, %v2543
      %2545 = vmatprep.mubr.f32.mxu0 0.0
      %v2546 = vand.u32 %v1869, 4294901760
      %2547 = vmatmul.mubr.f32.gmra.mxu0 %v2546
      %v2548 = vpop.f32.mrf.mxu0
      %v2549 = vadd.f32 %v2448, %v2548
      %v2550 = vpop.f32.mrf.mxu0
      %v2551 = vadd.f32 %v2450, %v2550
      %2552 = vmatprep.mubr.f32.mxu0 0.0
      %v2553 = vand.u32 %v1872, 4294901760
      %2554 = vmatmul.mubr.f32.gmra.mxu0 %v2553
      %v2555 = vpop.f32.mrf.mxu0
      %v2556 = vadd.f32 %v2455, %v2555
      %v2557 = vpop.f32.mrf.mxu0
      %v2558 = vadd.f32 %v2457, %v2557
      %2559 = vmatprep.mubr.f32.mxu0 0.0
      %v2560 = vand.u32 %v1875, 4294901760
      %2561 = vmatmul.mubr.f32.gmra.mxu0 %v2560
      %v2562 = vpop.f32.mrf.mxu0
      %v2563 = vadd.f32 %v2462, %v2562
      %v2564 = vpop.f32.mrf.mxu0
      %v2565 = vadd.f32 %v2464, %v2564
      %2566 = vdwg.mxu0
      %v2567 = vand.u32 2147483647, %v2542
      %vm2568 = vcmp.le.f32.partialorder %v2567, 0.7853982
      %vm2569 = vcmp.lt.s32.totalorder %v2542, 0
      %v2570 = vand.u32 %v2542, 2139095040
      %v2571 = vshrl.u32 %v2570, 23
      %v2572 = vsub.s32 %v2571, 127
      %v2573 = vand.u32 2147483647, %v2542
      %v2574 = vand.u32 %v2573, 8388607
      %v2575 = vor.u32 %v2574, 8388608
      %v2576 = vsub.s32 0, %v2575
      %v2577 = vadd.s32 %v2572, 1
      %vm2578 = vcmp.gt.s32.totalorder %v2577, 0
      %v2579 = vsel %vm2578, %v2577, 0
      %v2580 = vshrl.u32 %v2579, 5
      %v2581 = vand.u32 %v2579, 31
      %v2582 = vsub.s32 32, %v2581
      %v2583 = vshrl.u32 683565275, %v2582
      %v2584 = vshll.u32 683565275, %v2581
      %v2585 = vshrl.u32 2475754826, %v2582
      %v2586 = vor.u32 %v2584, %v2585
      %v2587 = vshll.u32 2475754826, %v2581
      %v2588 = vshrl.u32 2131351028, %v2582
      %v2589 = vor.u32 %v2587, %v2588
      %v2590 = vshll.u32 2131351028, %v2581
      %v2591 = vshrl.u32 2102212464, %v2582
      %v2592 = vor.u32 %v2590, %v2591
      %v2593 = vshll.u32 2102212464, %v2581
      %v2594 = vshrl.u32 920167782, %v2582
      %v2595 = vor.u32 %v2593, %v2594
      %v2596 = vshll.u32 920167782, %v2581
      %v2597 = vshrl.u32 1326507024, %v2582
      %v2598 = vor.u32 %v2596, %v2597
      %vm2599 = vcmp.lt.s32.totalorder %v2580, 1
      %vm2600 = vcmp.lt.s32.totalorder %v2580, 2
      %vm2601 = vcmp.lt.s32.totalorder %v2580, 3
      %vm2602 = vcmp.lt.s32.totalorder %v2580, 4
      %v2603 = vsel %vm2599, %v2583, %v2586
      %v2604 = vsel %vm2602, %v2592, 2102212464
      %v2605 = vsel %vm2601, %v2589, %v2604
      %v2606 = vsel %vm2600, %v2603, %v2605
      %v2607 = vsel %vm2599, %v2586, %v2589
      %v2608 = vsel %vm2602, %v2595, 920167782
      %v2609 = vsel %vm2601, %v2592, %v2608
      %v2610 = vsel %vm2600, %v2607, %v2609
      %v2611 = vsel %vm2599, %v2589, %v2592
      %v2612 = vsel %vm2602, %v2598, 1326507024
      %v2613 = vsel %vm2601, %v2595, %v2612
      %v2614 = vsel %vm2600, %v2611, %v2613
      %v2615 = vshll.u32 %v2575, 8
      %v2616 = vmul.u32.u64.compose %v2615, %v2614
      %v2617 = vextract.low.u32 %v2616
      %v2618 = vextract.high.u32 %v2616
      %v2619 = vmul.u32.u64.compose %v2615, %v2610
      %v2620 = vextract.low.u32 %v2619
      %v2621 = vextract.high.u32 %v2619
      %v2622 = vmul.u32 %v2615, %v2606
      %v2623 = vadd.s32 %v2618, %v2620
      %vm2624 = vc.u32 %v2618, %v2620
      %v2625 = vadd.s32 %v2621, 1
      %v2626 = vsel %vm2624, %v2625, %v2621
      %v2627 = vadd.s32 %v2622, %v2626
      %v2628 = vadd.s32 %v2627, 536870912
      %v2629 = vshrl.u32 %v2628, 30
      %v2630 = vshll.u32 %v2629, 30
      %v2631 = vsub.s32 %v2627, %v2630
      %vm2632 = vcmp.lt.s32.totalorder %v2631, 0
      %v2633 = vsub.s32 0, %v2631
      %v2634 = vsel %vm2632, %v2633, %v2631
      %v2635 = vclz %v2634
      %v2636 = vsub.s32 %v2635, 2
      %vm2637 = vcmp.gt.s32.totalorder 0, %v2636
      %v2638 = vsel %vm2637, 0, %v2636
      %v2639 = vsub.s32 32, %v2638
      %v2640 = vshll.u32 %v2631, %v2638
      %v2641 = vshrl.u32 %v2623, %v2639
      %v2642 = vor.u32 %v2640, %v2641
      %v2643 = vsub.s32 4294967266, %v2638
      %v2644 = vadd.s32 %v2643, 127
      %v2645 = vshll.u32 %v2644, 23
      %v2646 = vor.u32 4788187, %v2645
      %v2647 = vand.u32 2147483647, %v2646
      %v2649 = vcvt.s32.f32 %v2642
      %v2650 = vmul.f32 %v2649, %v2647
      %v2651 = vxor.u32 %v2650, 2147483648
      %v2652 = vsel %vm2569, %v2651, %v2650
      %v2653 = vsub.s32 4, %v2629
      %v2654 = vsel %vm2569, %v2653, %v2629
      %v2655 = vsel %vm2568, %v2542, %v2652
      %v2656 = vsel %vm2568, 0, %v2654
      %v2657 = vcosq.f32.pop %v2655
      %v2658 = vsinq.f32.pop %v2655
      %vm2659 = vweird.f32 %v2542
      %v2660 = vadd.s32 %v2656, 3
      %v2661 = vand.u32 %v2660, 3
      %vm2662 = vcmp.lt.s32.totalorder %v2661, 2
      %vm2663 = vcmp.eq.s32.totalorder %v2661, 0
      %v2664 = vxor.u32 %v2658, 2147483648
      %v2665 = vsel %vm2663, %v2657, %v2664
      %vm2666 = vcmp.eq.s32.totalorder %v2661, 2
      %v2667 = vxor.u32 %v2657, 2147483648
      %v2668 = vsel %vm2666, %v2667, %v2658
      %v2669 = vsel %vm2662, %v2665, %v2668
      %v2670 = vsel %vm2659, nan, %v2669
      %v2671 = vand.u32 2147483647, %v2544
      %vm2672 = vcmp.le.f32.partialorder %v2671, 0.7853982
      %vm2673 = vcmp.lt.s32.totalorder %v2544, 0
      %v2674 = vand.u32 %v2544, 2139095040
      %v2675 = vshrl.u32 %v2674, 23
      %v2676 = vsub.s32 %v2675, 127
      %v2677 = vand.u32 2147483647, %v2544
      %v2678 = vand.u32 %v2677, 8388607
      %v2679 = vor.u32 %v2678, 8388608
      %v2680 = vsub.s32 0, %v2679
      %v2681 = vadd.s32 %v2676, 1
      %vm2682 = vcmp.gt.s32.totalorder %v2681, 0
      %v2683 = vsel %vm2682, %v2681, 0
      %v2684 = vshrl.u32 %v2683, 5
      %v2685 = vand.u32 %v2683, 31
      %v2686 = vsub.s32 32, %v2685
      %v2687 = vshrl.u32 683565275, %v2686
      %v2688 = vshll.u32 683565275, %v2685
      %v2689 = vshrl.u32 2475754826, %v2686
      %v2690 = vor.u32 %v2688, %v2689
      %v2691 = vshll.u32 2475754826, %v2685
      %v2692 = vshrl.u32 2131351028, %v2686
      %v2693 = vor.u32 %v2691, %v2692
      %v2694 = vshll.u32 2131351028, %v2685
      %v2695 = vshrl.u32 2102212464, %v2686
      %v2696 = vor.u32 %v2694, %v2695
      %v2697 = vshll.u32 2102212464, %v2685
      %v2698 = vshrl.u32 920167782, %v2686
      %v2699 = vor.u32 %v2697, %v2698
      %v2700 = vshll.u32 920167782, %v2685
      %v2701 = vshrl.u32 1326507024, %v2686
      %v2702 = vor.u32 %v2700, %v2701
      %vm2703 = vcmp.lt.s32.totalorder %v2684, 1
      %vm2704 = vcmp.lt.s32.totalorder %v2684, 2
      %vm2705 = vcmp.lt.s32.totalorder %v2684, 3
      %vm2706 = vcmp.lt.s32.totalorder %v2684, 4
      %v2707 = vsel %vm2703, %v2687, %v2690
      %v2708 = vsel %vm2706, %v2696, 2102212464
      %v2709 = vsel %vm2705, %v2693, %v2708
      %v2710 = vsel %vm2704, %v2707, %v2709
      %v2711 = vsel %vm2703, %v2690, %v2693
      %v2712 = vsel %vm2706, %v2699, 920167782
      %v2713 = vsel %vm2705, %v2696, %v2712
      %v2714 = vsel %vm2704, %v2711, %v2713
      %v2715 = vsel %vm2703, %v2693, %v2696
      %v2716 = vsel %vm2706, %v2702, 1326507024
      %v2717 = vsel %vm2705, %v2699, %v2716
      %v2718 = vsel %vm2704, %v2715, %v2717
      %v2719 = vshll.u32 %v2679, 8
      %v2720 = vmul.u32.u64.compose %v2719, %v2718
      %v2721 = vextract.low.u32 %v2720
      %v2722 = vextract.high.u32 %v2720
      %v2723 = vmul.u32.u64.compose %v2719, %v2714
      %v2724 = vextract.low.u32 %v2723
      %v2725 = vextract.high.u32 %v2723
      %v2726 = vmul.u32 %v2719, %v2710
      %v2727 = vadd.s32 %v2722, %v2724
      %vm2728 = vc.u32 %v2722, %v2724
      %v2729 = vadd.s32 %v2725, 1
      %v2730 = vsel %vm2728, %v2729, %v2725
      %v2731 = vadd.s32 %v2726, %v2730
      %v2732 = vadd.s32 %v2731, 536870912
      %v2733 = vshrl.u32 %v2732, 30
      %v2734 = vshll.u32 %v2733, 30
      %v2735 = vsub.s32 %v2731, %v2734
      %vm2736 = vcmp.lt.s32.totalorder %v2735, 0
      %v2737 = vsub.s32 0, %v2735
      %v2738 = vsel %vm2736, %v2737, %v2735
      %v2739 = vclz %v2738
      %v2740 = vsub.s32 %v2739, 2
      %vm2741 = vcmp.gt.s32.totalorder 0, %v2740
      %v2742 = vsel %vm2741, 0, %v2740
      %v2743 = vsub.s32 32, %v2742
      %v2744 = vshll.u32 %v2735, %v2742
      %v2745 = vshrl.u32 %v2727, %v2743
      %v2746 = vor.u32 %v2744, %v2745
      %v2747 = vsub.s32 4294967266, %v2742
      %v2748 = vadd.s32 %v2747, 127
      %v2749 = vshll.u32 %v2748, 23
      %v2750 = vor.u32 4788187, %v2749
      %v2751 = vand.u32 2147483647, %v2750
      %v2753 = vcvt.s32.f32 %v2746
      %v2754 = vmul.f32 %v2753, %v2751
      %v2755 = vxor.u32 %v2754, 2147483648
      %v2756 = vsel %vm2673, %v2755, %v2754
      %v2757 = vsub.s32 4, %v2733
      %v2758 = vsel %vm2673, %v2757, %v2733
      %v2759 = vsel %vm2672, %v2544, %v2756
      %v2760 = vsel %vm2672, 0, %v2758
      %v2761 = vcosq.f32.pop %v2759
      %v2762 = vsinq.f32.pop %v2759
      %vm2763 = vweird.f32 %v2544
      %v2764 = vadd.s32 %v2760, 3
      %v2765 = vand.u32 %v2764, 3
      %vm2766 = vcmp.lt.s32.totalorder %v2765, 2
      %vm2767 = vcmp.eq.s32.totalorder %v2765, 0
      %v2768 = vxor.u32 %v2762, 2147483648
      %v2769 = vsel %vm2767, %v2761, %v2768
      %vm2770 = vcmp.eq.s32.totalorder %v2765, 2
      %v2771 = vxor.u32 %v2761, 2147483648
      %v2772 = vsel %vm2770, %v2771, %v2762
      %v2773 = vsel %vm2766, %v2769, %v2772
      %v2774 = vsel %vm2763, nan, %v2773
      %v2775 = vand.u32 2147483647, %v2549
      %vm2776 = vcmp.le.f32.partialorder %v2775, 0.7853982
      %vm2777 = vcmp.lt.s32.totalorder %v2549, 0
      %v2778 = vand.u32 %v2549, 2139095040
      %v2779 = vshrl.u32 %v2778, 23
      %v2780 = vsub.s32 %v2779, 127
      %v2781 = vand.u32 2147483647, %v2549
      %v2782 = vand.u32 %v2781, 8388607
      %v2783 = vor.u32 %v2782, 8388608
      %v2784 = vsub.s32 0, %v2783
      %v2785 = vadd.s32 %v2780, 1
      %vm2786 = vcmp.gt.s32.totalorder %v2785, 0
      %v2787 = vsel %vm2786, %v2785, 0
      %v2788 = vshrl.u32 %v2787, 5
      %v2789 = vand.u32 %v2787, 31
      %v2790 = vsub.s32 32, %v2789
      %v2791 = vshrl.u32 683565275, %v2790
      %v2792 = vshll.u32 683565275, %v2789
      %v2793 = vshrl.u32 2475754826, %v2790
      %v2794 = vor.u32 %v2792, %v2793
      %v2795 = vshll.u32 2475754826, %v2789
      %v2796 = vshrl.u32 2131351028, %v2790
      %v2797 = vor.u32 %v2795, %v2796
      %v2798 = vshll.u32 2131351028, %v2789
      %v2799 = vshrl.u32 2102212464, %v2790
      %v2800 = vor.u32 %v2798, %v2799
      %v2801 = vshll.u32 2102212464, %v2789
      %v2802 = vshrl.u32 920167782, %v2790
      %v2803 = vor.u32 %v2801, %v2802
      %v2804 = vshll.u32 920167782, %v2789
      %v2805 = vshrl.u32 1326507024, %v2790
      %v2806 = vor.u32 %v2804, %v2805
      %vm2807 = vcmp.lt.s32.totalorder %v2788, 1
      %vm2808 = vcmp.lt.s32.totalorder %v2788, 2
      %vm2809 = vcmp.lt.s32.totalorder %v2788, 3
      %vm2810 = vcmp.lt.s32.totalorder %v2788, 4
      %v2811 = vsel %vm2807, %v2791, %v2794
      %v2812 = vsel %vm2810, %v2800, 2102212464
      %v2813 = vsel %vm2809, %v2797, %v2812
      %v2814 = vsel %vm2808, %v2811, %v2813
      %v2815 = vsel %vm2807, %v2794, %v2797
      %v2816 = vsel %vm2810, %v2803, 920167782
      %v2817 = vsel %vm2809, %v2800, %v2816
      %v2818 = vsel %vm2808, %v2815, %v2817
      %v2819 = vsel %vm2807, %v2797, %v2800
      %v2820 = vsel %vm2810, %v2806, 1326507024
      %v2821 = vsel %vm2809, %v2803, %v2820
      %v2822 = vsel %vm2808, %v2819, %v2821
      %v2823 = vshll.u32 %v2783, 8
      %v2824 = vmul.u32.u64.compose %v2823, %v2822
      %v2825 = vextract.low.u32 %v2824
      %v2826 = vextract.high.u32 %v2824
      %v2827 = vmul.u32.u64.compose %v2823, %v2818
      %v2828 = vextract.low.u32 %v2827
      %v2829 = vextract.high.u32 %v2827
      %v2830 = vmul.u32 %v2823, %v2814
      %v2831 = vadd.s32 %v2826, %v2828
      %vm2832 = vc.u32 %v2826, %v2828
      %v2833 = vadd.s32 %v2829, 1
      %v2834 = vsel %vm2832, %v2833, %v2829
      %v2835 = vadd.s32 %v2830, %v2834
      %v2836 = vadd.s32 %v2835, 536870912
      %v2837 = vshrl.u32 %v2836, 30
      %v2838 = vshll.u32 %v2837, 30
      %v2839 = vsub.s32 %v2835, %v2838
      %vm2840 = vcmp.lt.s32.totalorder %v2839, 0
      %v2841 = vsub.s32 0, %v2839
      %v2842 = vsel %vm2840, %v2841, %v2839
      %v2843 = vclz %v2842
      %v2844 = vsub.s32 %v2843, 2
      %vm2845 = vcmp.gt.s32.totalorder 0, %v2844
      %v2846 = vsel %vm2845, 0, %v2844
      %v2847 = vsub.s32 32, %v2846
      %v2848 = vshll.u32 %v2839, %v2846
      %v2849 = vshrl.u32 %v2831, %v2847
      %v2850 = vor.u32 %v2848, %v2849
      %v2851 = vsub.s32 4294967266, %v2846
      %v2852 = vadd.s32 %v2851, 127
      %v2853 = vshll.u32 %v2852, 23
      %v2854 = vor.u32 4788187, %v2853
      %v2855 = vand.u32 2147483647, %v2854
      %v2857 = vcvt.s32.f32 %v2850
      %v2858 = vmul.f32 %v2857, %v2855
      %v2859 = vxor.u32 %v2858, 2147483648
      %v2860 = vsel %vm2777, %v2859, %v2858
      %v2861 = vsub.s32 4, %v2837
      %v2862 = vsel %vm2777, %v2861, %v2837
      %v2863 = vsel %vm2776, %v2549, %v2860
      %v2864 = vsel %vm2776, 0, %v2862
      %v2865 = vcosq.f32.pop %v2863
      %v2866 = vsinq.f32.pop %v2863
      %vm2867 = vweird.f32 %v2549
      %v2868 = vadd.s32 %v2864, 3
      %v2869 = vand.u32 %v2868, 3
      %vm2870 = vcmp.lt.s32.totalorder %v2869, 2
      %vm2871 = vcmp.eq.s32.totalorder %v2869, 0
      %v2872 = vxor.u32 %v2866, 2147483648
      %v2873 = vsel %vm2871, %v2865, %v2872
      %vm2874 = vcmp.eq.s32.totalorder %v2869, 2
      %v2875 = vxor.u32 %v2865, 2147483648
      %v2876 = vsel %vm2874, %v2875, %v2866
      %v2877 = vsel %vm2870, %v2873, %v2876
      %v2878 = vsel %vm2867, nan, %v2877
      %v2879 = vand.u32 2147483647, %v2551
      %vm2880 = vcmp.le.f32.partialorder %v2879, 0.7853982
      %vm2881 = vcmp.lt.s32.totalorder %v2551, 0
      %v2882 = vand.u32 %v2551, 2139095040
      %v2883 = vshrl.u32 %v2882, 23
      %v2884 = vsub.s32 %v2883, 127
      %v2885 = vand.u32 2147483647, %v2551
      %v2886 = vand.u32 %v2885, 8388607
      %v2887 = vor.u32 %v2886, 8388608
      %v2888 = vsub.s32 0, %v2887
      %v2889 = vadd.s32 %v2884, 1
      %vm2890 = vcmp.gt.s32.totalorder %v2889, 0
      %v2891 = vsel %vm2890, %v2889, 0
      %v2892 = vshrl.u32 %v2891, 5
      %v2893 = vand.u32 %v2891, 31
      %v2894 = vsub.s32 32, %v2893
      %v2895 = vshrl.u32 683565275, %v2894
      %v2896 = vshll.u32 683565275, %v2893
      %v2897 = vshrl.u32 2475754826, %v2894
      %v2898 = vor.u32 %v2896, %v2897
      %v2899 = vshll.u32 2475754826, %v2893
      %v2900 = vshrl.u32 2131351028, %v2894
      %v2901 = vor.u32 %v2899, %v2900
      %v2902 = vshll.u32 2131351028, %v2893
      %v2903 = vshrl.u32 2102212464, %v2894
      %v2904 = vor.u32 %v2902, %v2903
      %v2905 = vshll.u32 2102212464, %v2893
      %v2906 = vshrl.u32 920167782, %v2894
      %v2907 = vor.u32 %v2905, %v2906
      %v2908 = vshll.u32 920167782, %v2893
      %v2909 = vshrl.u32 1326507024, %v2894
      %v2910 = vor.u32 %v2908, %v2909
      %vm2911 = vcmp.lt.s32.totalorder %v2892, 1
      %vm2912 = vcmp.lt.s32.totalorder %v2892, 2
      %vm2913 = vcmp.lt.s32.totalorder %v2892, 3
      %vm2914 = vcmp.lt.s32.totalorder %v2892, 4
      %v2915 = vsel %vm2911, %v2895, %v2898
      %v2916 = vsel %vm2914, %v2904, 2102212464
      %v2917 = vsel %vm2913, %v2901, %v2916
      %v2918 = vsel %vm2912, %v2915, %v2917
      %v2919 = vsel %vm2911, %v2898, %v2901
      %v2920 = vsel %vm2914, %v2907, 920167782
      %v2921 = vsel %vm2913, %v2904, %v2920
      %v2922 = vsel %vm2912, %v2919, %v2921
      %v2923 = vsel %vm2911, %v2901, %v2904
      %v2924 = vsel %vm2914, %v2910, 1326507024
      %v2925 = vsel %vm2913, %v2907, %v2924
      %v2926 = vsel %vm2912, %v2923, %v2925
      %v2927 = vshll.u32 %v2887, 8
      %v2928 = vmul.u32.u64.compose %v2927, %v2926
      %v2929 = vextract.low.u32 %v2928
      %v2930 = vextract.high.u32 %v2928
      %v2931 = vmul.u32.u64.compose %v2927, %v2922
      %v2932 = vextract.low.u32 %v2931
      %v2933 = vextract.high.u32 %v2931
      %v2934 = vmul.u32 %v2927, %v2918
      %v2935 = vadd.s32 %v2930, %v2932
      %vm2936 = vc.u32 %v2930, %v2932
      %v2937 = vadd.s32 %v2933, 1
      %v2938 = vsel %vm2936, %v2937, %v2933
      %v2939 = vadd.s32 %v2934, %v2938
      %v2940 = vadd.s32 %v2939, 536870912
      %v2941 = vshrl.u32 %v2940, 30
      %v2942 = vshll.u32 %v2941, 30
      %v2943 = vsub.s32 %v2939, %v2942
      %vm2944 = vcmp.lt.s32.totalorder %v2943, 0
      %v2945 = vsub.s32 0, %v2943
      %v2946 = vsel %vm2944, %v2945, %v2943
      %v2947 = vclz %v2946
      %v2948 = vsub.s32 %v2947, 2
      %vm2949 = vcmp.gt.s32.totalorder 0, %v2948
      %v2950 = vsel %vm2949, 0, %v2948
      %v2951 = vsub.s32 32, %v2950
      %v2952 = vshll.u32 %v2943, %v2950
      %v2953 = vshrl.u32 %v2935, %v2951
      %v2954 = vor.u32 %v2952, %v2953
      %v2955 = vsub.s32 4294967266, %v2950
      %v2956 = vadd.s32 %v2955, 127
      %v2957 = vshll.u32 %v2956, 23
      %v2958 = vor.u32 4788187, %v2957
      %v2959 = vand.u32 2147483647, %v2958
      %v2961 = vcvt.s32.f32 %v2954
      %v2962 = vmul.f32 %v2961, %v2959
      %v2963 = vxor.u32 %v2962, 2147483648
      %v2964 = vsel %vm2881, %v2963, %v2962
      %v2965 = vsub.s32 4, %v2941
      %v2966 = vsel %vm2881, %v2965, %v2941
      %v2967 = vsel %vm2880, %v2551, %v2964
      %v2968 = vsel %vm2880, 0, %v2966
      %v2969 = vcosq.f32.pop %v2967
      %v2970 = vsinq.f32.pop %v2967
      %vm2971 = vweird.f32 %v2551
      %v2972 = vadd.s32 %v2968, 3
      %v2973 = vand.u32 %v2972, 3
      %vm2974 = vcmp.lt.s32.totalorder %v2973, 2
      %vm2975 = vcmp.eq.s32.totalorder %v2973, 0
      %v2976 = vxor.u32 %v2970, 2147483648
      %v2977 = vsel %vm2975, %v2969, %v2976
      %vm2978 = vcmp.eq.s32.totalorder %v2973, 2
      %v2979 = vxor.u32 %v2969, 2147483648
      %v2980 = vsel %vm2978, %v2979, %v2970
      %v2981 = vsel %vm2974, %v2977, %v2980
      %v2982 = vsel %vm2971, nan, %v2981
      %v2983 = vand.u32 2147483647, %v2556
      %vm2984 = vcmp.le.f32.partialorder %v2983, 0.7853982
      %vm2985 = vcmp.lt.s32.totalorder %v2556, 0
      %v2986 = vand.u32 %v2556, 2139095040
      %v2987 = vshrl.u32 %v2986, 23
      %v2988 = vsub.s32 %v2987, 127
      %v2989 = vand.u32 2147483647, %v2556
      %v2990 = vand.u32 %v2989, 8388607
      %v2991 = vor.u32 %v2990, 8388608
      %v2992 = vsub.s32 0, %v2991
      %v2993 = vadd.s32 %v2988, 1
      %vm2994 = vcmp.gt.s32.totalorder %v2993, 0
      %v2995 = vsel %vm2994, %v2993, 0
      %v2996 = vshrl.u32 %v2995, 5
      %v2997 = vand.u32 %v2995, 31
      %v2998 = vsub.s32 32, %v2997
      %v2999 = vshrl.u32 683565275, %v2998
      %v3000 = vshll.u32 683565275, %v2997
      %v3001 = vshrl.u32 2475754826, %v2998
      %v3002 = vor.u32 %v3000, %v3001
      %v3003 = vshll.u32 2475754826, %v2997
      %v3004 = vshrl.u32 2131351028, %v2998
      %v3005 = vor.u32 %v3003, %v3004
      %v3006 = vshll.u32 2131351028, %v2997
      %v3007 = vshrl.u32 2102212464, %v2998
      %v3008 = vor.u32 %v3006, %v3007
      %v3009 = vshll.u32 2102212464, %v2997
      %v3010 = vshrl.u32 920167782, %v2998
      %v3011 = vor.u32 %v3009, %v3010
      %v3012 = vshll.u32 920167782, %v2997
      %v3013 = vshrl.u32 1326507024, %v2998
      %v3014 = vor.u32 %v3012, %v3013
      %vm3015 = vcmp.lt.s32.totalorder %v2996, 1
      %vm3016 = vcmp.lt.s32.totalorder %v2996, 2
      %vm3017 = vcmp.lt.s32.totalorder %v2996, 3
      %vm3018 = vcmp.lt.s32.totalorder %v2996, 4
      %v3019 = vsel %vm3015, %v2999, %v3002
      %v3020 = vsel %vm3018, %v3008, 2102212464
      %v3021 = vsel %vm3017, %v3005, %v3020
      %v3022 = vsel %vm3016, %v3019, %v3021
      %v3023 = vsel %vm3015, %v3002, %v3005
      %v3024 = vsel %vm3018, %v3011, 920167782
      %v3025 = vsel %vm3017, %v3008, %v3024
      %v3026 = vsel %vm3016, %v3023, %v3025
      %v3027 = vsel %vm3015, %v3005, %v3008
      %v3028 = vsel %vm3018, %v3014, 1326507024
      %v3029 = vsel %vm3017, %v3011, %v3028
      %v3030 = vsel %vm3016, %v3027, %v3029
      %v3031 = vshll.u32 %v2991, 8
      %v3032 = vmul.u32.u64.compose %v3031, %v3030
      %v3033 = vextract.low.u32 %v3032
      %v3034 = vextract.high.u32 %v3032
      %v3035 = vmul.u32.u64.compose %v3031, %v3026
      %v3036 = vextract.low.u32 %v3035
      %v3037 = vextract.high.u32 %v3035
      %v3038 = vmul.u32 %v3031, %v3022
      %v3039 = vadd.s32 %v3034, %v3036
      %vm3040 = vc.u32 %v3034, %v3036
      %v3041 = vadd.s32 %v3037, 1
      %v3042 = vsel %vm3040, %v3041, %v3037
      %v3043 = vadd.s32 %v3038, %v3042
      %v3044 = vadd.s32 %v3043, 536870912
      %v3045 = vshrl.u32 %v3044, 30
      %v3046 = vshll.u32 %v3045, 30
      %v3047 = vsub.s32 %v3043, %v3046
      %vm3048 = vcmp.lt.s32.totalorder %v3047, 0
      %v3049 = vsub.s32 0, %v3047
      %v3050 = vsel %vm3048, %v3049, %v3047
      %v3051 = vclz %v3050
      %v3052 = vsub.s32 %v3051, 2
      %vm3053 = vcmp.gt.s32.totalorder 0, %v3052
      %v3054 = vsel %vm3053, 0, %v3052
      %v3055 = vsub.s32 32, %v3054
      %v3056 = vshll.u32 %v3047, %v3054
      %v3057 = vshrl.u32 %v3039, %v3055
      %v3058 = vor.u32 %v3056, %v3057
      %v3059 = vsub.s32 4294967266, %v3054
      %v3060 = vadd.s32 %v3059, 127
      %v3061 = vshll.u32 %v3060, 23
      %v3062 = vor.u32 4788187, %v3061
      %v3063 = vand.u32 2147483647, %v3062
      %v3065 = vcvt.s32.f32 %v3058
      %v3066 = vmul.f32 %v3065, %v3063
      %v3067 = vxor.u32 %v3066, 2147483648
      %v3068 = vsel %vm2985, %v3067, %v3066
      %v3069 = vsub.s32 4, %v3045
      %v3070 = vsel %vm2985, %v3069, %v3045
      %v3071 = vsel %vm2984, %v2556, %v3068
      %v3072 = vsel %vm2984, 0, %v3070
      %v3073 = vcosq.f32.pop %v3071
      %v3074 = vsinq.f32.pop %v3071
      %vm3075 = vweird.f32 %v2556
      %v3076 = vadd.s32 %v3072, 3
      %v3077 = vand.u32 %v3076, 3
      %vm3078 = vcmp.lt.s32.totalorder %v3077, 2
      %vm3079 = vcmp.eq.s32.totalorder %v3077, 0
      %v3080 = vxor.u32 %v3074, 2147483648
      %v3081 = vsel %vm3079, %v3073, %v3080
      %vm3082 = vcmp.eq.s32.totalorder %v3077, 2
      %v3083 = vxor.u32 %v3073, 2147483648
      %v3084 = vsel %vm3082, %v3083, %v3074
      %v3085 = vsel %vm3078, %v3081, %v3084
      %v3086 = vsel %vm3075, nan, %v3085
      %v3087 = vand.u32 2147483647, %v2558
      %vm3088 = vcmp.le.f32.partialorder %v3087, 0.7853982
      %vm3089 = vcmp.lt.s32.totalorder %v2558, 0
      %v3090 = vand.u32 %v2558, 2139095040
      %v3091 = vshrl.u32 %v3090, 23
      %v3092 = vsub.s32 %v3091, 127
      %v3093 = vand.u32 2147483647, %v2558
      %v3094 = vand.u32 %v3093, 8388607
      %v3095 = vor.u32 %v3094, 8388608
      %v3096 = vsub.s32 0, %v3095
      %v3097 = vadd.s32 %v3092, 1
      %vm3098 = vcmp.gt.s32.totalorder %v3097, 0
      %v3099 = vsel %vm3098, %v3097, 0
      %v3100 = vshrl.u32 %v3099, 5
      %v3101 = vand.u32 %v3099, 31
      %v3102 = vsub.s32 32, %v3101
      %v3103 = vshrl.u32 683565275, %v3102
      %v3104 = vshll.u32 683565275, %v3101
      %v3105 = vshrl.u32 2475754826, %v3102
      %v3106 = vor.u32 %v3104, %v3105
      %v3107 = vshll.u32 2475754826, %v3101
      %v3108 = vshrl.u32 2131351028, %v3102
      %v3109 = vor.u32 %v3107, %v3108
      %v3110 = vshll.u32 2131351028, %v3101
      %v3111 = vshrl.u32 2102212464, %v3102
      %v3112 = vor.u32 %v3110, %v3111
      %v3113 = vshll.u32 2102212464, %v3101
      %v3114 = vshrl.u32 920167782, %v3102
      %v3115 = vor.u32 %v3113, %v3114
      %v3116 = vshll.u32 920167782, %v3101
      %v3117 = vshrl.u32 1326507024, %v3102
      %v3118 = vor.u32 %v3116, %v3117
      %vm3119 = vcmp.lt.s32.totalorder %v3100, 1
      %vm3120 = vcmp.lt.s32.totalorder %v3100, 2
      %vm3121 = vcmp.lt.s32.totalorder %v3100, 3
      %vm3122 = vcmp.lt.s32.totalorder %v3100, 4
      %v3123 = vsel %vm3119, %v3103, %v3106
      %v3124 = vsel %vm3122, %v3112, 2102212464
      %v3125 = vsel %vm3121, %v3109, %v3124
      %v3126 = vsel %vm3120, %v3123, %v3125
      %v3127 = vsel %vm3119, %v3106, %v3109
      %v3128 = vsel %vm3122, %v3115, 920167782
      %v3129 = vsel %vm3121, %v3112, %v3128
      %v3130 = vsel %vm3120, %v3127, %v3129
      %v3131 = vsel %vm3119, %v3109, %v3112
      %v3132 = vsel %vm3122, %v3118, 1326507024
      %v3133 = vsel %vm3121, %v3115, %v3132
      %v3134 = vsel %vm3120, %v3131, %v3133
      %v3135 = vshll.u32 %v3095, 8
      %v3136 = vmul.u32.u64.compose %v3135, %v3134
      %v3137 = vextract.low.u32 %v3136
      %v3138 = vextract.high.u32 %v3136
      %v3139 = vmul.u32.u64.compose %v3135, %v3130
      %v3140 = vextract.low.u32 %v3139
      %v3141 = vextract.high.u32 %v3139
      %v3142 = vmul.u32 %v3135, %v3126
      %v3143 = vadd.s32 %v3138, %v3140
      %vm3144 = vc.u32 %v3138, %v3140
      %v3145 = vadd.s32 %v3141, 1
      %v3146 = vsel %vm3144, %v3145, %v3141
      %v3147 = vadd.s32 %v3142, %v3146
      %v3148 = vadd.s32 %v3147, 536870912
      %v3149 = vshrl.u32 %v3148, 30
      %v3150 = vshll.u32 %v3149, 30
      %v3151 = vsub.s32 %v3147, %v3150
      %vm3152 = vcmp.lt.s32.totalorder %v3151, 0
      %v3153 = vsub.s32 0, %v3151
      %v3154 = vsel %vm3152, %v3153, %v3151
      %v3155 = vclz %v3154
      %v3156 = vsub.s32 %v3155, 2
      %vm3157 = vcmp.gt.s32.totalorder 0, %v3156
      %v3158 = vsel %vm3157, 0, %v3156
      %v3159 = vsub.s32 32, %v3158
      %v3160 = vshll.u32 %v3151, %v3158
      %v3161 = vshrl.u32 %v3143, %v3159
      %v3162 = vor.u32 %v3160, %v3161
      %v3163 = vsub.s32 4294967266, %v3158
      %v3164 = vadd.s32 %v3163, 127
      %v3165 = vshll.u32 %v3164, 23
      %v3166 = vor.u32 4788187, %v3165
      %v3167 = vand.u32 2147483647, %v3166
      %v3169 = vcvt.s32.f32 %v3162
      %v3170 = vmul.f32 %v3169, %v3167
      %v3171 = vxor.u32 %v3170, 2147483648
      %v3172 = vsel %vm3089, %v3171, %v3170
      %v3173 = vsub.s32 4, %v3149
      %v3174 = vsel %vm3089, %v3173, %v3149
      %v3175 = vsel %vm3088, %v2558, %v3172
      %v3176 = vsel %vm3088, 0, %v3174
      %v3177 = vcosq.f32.pop %v3175
      %v3178 = vsinq.f32.pop %v3175
      %vm3179 = vweird.f32 %v2558
      %v3180 = vadd.s32 %v3176, 3
      %v3181 = vand.u32 %v3180, 3
      %vm3182 = vcmp.lt.s32.totalorder %v3181, 2
      %vm3183 = vcmp.eq.s32.totalorder %v3181, 0
      %v3184 = vxor.u32 %v3178, 2147483648
      %v3185 = vsel %vm3183, %v3177, %v3184
      %vm3186 = vcmp.eq.s32.totalorder %v3181, 2
      %v3187 = vxor.u32 %v3177, 2147483648
      %v3188 = vsel %vm3186, %v3187, %v3178
      %v3189 = vsel %vm3182, %v3185, %v3188
      %v3190 = vsel %vm3179, nan, %v3189
      %v3191 = vand.u32 2147483647, %v2563
      %vm3192 = vcmp.le.f32.partialorder %v3191, 0.7853982
      %vm3193 = vcmp.lt.s32.totalorder %v2563, 0
      %v3194 = vand.u32 %v2563, 2139095040
      %v3195 = vshrl.u32 %v3194, 23
      %v3196 = vsub.s32 %v3195, 127
      %v3197 = vand.u32 2147483647, %v2563
      %v3198 = vand.u32 %v3197, 8388607
      %v3199 = vor.u32 %v3198, 8388608
      %v3200 = vsub.s32 0, %v3199
      %v3201 = vadd.s32 %v3196, 1
      %vm3202 = vcmp.gt.s32.totalorder %v3201, 0
      %v3203 = vsel %vm3202, %v3201, 0
      %v3204 = vshrl.u32 %v3203, 5
      %v3205 = vand.u32 %v3203, 31
      %v3206 = vsub.s32 32, %v3205
      %v3207 = vshrl.u32 683565275, %v3206
      %v3208 = vshll.u32 683565275, %v3205
      %v3209 = vshrl.u32 2475754826, %v3206
      %v3210 = vor.u32 %v3208, %v3209
      %v3211 = vshll.u32 2475754826, %v3205
      %v3212 = vshrl.u32 2131351028, %v3206
      %v3213 = vor.u32 %v3211, %v3212
      %v3214 = vshll.u32 2131351028, %v3205
      %v3215 = vshrl.u32 2102212464, %v3206
      %v3216 = vor.u32 %v3214, %v3215
      %v3217 = vshll.u32 2102212464, %v3205
      %v3218 = vshrl.u32 920167782, %v3206
      %v3219 = vor.u32 %v3217, %v3218
      %v3220 = vshll.u32 920167782, %v3205
      %v3221 = vshrl.u32 1326507024, %v3206
      %v3222 = vor.u32 %v3220, %v3221
      %vm3223 = vcmp.lt.s32.totalorder %v3204, 1
      %vm3224 = vcmp.lt.s32.totalorder %v3204, 2
      %vm3225 = vcmp.lt.s32.totalorder %v3204, 3
      %vm3226 = vcmp.lt.s32.totalorder %v3204, 4
      %v3227 = vsel %vm3223, %v3207, %v3210
      %v3228 = vsel %vm3226, %v3216, 2102212464
      %v3229 = vsel %vm3225, %v3213, %v3228
      %v3230 = vsel %vm3224, %v3227, %v3229
      %v3231 = vsel %vm3223, %v3210, %v3213
      %v3232 = vsel %vm3226, %v3219, 920167782
      %v3233 = vsel %vm3225, %v3216, %v3232
      %v3234 = vsel %vm3224, %v3231, %v3233
      %v3235 = vsel %vm3223, %v3213, %v3216
      %v3236 = vsel %vm3226, %v3222, 1326507024
      %v3237 = vsel %vm3225, %v3219, %v3236
      %v3238 = vsel %vm3224, %v3235, %v3237
      %v3239 = vshll.u32 %v3199, 8
      %v3240 = vmul.u32.u64.compose %v3239, %v3238
      %v3241 = vextract.low.u32 %v3240
      %v3242 = vextract.high.u32 %v3240
      %v3243 = vmul.u32.u64.compose %v3239, %v3234
      %v3244 = vextract.low.u32 %v3243
      %v3245 = vextract.high.u32 %v3243
      %v3246 = vmul.u32 %v3239, %v3230
      %v3247 = vadd.s32 %v3242, %v3244
      %vm3248 = vc.u32 %v3242, %v3244
      %v3249 = vadd.s32 %v3245, 1
      %v3250 = vsel %vm3248, %v3249, %v3245
      %v3251 = vadd.s32 %v3246, %v3250
      %v3252 = vadd.s32 %v3251, 536870912
      %v3253 = vshrl.u32 %v3252, 30
      %v3254 = vshll.u32 %v3253, 30
      %v3255 = vsub.s32 %v3251, %v3254
      %vm3256 = vcmp.lt.s32.totalorder %v3255, 0
      %v3257 = vsub.s32 0, %v3255
      %v3258 = vsel %vm3256, %v3257, %v3255
      %v3259 = vclz %v3258
      %v3260 = vsub.s32 %v3259, 2
      %vm3261 = vcmp.gt.s32.totalorder 0, %v3260
      %v3262 = vsel %vm3261, 0, %v3260
      %v3263 = vsub.s32 32, %v3262
      %v3264 = vshll.u32 %v3255, %v3262
      %v3265 = vshrl.u32 %v3247, %v3263
      %v3266 = vor.u32 %v3264, %v3265
      %v3267 = vsub.s32 4294967266, %v3262
      %v3268 = vadd.s32 %v3267, 127
      %v3269 = vshll.u32 %v3268, 23
      %v3270 = vor.u32 4788187, %v3269
      %v3271 = vand.u32 2147483647, %v3270
      %v3273 = vcvt.s32.f32 %v3266
      %v3274 = vmul.f32 %v3273, %v3271
      %v3275 = vxor.u32 %v3274, 2147483648
      %v3276 = vsel %vm3193, %v3275, %v3274
      %v3277 = vsub.s32 4, %v3253
      %v3278 = vsel %vm3193, %v3277, %v3253
      %v3279 = vsel %vm3192, %v2563, %v3276
      %v3280 = vsel %vm3192, 0, %v3278
      %v3281 = vcosq.f32.pop %v3279
      %v3282 = vsinq.f32.pop %v3279
      %vm3283 = vweird.f32 %v2563
      %v3284 = vadd.s32 %v3280, 3
      %v3285 = vand.u32 %v3284, 3
      %vm3286 = vcmp.lt.s32.totalorder %v3285, 2
      %vm3287 = vcmp.eq.s32.totalorder %v3285, 0
      %v3288 = vxor.u32 %v3282, 2147483648
      %v3289 = vsel %vm3287, %v3281, %v3288
      %vm3290 = vcmp.eq.s32.totalorder %v3285, 2
      %v3291 = vxor.u32 %v3281, 2147483648
      %v3292 = vsel %vm3290, %v3291, %v3282
      %v3293 = vsel %vm3286, %v3289, %v3292
      %v3294 = vsel %vm3283, nan, %v3293
      %v3295 = vand.u32 2147483647, %v2565
      %vm3296 = vcmp.le.f32.partialorder %v3295, 0.7853982
      %vm3297 = vcmp.lt.s32.totalorder %v2565, 0
      %v3298 = vand.u32 %v2565, 2139095040
      %v3299 = vshrl.u32 %v3298, 23
      %v3300 = vsub.s32 %v3299, 127
      %v3301 = vand.u32 2147483647, %v2565
      %v3302 = vand.u32 %v3301, 8388607
      %v3303 = vor.u32 %v3302, 8388608
      %v3304 = vsub.s32 0, %v3303
      %v3305 = vadd.s32 %v3300, 1
      %vm3306 = vcmp.gt.s32.totalorder %v3305, 0
      %v3307 = vsel %vm3306, %v3305, 0
      %v3308 = vshrl.u32 %v3307, 5
      %v3309 = vand.u32 %v3307, 31
      %v3310 = vsub.s32 32, %v3309
      %v3311 = vshrl.u32 683565275, %v3310
      %v3312 = vshll.u32 683565275, %v3309
      %v3313 = vshrl.u32 2475754826, %v3310
      %v3314 = vor.u32 %v3312, %v3313
      %v3315 = vshll.u32 2475754826, %v3309
      %v3316 = vshrl.u32 2131351028, %v3310
      %v3317 = vor.u32 %v3315, %v3316
      %v3318 = vshll.u32 2131351028, %v3309
      %v3319 = vshrl.u32 2102212464, %v3310
      %v3320 = vor.u32 %v3318, %v3319
      %v3321 = vshll.u32 2102212464, %v3309
      %v3322 = vshrl.u32 920167782, %v3310
      %v3323 = vor.u32 %v3321, %v3322
      %v3324 = vshll.u32 920167782, %v3309
      %v3325 = vshrl.u32 1326507024, %v3310
      %v3326 = vor.u32 %v3324, %v3325
      %vm3327 = vcmp.lt.s32.totalorder %v3308, 1
      %vm3328 = vcmp.lt.s32.totalorder %v3308, 2
      %vm3329 = vcmp.lt.s32.totalorder %v3308, 3
      %vm3330 = vcmp.lt.s32.totalorder %v3308, 4
      %v3331 = vsel %vm3327, %v3311, %v3314
      %v3332 = vsel %vm3330, %v3320, 2102212464
      %v3333 = vsel %vm3329, %v3317, %v3332
      %v3334 = vsel %vm3328, %v3331, %v3333
      %v3335 = vsel %vm3327, %v3314, %v3317
      %v3336 = vsel %vm3330, %v3323, 920167782
      %v3337 = vsel %vm3329, %v3320, %v3336
      %v3338 = vsel %vm3328, %v3335, %v3337
      %v3339 = vsel %vm3327, %v3317, %v3320
      %v3340 = vsel %vm3330, %v3326, 1326507024
      %v3341 = vsel %vm3329, %v3323, %v3340
      %v3342 = vsel %vm3328, %v3339, %v3341
      %v3343 = vshll.u32 %v3303, 8
      %v3344 = vmul.u32.u64.compose %v3343, %v3342
      %v3345 = vextract.low.u32 %v3344
      %v3346 = vextract.high.u32 %v3344
      %v3347 = vmul.u32.u64.compose %v3343, %v3338
      %v3348 = vextract.low.u32 %v3347
      %v3349 = vextract.high.u32 %v3347
      %v3350 = vmul.u32 %v3343, %v3334
      %v3351 = vadd.s32 %v3346, %v3348
      %vm3352 = vc.u32 %v3346, %v3348
      %v3353 = vadd.s32 %v3349, 1
      %v3354 = vsel %vm3352, %v3353, %v3349
      %v3355 = vadd.s32 %v3350, %v3354
      %v3356 = vadd.s32 %v3355, 536870912
      %v3357 = vshrl.u32 %v3356, 30
      %v3358 = vshll.u32 %v3357, 30
      %v3359 = vsub.s32 %v3355, %v3358
      %vm3360 = vcmp.lt.s32.totalorder %v3359, 0
      %v3361 = vsub.s32 0, %v3359
      %v3362 = vsel %vm3360, %v3361, %v3359
      %v3363 = vclz %v3362
      %v3364 = vsub.s32 %v3363, 2
      %vm3365 = vcmp.gt.s32.totalorder 0, %v3364
      %v3366 = vsel %vm3365, 0, %v3364
      %v3367 = vsub.s32 32, %v3366
      %v3368 = vshll.u32 %v3359, %v3366
      %v3369 = vshrl.u32 %v3351, %v3367
      %v3370 = vor.u32 %v3368, %v3369
      %v3371 = vsub.s32 4294967266, %v3366
      %v3372 = vadd.s32 %v3371, 127
      %v3373 = vshll.u32 %v3372, 23
      %v3374 = vor.u32 4788187, %v3373
      %v3375 = vand.u32 2147483647, %v3374
      %v3377 = vcvt.s32.f32 %v3370
      %v3378 = vmul.f32 %v3377, %v3375
      %v3379 = vxor.u32 %v3378, 2147483648
      %v3380 = vsel %vm3297, %v3379, %v3378
      %v3381 = vsub.s32 4, %v3357
      %v3382 = vsel %vm3297, %v3381, %v3357
      %v3383 = vsel %vm3296, %v2565, %v3380
      %v3384 = vsel %vm3296, 0, %v3382
      %v3385 = vcosq.f32.pop %v3383
      %v3386 = vsinq.f32.pop %v3383
      %vm3387 = vweird.f32 %v2565
      %v3388 = vadd.s32 %v3384, 3
      %v3389 = vand.u32 %v3388, 3
      %vm3390 = vcmp.lt.s32.totalorder %v3389, 2
      %vm3391 = vcmp.eq.s32.totalorder %v3389, 0
      %v3392 = vxor.u32 %v3386, 2147483648
      %v3393 = vsel %vm3391, %v3385, %v3392
      %vm3394 = vcmp.eq.s32.totalorder %v3389, 2
      %v3395 = vxor.u32 %v3385, 2147483648
      %v3396 = vsel %vm3394, %v3395, %v3386
      %v3397 = vsel %vm3390, %v3393, %v3396
      %v3398 = vsel %vm3387, nan, %v3397
      %v3399 = vld [vmem:[%s5] sm:$0xff]
      %v3400 = vld [vmem:[%s5 + $0x8] sm:$0xff]
      %v3401 = vld [vmem:[%s5 + $0x10] sm:$0xff]
      %v3402 = vld [vmem:[%s5 + $0x18] sm:$0xff]
      %v3403 = vld [vmem:[%s6] sm:$0xff]
      %v3404 = vld [vmem:[%s6 + $0x8] sm:$0xff]
      %v3405 = vld [vmem:[%s6 + $0x10] sm:$0xff]
      %v3406 = vld [vmem:[%s6 + $0x18] sm:$0xff]
      %3408 = vset.pattern.permute.xlu0 0
      %3409 = vperm.xlu0 %3408, %v3403
      %v3410 = vpop.permute.xlu0 %3409
      %3413 = vset.pattern.permute.xlu0 0
      %3414 = vperm.xlu0 %3413, %v3404
      %v3415 = vpop.permute.xlu0 %3414
      %3418 = vset.pattern.permute.xlu0 0
      %3419 = vperm.xlu0 %3418, %v3405
      %v3420 = vpop.permute.xlu0 %3419
      %3423 = vset.pattern.permute.xlu0 0
      %3424 = vperm.xlu0 %3423, %v3406
      %v3425 = vpop.permute.xlu0 %3424
      %v3428 = vsel %vm1864, %v3399, 0
      %v3431 = vsel %vm1864, %v3400, 0
      %v3434 = vsel %vm1864, %v3401, 0
      %v3437 = vsel %vm1864, %v3402, 0
      %3439 = vmatprep.subr.mxu0 0.0
      %3440 = vmatpush1.msra.mxu0 0.0
      %3441 = vmatprep.subr.mxu0 0.0
      %3442 = vmatpush1.msra.mxu0 0.0
      %3443 = vmatprep.subr.mxu0 0.0
      %3444 = vmatpush1.msra.mxu0 0.0
      %3445 = vmatprep.subr.mxu0 0.0
      %3446 = vmatpush1.msra.mxu0 0.0
      %3447 = vmatprep.subr.mxu0 0.0
      %3448 = vmatpush1.msra.mxu0 0.0
      %3449 = vmatprep.subr.mxu0 0.0
      %3450 = vmatpush1.msra.mxu0 0.0
      %3451 = vmatprep.subr.mxu0 0.0
      %3452 = vmatpush1.msra.mxu0 0.0
      %3453 = vmatprep.subr.mxu0 0.0
      %3454 = vmatpush1.msra.mxu0 0.0
      %3455 = vmatprep.subr.mxu0 0.0
      %3456 = vmatpush1.msra.mxu0 0.0
      %3457 = vmatprep.subr.mxu0 0.0
      %3458 = vmatpush1.msra.mxu0 0.0
      %3459 = vmatprep.subr.mxu0 0.0
      %3460 = vmatpush1.msra.mxu0 0.0
      %3461 = vmatprep.subr.mxu0 0.0
      %3462 = vmatpush1.msra.mxu0 0.0
      %v3463 = vand.u32 %v3398, 4294901760
      %3464 = vmatprep.subr.mxu0 %v3463
      %v3465 = vand.u32 %v3294, 4294901760
      %3466 = vmatpush1.msra.mxu0 %v3465
      %v3467 = vand.u32 %v3190, 4294901760
      %3468 = vmatprep.subr.mxu0 %v3467
      %v3469 = vand.u32 %v3086, 4294901760
      %3470 = vmatpush1.msra.mxu0 %v3469
      %v3471 = vand.u32 %v2982, 4294901760
      %3472 = vmatprep.subr.mxu0 %v3471
      %v3473 = vand.u32 %v2878, 4294901760
      %3474 = vmatpush1.msra.mxu0 %v3473
      %v3475 = vand.u32 %v2774, 4294901760
      %3476 = vmatprep.subr.mxu0 %v3475
      %v3477 = vand.u32 %v2670, 4294901760
      %3478 = vmatpush1.msra.mxu0 %v3477
      %3479 = vmatprep.subr.mxu0 0.0
      %3480 = vmatpush2.msra.mxu0 0.0
      %3481 = vmatprep.subr.mxu0 0.0
      %3482 = vmatpush2.msra.mxu0 0.0
      %3483 = vmatprep.subr.mxu0 0.0
      %3484 = vmatpush2.msra.mxu0 0.0
      %3485 = vmatprep.subr.mxu0 0.0
      %3486 = vmatpush2.msra.mxu0 0.0
      %3487 = vmatprep.subr.mxu0 0.0
      %3488 = vmatpush2.msra.mxu0 0.0
      %3489 = vmatprep.subr.mxu0 0.0
      %3490 = vmatpush2.msra.mxu0 0.0
      %3491 = vmatprep.subr.mxu0 0.0
      %3492 = vmatpush2.msra.mxu0 0.0
      %3493 = vmatprep.subr.mxu0 0.0
      %3494 = vmatpush2.msra.mxu0 0.0
      %3495 = vmatprep.subr.mxu0 0.0
      %3496 = vmatpush2.msra.mxu0 0.0
      %3497 = vmatprep.subr.mxu0 0.0
      %3498 = vmatpush2.msra.mxu0 0.0
      %3499 = vmatprep.subr.mxu0 0.0
      %3500 = vmatpush2.msra.mxu0 0.0
      %3501 = vmatprep.subr.mxu0 0.0
      %3502 = vmatpush2.msra.mxu0 0.0
      %3503 = vmatprep.subr.mxu0 0.0
      %3504 = vmatpush2.msra.mxu0 0.0
      %3505 = vmatprep.subr.mxu0 0.0
      %3506 = vmatpush2.msra.mxu0 0.0
      %3507 = vmatprep.subr.mxu0 0.0
      %3508 = vmatpush2.msra.mxu0 0.0
      %3509 = vmatprep.subr.mxu0 0.0
      %3510 = vmatpush2.msra.mxu0 0.0
      %3511 = vmatprep.mubr.f32.mxu0 0.0
      %v3512 = vand.u32 %v3428, 4294901760
      %v3513 = vsub.f32 %v3428, %v3512
      %v3514 = vand.u32 %v3513, 4294901760
      %v3515 = vsub.f32 %v3513, %v3514
      %v3516 = vand.u32 %v3515, 4294901760
      %3517 = vmatmul.mubr.f32.gmra.mxu0 %v3516
      %v3518 = vpop.f32.mrf.mxu0
      %v3519 = vadd.f32 %v3410, %v3518
      %v3520 = vpop.f32.mrf.mxu0
      %v3521 = vadd.f32 %v3410, %v3520
      %3522 = vmatprep.mubr.f32.mxu0 0.0
      %v3523 = vand.u32 %v3431, 4294901760
      %v3524 = vsub.f32 %v3431, %v3523
      %v3525 = vand.u32 %v3524, 4294901760
      %v3526 = vsub.f32 %v3524, %v3525
      %v3527 = vand.u32 %v3526, 4294901760
      %3528 = vmatmul.mubr.f32.gmra.mxu0 %v3527
      %v3529 = vpop.f32.mrf.mxu0
      %v3530 = vadd.f32 %v3415, %v3529
      %v3531 = vpop.f32.mrf.mxu0
      %v3532 = vadd.f32 %v3415, %v3531
      %3533 = vmatprep.mubr.f32.mxu0 0.0
      %v3534 = vand.u32 %v3434, 4294901760
      %v3535 = vsub.f32 %v3434, %v3534
      %v3536 = vand.u32 %v3535, 4294901760
      %v3537 = vsub.f32 %v3535, %v3536
      %v3538 = vand.u32 %v3537, 4294901760
      %3539 = vmatmul.mubr.f32.gmra.mxu0 %v3538
      %v3540 = vpop.f32.mrf.mxu0
      %v3541 = vadd.f32 %v3420, %v3540
      %v3542 = vpop.f32.mrf.mxu0
      %v3543 = vadd.f32 %v3420, %v3542
      %3544 = vmatprep.mubr.f32.mxu0 0.0
      %v3545 = vand.u32 %v3437, 4294901760
      %v3546 = vsub.f32 %v3437, %v3545
      %v3547 = vand.u32 %v3546, 4294901760
      %v3548 = vsub.f32 %v3546, %v3547
      %v3549 = vand.u32 %v3548, 4294901760
      %3550 = vmatmul.mubr.f32.gmra.mxu0 %v3549
      %v3551 = vpop.f32.mrf.mxu0
      %v3552 = vadd.f32 %v3425, %v3551
      %v3553 = vpop.f32.mrf.mxu0
      %v3554 = vadd.f32 %v3425, %v3553
      %3555 = vdwg.mxu0
      %3556 = vmatprep.subr.mxu0 0.0
      %3557 = vmatpush1.msra.mxu0 0.0
      %3558 = vmatprep.subr.mxu0 0.0
      %3559 = vmatpush1.msra.mxu0 0.0
      %3560 = vmatprep.subr.mxu0 0.0
      %3561 = vmatpush1.msra.mxu0 0.0
      %3562 = vmatprep.subr.mxu0 0.0
      %3563 = vmatpush1.msra.mxu0 0.0
      %3564 = vmatprep.subr.mxu0 0.0
      %3565 = vmatpush1.msra.mxu0 0.0
      %3566 = vmatprep.subr.mxu0 0.0
      %3567 = vmatpush1.msra.mxu0 0.0
      %3568 = vmatprep.subr.mxu0 0.0
      %3569 = vmatpush1.msra.mxu0 0.0
      %3570 = vmatprep.subr.mxu0 0.0
      %3571 = vmatpush1.msra.mxu0 0.0
      %3572 = vmatprep.subr.mxu0 0.0
      %3573 = vmatpush1.msra.mxu0 0.0
      %3574 = vmatprep.subr.mxu0 0.0
      %3575 = vmatpush1.msra.mxu0 0.0
      %3576 = vmatprep.subr.mxu0 0.0
      %3577 = vmatpush1.msra.mxu0 0.0
      %3578 = vmatprep.subr.mxu0 0.0
      %3579 = vmatpush1.msra.mxu0 0.0
      %v3580 = vand.u32 %v3398, 4294901760
      %v3581 = vsub.f32 %v3398, %v3580
      %v3582 = vand.u32 %v3581, 4294901760
      %v3583 = vsub.f32 %v3581, %v3582
      %v3584 = vand.u32 %v3583, 4294901760
      %3585 = vmatprep.subr.mxu0 %v3584
      %v3586 = vand.u32 %v3294, 4294901760
      %v3587 = vsub.f32 %v3294, %v3586
      %v3588 = vand.u32 %v3587, 4294901760
      %v3589 = vsub.f32 %v3587, %v3588
      %v3590 = vand.u32 %v3589, 4294901760
      %3591 = vmatpush1.msra.mxu0 %v3590
      %v3592 = vand.u32 %v3190, 4294901760
      %v3593 = vsub.f32 %v3190, %v3592
      %v3594 = vand.u32 %v3593, 4294901760
      %v3595 = vsub.f32 %v3593, %v3594
      %v3596 = vand.u32 %v3595, 4294901760
      %3597 = vmatprep.subr.mxu0 %v3596
      %v3598 = vand.u32 %v3086, 4294901760
      %v3599 = vsub.f32 %v3086, %v3598
      %v3600 = vand.u32 %v3599, 4294901760
      %v3601 = vsub.f32 %v3599, %v3600
      %v3602 = vand.u32 %v3601, 4294901760
      %3603 = vmatpush1.msra.mxu0 %v3602
      %v3604 = vand.u32 %v2982, 4294901760
      %v3605 = vsub.f32 %v2982, %v3604
      %v3606 = vand.u32 %v3605, 4294901760
      %v3607 = vsub.f32 %v3605, %v3606
      %v3608 = vand.u32 %v3607, 4294901760
      %3609 = vmatprep.subr.mxu0 %v3608
      %v3610 = vand.u32 %v2878, 4294901760
      %v3611 = vsub.f32 %v2878, %v3610
      %v3612 = vand.u32 %v3611, 4294901760
      %v3613 = vsub.f32 %v3611, %v3612
      %v3614 = vand.u32 %v3613, 4294901760
      %3615 = vmatpush1.msra.mxu0 %v3614
      %v3616 = vand.u32 %v2774, 4294901760
      %v3617 = vsub.f32 %v2774, %v3616
      %v3618 = vand.u32 %v3617, 4294901760
      %v3619 = vsub.f32 %v3617, %v3618
      %v3620 = vand.u32 %v3619, 4294901760
      %3621 = vmatprep.subr.mxu0 %v3620
      %v3622 = vand.u32 %v2670, 4294901760
      %v3623 = vsub.f32 %v2670, %v3622
      %v3624 = vand.u32 %v3623, 4294901760
      %v3625 = vsub.f32 %v3623, %v3624
      %v3626 = vand.u32 %v3625, 4294901760
      %3627 = vmatpush1.msra.mxu0 %v3626
      %3628 = vmatprep.subr.mxu0 0.0
      %3629 = vmatpush2.msra.mxu0 0.0
      %3630 = vmatprep.subr.mxu0 0.0
      %3631 = vmatpush2.msra.mxu0 0.0
      %3632 = vmatprep.subr.mxu0 0.0
      %3633 = vmatpush2.msra.mxu0 0.0
      %3634 = vmatprep.subr.mxu0 0.0
      %3635 = vmatpush2.msra.mxu0 0.0
      %3636 = vmatprep.subr.mxu0 0.0
      %3637 = vmatpush2.msra.mxu0 0.0
      %3638 = vmatprep.subr.mxu0 0.0
      %3639 = vmatpush2.msra.mxu0 0.0
      %3640 = vmatprep.subr.mxu0 0.0
      %3641 = vmatpush2.msra.mxu0 0.0
      %3642 = vmatprep.subr.mxu0 0.0
      %3643 = vmatpush2.msra.mxu0 0.0
      %3644 = vmatprep.subr.mxu0 0.0
      %3645 = vmatpush2.msra.mxu0 0.0
      %3646 = vmatprep.subr.mxu0 0.0
      %3647 = vmatpush2.msra.mxu0 0.0
      %3648 = vmatprep.subr.mxu0 0.0
      %3649 = vmatpush2.msra.mxu0 0.0
      %3650 = vmatprep.subr.mxu0 0.0
      %3651 = vmatpush2.msra.mxu0 0.0
      %3652 = vmatprep.subr.mxu0 0.0
      %3653 = vmatpush2.msra.mxu0 0.0
      %3654 = vmatprep.subr.mxu0 0.0
      %3655 = vmatpush2.msra.mxu0 0.0
      %3656 = vmatprep.subr.mxu0 0.0
      %3657 = vmatpush2.msra.mxu0 0.0
      %3658 = vmatprep.subr.mxu0 0.0
      %3659 = vmatpush2.msra.mxu0 0.0
      %3660 = vmatprep.mubr.f32.mxu0 0.0
      %v3661 = vand.u32 %v3428, 4294901760
      %3662 = vmatmul.mubr.f32.gmra.mxu0 %v3661
      %v3663 = vpop.f32.mrf.mxu0
      %v3664 = vadd.f32 %v3519, %v3663
      %v3665 = vpop.f32.mrf.mxu0
      %v3666 = vadd.f32 %v3521, %v3665
      %3667 = vmatprep.mubr.f32.mxu0 0.0
      %v3668 = vand.u32 %v3431, 4294901760
      %3669 = vmatmul.mubr.f32.gmra.mxu0 %v3668
      %v3670 = vpop.f32.mrf.mxu0
      %v3671 = vadd.f32 %v3530, %v3670
      %v3672 = vpop.f32.mrf.mxu0
      %v3673 = vadd.f32 %v3532, %v3672
      %3674 = vmatprep.mubr.f32.mxu0 0.0
      %v3675 = vand.u32 %v3434, 4294901760
      %3676 = vmatmul.mubr.f32.gmra.mxu0 %v3675
      %v3677 = vpop.f32.mrf.mxu0
      %v3678 = vadd.f32 %v3541, %v3677
      %v3679 = vpop.f32.mrf.mxu0
      %v3680 = vadd.f32 %v3543, %v3679
      %3681 = vmatprep.mubr.f32.mxu0 0.0
      %v3682 = vand.u32 %v3437, 4294901760
      %3683 = vmatmul.mubr.f32.gmra.mxu0 %v3682
      %v3684 = vpop.f32.mrf.mxu0
      %v3685 = vadd.f32 %v3552, %v3684
      %v3686 = vpop.f32.mrf.mxu0
      %v3687 = vadd.f32 %v3554, %v3686
      %3688 = vdwg.mxu0
      %3689 = vmatprep.subr.mxu0 0.0
      %3690 = vmatpush1.msra.mxu0 0.0
      %3691 = vmatprep.subr.mxu0 0.0
      %3692 = vmatpush1.msra.mxu0 0.0
      %3693 = vmatprep.subr.mxu0 0.0
      %3694 = vmatpush1.msra.mxu0 0.0
      %3695 = vmatprep.subr.mxu0 0.0
      %3696 = vmatpush1.msra.mxu0 0.0
      %3697 = vmatprep.subr.mxu0 0.0
      %3698 = vmatpush1.msra.mxu0 0.0
      %3699 = vmatprep.subr.mxu0 0.0
      %3700 = vmatpush1.msra.mxu0 0.0
      %3701 = vmatprep.subr.mxu0 0.0
      %3702 = vmatpush1.msra.mxu0 0.0
      %3703 = vmatprep.subr.mxu0 0.0
      %3704 = vmatpush1.msra.mxu0 0.0
      %3705 = vmatprep.subr.mxu0 0.0
      %3706 = vmatpush1.msra.mxu0 0.0
      %3707 = vmatprep.subr.mxu0 0.0
      %3708 = vmatpush1.msra.mxu0 0.0
      %3709 = vmatprep.subr.mxu0 0.0
      %3710 = vmatpush1.msra.mxu0 0.0
      %3711 = vmatprep.subr.mxu0 0.0
      %3712 = vmatpush1.msra.mxu0 0.0
      %v3713 = vand.u32 %v3398, 4294901760
      %v3714 = vsub.f32 %v3398, %v3713
      %3715 = vmatprep.subr.mxu0 %v3714
      %v3716 = vand.u32 %v3294, 4294901760
      %v3717 = vsub.f32 %v3294, %v3716
      %3718 = vmatpush1.msra.mxu0 %v3717
      %v3719 = vand.u32 %v3190, 4294901760
      %v3720 = vsub.f32 %v3190, %v3719
      %3721 = vmatprep.subr.mxu0 %v3720
      %v3722 = vand.u32 %v3086, 4294901760
      %v3723 = vsub.f32 %v3086, %v3722
      %3724 = vmatpush1.msra.mxu0 %v3723
      %v3725 = vand.u32 %v2982, 4294901760
      %v3726 = vsub.f32 %v2982, %v3725
      %3727 = vmatprep.subr.mxu0 %v3726
      %v3728 = vand.u32 %v2878, 4294901760
      %v3729 = vsub.f32 %v2878, %v3728
      %3730 = vmatpush1.msra.mxu0 %v3729
      %v3731 = vand.u32 %v2774, 4294901760
      %v3732 = vsub.f32 %v2774, %v3731
      %3733 = vmatprep.subr.mxu0 %v3732
      %v3734 = vand.u32 %v2670, 4294901760
      %v3735 = vsub.f32 %v2670, %v3734
      %3736 = vmatpush1.msra.mxu0 %v3735
      %3737 = vmatprep.subr.mxu0 0.0
      %3738 = vmatpush2.msra.mxu0 0.0
      %3739 = vmatprep.subr.mxu0 0.0
      %3740 = vmatpush2.msra.mxu0 0.0
      %3741 = vmatprep.subr.mxu0 0.0
      %3742 = vmatpush2.msra.mxu0 0.0
      %3743 = vmatprep.subr.mxu0 0.0
      %3744 = vmatpush2.msra.mxu0 0.0
      %3745 = vmatprep.subr.mxu0 0.0
      %3746 = vmatpush2.msra.mxu0 0.0
      %3747 = vmatprep.subr.mxu0 0.0
      %3748 = vmatpush2.msra.mxu0 0.0
      %3749 = vmatprep.subr.mxu0 0.0
      %3750 = vmatpush2.msra.mxu0 0.0
      %3751 = vmatprep.subr.mxu0 0.0
      %3752 = vmatpush2.msra.mxu0 0.0
      %3753 = vmatprep.subr.mxu0 0.0
      %3754 = vmatpush2.msra.mxu0 0.0
      %3755 = vmatprep.subr.mxu0 0.0
      %3756 = vmatpush2.msra.mxu0 0.0
      %3757 = vmatprep.subr.mxu0 0.0
      %3758 = vmatpush2.msra.mxu0 0.0
      %3759 = vmatprep.subr.mxu0 0.0
      %3760 = vmatpush2.msra.mxu0 0.0
      %3761 = vmatprep.subr.mxu0 0.0
      %3762 = vmatpush2.msra.mxu0 0.0
      %3763 = vmatprep.subr.mxu0 0.0
      %3764 = vmatpush2.msra.mxu0 0.0
      %3765 = vmatprep.subr.mxu0 0.0
      %3766 = vmatpush2.msra.mxu0 0.0
      %3767 = vmatprep.subr.mxu0 0.0
      %3768 = vmatpush2.msra.mxu0 0.0
      %3769 = vmatprep.mubr.f32.mxu0 0.0
      %v3770 = vand.u32 %v3428, 4294901760
      %v3771 = vsub.f32 %v3428, %v3770
      %3772 = vmatmul.mubr.f32.gmra.mxu0 %v3771
      %v3773 = vpop.f32.mrf.mxu0
      %v3774 = vadd.f32 %v3664, %v3773
      %v3775 = vpop.f32.mrf.mxu0
      %v3776 = vadd.f32 %v3666, %v3775
      %3777 = vmatprep.mubr.f32.mxu0 0.0
      %v3778 = vand.u32 %v3431, 4294901760
      %v3779 = vsub.f32 %v3431, %v3778
      %3780 = vmatmul.mubr.f32.gmra.mxu0 %v3779
      %v3781 = vpop.f32.mrf.mxu0
      %v3782 = vadd.f32 %v3671, %v3781
      %v3783 = vpop.f32.mrf.mxu0
      %v3784 = vadd.f32 %v3673, %v3783
      %3785 = vmatprep.mubr.f32.mxu0 0.0
      %v3786 = vand.u32 %v3434, 4294901760
      %v3787 = vsub.f32 %v3434, %v3786
      %3788 = vmatmul.mubr.f32.gmra.mxu0 %v3787
      %v3789 = vpop.f32.mrf.mxu0
      %v3790 = vadd.f32 %v3678, %v3789
      %v3791 = vpop.f32.mrf.mxu0
      %v3792 = vadd.f32 %v3680, %v3791
      %3793 = vmatprep.mubr.f32.mxu0 0.0
      %v3794 = vand.u32 %v3437, 4294901760
      %v3795 = vsub.f32 %v3437, %v3794
      %3796 = vmatmul.mubr.f32.gmra.mxu0 %v3795
      %v3797 = vpop.f32.mrf.mxu0
      %v3798 = vadd.f32 %v3685, %v3797
      %v3799 = vpop.f32.mrf.mxu0
      %v3800 = vadd.f32 %v3687, %v3799
      %3801 = vdwg.mxu0
      %3802 = vmatprep.subr.mxu0 0.0
      %3803 = vmatpush1.msra.mxu0 0.0
      %3804 = vmatprep.subr.mxu0 0.0
      %3805 = vmatpush1.msra.mxu0 0.0
      %3806 = vmatprep.subr.mxu0 0.0
      %3807 = vmatpush1.msra.mxu0 0.0
      %3808 = vmatprep.subr.mxu0 0.0
      %3809 = vmatpush1.msra.mxu0 0.0
      %3810 = vmatprep.subr.mxu0 0.0
      %3811 = vmatpush1.msra.mxu0 0.0
      %3812 = vmatprep.subr.mxu0 0.0
      %3813 = vmatpush1.msra.mxu0 0.0
      %3814 = vmatprep.subr.mxu0 0.0
      %3815 = vmatpush1.msra.mxu0 0.0
      %3816 = vmatprep.subr.mxu0 0.0
      %3817 = vmatpush1.msra.mxu0 0.0
      %3818 = vmatprep.subr.mxu0 0.0
      %3819 = vmatpush1.msra.mxu0 0.0
      %3820 = vmatprep.subr.mxu0 0.0
      %3821 = vmatpush1.msra.mxu0 0.0
      %3822 = vmatprep.subr.mxu0 0.0
      %3823 = vmatpush1.msra.mxu0 0.0
      %3824 = vmatprep.subr.mxu0 0.0
      %3825 = vmatpush1.msra.mxu0 0.0
      %v3826 = vand.u32 %v3398, 4294901760
      %3827 = vmatprep.subr.mxu0 %v3826
      %v3828 = vand.u32 %v3294, 4294901760
      %3829 = vmatpush1.msra.mxu0 %v3828
      %v3830 = vand.u32 %v3190, 4294901760
      %3831 = vmatprep.subr.mxu0 %v3830
      %v3832 = vand.u32 %v3086, 4294901760
      %3833 = vmatpush1.msra.mxu0 %v3832
      %v3834 = vand.u32 %v2982, 4294901760
      %3835 = vmatprep.subr.mxu0 %v3834
      %v3836 = vand.u32 %v2878, 4294901760
      %3837 = vmatpush1.msra.mxu0 %v3836
      %v3838 = vand.u32 %v2774, 4294901760
      %3839 = vmatprep.subr.mxu0 %v3838
      %v3840 = vand.u32 %v2670, 4294901760
      %3841 = vmatpush1.msra.mxu0 %v3840
      %3842 = vmatprep.subr.mxu0 0.0
      %3843 = vmatpush2.msra.mxu0 0.0
      %3844 = vmatprep.subr.mxu0 0.0
      %3845 = vmatpush2.msra.mxu0 0.0
      %3846 = vmatprep.subr.mxu0 0.0
      %3847 = vmatpush2.msra.mxu0 0.0
      %3848 = vmatprep.subr.mxu0 0.0
      %3849 = vmatpush2.msra.mxu0 0.0
      %3850 = vmatprep.subr.mxu0 0.0
      %3851 = vmatpush2.msra.mxu0 0.0
      %3852 = vmatprep.subr.mxu0 0.0
      %3853 = vmatpush2.msra.mxu0 0.0
      %3854 = vmatprep.subr.mxu0 0.0
      %3855 = vmatpush2.msra.mxu0 0.0
      %3856 = vmatprep.subr.mxu0 0.0
      %3857 = vmatpush2.msra.mxu0 0.0
      %3858 = vmatprep.subr.mxu0 0.0
      %3859 = vmatpush2.msra.mxu0 0.0
      %3860 = vmatprep.subr.mxu0 0.0
      %3861 = vmatpush2.msra.mxu0 0.0
      %3862 = vmatprep.subr.mxu0 0.0
      %3863 = vmatpush2.msra.mxu0 0.0
      %3864 = vmatprep.subr.mxu0 0.0
      %3865 = vmatpush2.msra.mxu0 0.0
      %3866 = vmatprep.subr.mxu0 0.0
      %3867 = vmatpush2.msra.mxu0 0.0
      %3868 = vmatprep.subr.mxu0 0.0
      %3869 = vmatpush2.msra.mxu0 0.0
      %3870 = vmatprep.subr.mxu0 0.0
      %3871 = vmatpush2.msra.mxu0 0.0
      %3872 = vmatprep.subr.mxu0 0.0
      %3873 = vmatpush2.msra.mxu0 0.0
      %3874 = vmatprep.mubr.f32.mxu0 0.0
      %v3875 = vand.u32 %v3428, 4294901760
      %v3876 = vsub.f32 %v3428, %v3875
      %v3877 = vand.u32 %v3876, 4294901760
      %3878 = vmatmul.mubr.f32.gmra.mxu0 %v3877
      %v3879 = vpop.f32.mrf.mxu0
      %v3880 = vadd.f32 %v3774, %v3879
      %v3881 = vpop.f32.mrf.mxu0
      %v3882 = vadd.f32 %v3776, %v3881
      %3883 = vmatprep.mubr.f32.mxu0 0.0
      %v3884 = vand.u32 %v3431, 4294901760
      %v3885 = vsub.f32 %v3431, %v3884
      %v3886 = vand.u32 %v3885, 4294901760
      %3887 = vmatmul.mubr.f32.gmra.mxu0 %v3886
      %v3888 = vpop.f32.mrf.mxu0
      %v3889 = vadd.f32 %v3782, %v3888
      %v3890 = vpop.f32.mrf.mxu0
      %v3891 = vadd.f32 %v3784, %v3890
      %3892 = vmatprep.mubr.f32.mxu0 0.0
      %v3893 = vand.u32 %v3434, 4294901760
      %v3894 = vsub.f32 %v3434, %v3893
      %v3895 = vand.u32 %v3894, 4294901760
      %3896 = vmatmul.mubr.f32.gmra.mxu0 %v3895
      %v3897 = vpop.f32.mrf.mxu0
      %v3898 = vadd.f32 %v3790, %v3897
      %v3899 = vpop.f32.mrf.mxu0
      %v3900 = vadd.f32 %v3792, %v3899
      %3901 = vmatprep.mubr.f32.mxu0 0.0
      %v3902 = vand.u32 %v3437, 4294901760
      %v3903 = vsub.f32 %v3437, %v3902
      %v3904 = vand.u32 %v3903, 4294901760
      %3905 = vmatmul.mubr.f32.gmra.mxu0 %v3904
      %v3906 = vpop.f32.mrf.mxu0
      %v3907 = vadd.f32 %v3798, %v3906
      %v3908 = vpop.f32.mrf.mxu0
      %v3909 = vadd.f32 %v3800, %v3908
      %3910 = vdwg.mxu0
      %3911 = vmatprep.subr.mxu0 0.0
      %3912 = vmatpush1.msra.mxu0 0.0
      %3913 = vmatprep.subr.mxu0 0.0
      %3914 = vmatpush1.msra.mxu0 0.0
      %3915 = vmatprep.subr.mxu0 0.0
      %3916 = vmatpush1.msra.mxu0 0.0
      %3917 = vmatprep.subr.mxu0 0.0
      %3918 = vmatpush1.msra.mxu0 0.0
      %3919 = vmatprep.subr.mxu0 0.0
      %3920 = vmatpush1.msra.mxu0 0.0
      %3921 = vmatprep.subr.mxu0 0.0
      %3922 = vmatpush1.msra.mxu0 0.0
      %3923 = vmatprep.subr.mxu0 0.0
      %3924 = vmatpush1.msra.mxu0 0.0
      %3925 = vmatprep.subr.mxu0 0.0
      %3926 = vmatpush1.msra.mxu0 0.0
      %3927 = vmatprep.subr.mxu0 0.0
      %3928 = vmatpush1.msra.mxu0 0.0
      %3929 = vmatprep.subr.mxu0 0.0
      %3930 = vmatpush1.msra.mxu0 0.0
      %3931 = vmatprep.subr.mxu0 0.0
      %3932 = vmatpush1.msra.mxu0 0.0
      %3933 = vmatprep.subr.mxu0 0.0
      %3934 = vmatpush1.msra.mxu0 0.0
      %v3935 = vand.u32 %v3398, 4294901760
      %v3936 = vsub.f32 %v3398, %v3935
      %v3937 = vand.u32 %v3936, 4294901760
      %3938 = vmatprep.subr.mxu0 %v3937
      %v3939 = vand.u32 %v3294, 4294901760
      %v3940 = vsub.f32 %v3294, %v3939
      %v3941 = vand.u32 %v3940, 4294901760
      %3942 = vmatpush1.msra.mxu0 %v3941
      %v3943 = vand.u32 %v3190, 4294901760
      %v3944 = vsub.f32 %v3190, %v3943
      %v3945 = vand.u32 %v3944, 4294901760
      %3946 = vmatprep.subr.mxu0 %v3945
      %v3947 = vand.u32 %v3086, 4294901760
      %v3948 = vsub.f32 %v3086, %v3947
      %v3949 = vand.u32 %v3948, 4294901760
      %3950 = vmatpush1.msra.mxu0 %v3949
      %v3951 = vand.u32 %v2982, 4294901760
      %v3952 = vsub.f32 %v2982, %v3951
      %v3953 = vand.u32 %v3952, 4294901760
      %3954 = vmatprep.subr.mxu0 %v3953
      %v3955 = vand.u32 %v2878, 4294901760
      %v3956 = vsub.f32 %v2878, %v3955
      %v3957 = vand.u32 %v3956, 4294901760
      %3958 = vmatpush1.msra.mxu0 %v3957
      %v3959 = vand.u32 %v2774, 4294901760
      %v3960 = vsub.f32 %v2774, %v3959
      %v3961 = vand.u32 %v3960, 4294901760
      %3962 = vmatprep.subr.mxu0 %v3961
      %v3963 = vand.u32 %v2670, 4294901760
      %v3964 = vsub.f32 %v2670, %v3963
      %v3965 = vand.u32 %v3964, 4294901760
      %3966 = vmatpush1.msra.mxu0 %v3965
      %3967 = vmatprep.subr.mxu0 0.0
      %3968 = vmatpush2.msra.mxu0 0.0
      %3969 = vmatprep.subr.mxu0 0.0
      %3970 = vmatpush2.msra.mxu0 0.0
      %3971 = vmatprep.subr.mxu0 0.0
      %3972 = vmatpush2.msra.mxu0 0.0
      %3973 = vmatprep.subr.mxu0 0.0
      %3974 = vmatpush2.msra.mxu0 0.0
      %3975 = vmatprep.subr.mxu0 0.0
      %3976 = vmatpush2.msra.mxu0 0.0
      %3977 = vmatprep.subr.mxu0 0.0
      %3978 = vmatpush2.msra.mxu0 0.0
      %3979 = vmatprep.subr.mxu0 0.0
      %3980 = vmatpush2.msra.mxu0 0.0
      %3981 = vmatprep.subr.mxu0 0.0
      %3982 = vmatpush2.msra.mxu0 0.0
      %3983 = vmatprep.subr.mxu0 0.0
      %3984 = vmatpush2.msra.mxu0 0.0
      %3985 = vmatprep.subr.mxu0 0.0
      %3986 = vmatpush2.msra.mxu0 0.0
      %3987 = vmatprep.subr.mxu0 0.0
      %3988 = vmatpush2.msra.mxu0 0.0
      %3989 = vmatprep.subr.mxu0 0.0
      %3990 = vmatpush2.msra.mxu0 0.0
      %3991 = vmatprep.subr.mxu0 0.0
      %3992 = vmatpush2.msra.mxu0 0.0
      %3993 = vmatprep.subr.mxu0 0.0
      %3994 = vmatpush2.msra.mxu0 0.0
      %3995 = vmatprep.subr.mxu0 0.0
      %3996 = vmatpush2.msra.mxu0 0.0
      %3997 = vmatprep.subr.mxu0 0.0
      %3998 = vmatpush2.msra.mxu0 0.0
      %3999 = vmatprep.mubr.f32.mxu0 0.0
      %v4000 = vand.u32 %v3428, 4294901760
      %4001 = vmatmul.mubr.f32.gmra.mxu0 %v4000
      %v4002 = vpop.f32.mrf.mxu0
      %v4003 = vadd.f32 %v3880, %v4002
      %v4004 = vpop.f32.mrf.mxu0
      %v4005 = vadd.f32 %v3882, %v4004
      %4006 = vmatprep.mubr.f32.mxu0 0.0
      %v4007 = vand.u32 %v3431, 4294901760
      %4008 = vmatmul.mubr.f32.gmra.mxu0 %v4007
      %v4009 = vpop.f32.mrf.mxu0
      %v4010 = vadd.f32 %v3889, %v4009
      %v4011 = vpop.f32.mrf.mxu0
      %v4012 = vadd.f32 %v3891, %v4011
      %4013 = vmatprep.mubr.f32.mxu0 0.0
      %v4014 = vand.u32 %v3434, 4294901760
      %4015 = vmatmul.mubr.f32.gmra.mxu0 %v4014
      %v4016 = vpop.f32.mrf.mxu0
      %v4017 = vadd.f32 %v3898, %v4016
      %v4018 = vpop.f32.mrf.mxu0
      %v4019 = vadd.f32 %v3900, %v4018
      %4020 = vmatprep.mubr.f32.mxu0 0.0
      %v4021 = vand.u32 %v3437, 4294901760
      %4022 = vmatmul.mubr.f32.gmra.mxu0 %v4021
      %v4023 = vpop.f32.mrf.mxu0
      %v4024 = vadd.f32 %v3907, %v4023
      %v4025 = vpop.f32.mrf.mxu0
      %v4026 = vadd.f32 %v3909, %v4025
      %4027 = vdwg.mxu0
      %4028 = vmatprep.subr.mxu0 0.0
      %4029 = vmatpush1.msra.mxu0 0.0
      %4030 = vmatprep.subr.mxu0 0.0
      %4031 = vmatpush1.msra.mxu0 0.0
      %4032 = vmatprep.subr.mxu0 0.0
      %4033 = vmatpush1.msra.mxu0 0.0
      %4034 = vmatprep.subr.mxu0 0.0
      %4035 = vmatpush1.msra.mxu0 0.0
      %4036 = vmatprep.subr.mxu0 0.0
      %4037 = vmatpush1.msra.mxu0 0.0
      %4038 = vmatprep.subr.mxu0 0.0
      %4039 = vmatpush1.msra.mxu0 0.0
      %4040 = vmatprep.subr.mxu0 0.0
      %4041 = vmatpush1.msra.mxu0 0.0
      %4042 = vmatprep.subr.mxu0 0.0
      %4043 = vmatpush1.msra.mxu0 0.0
      %4044 = vmatprep.subr.mxu0 0.0
      %4045 = vmatpush1.msra.mxu0 0.0
      %4046 = vmatprep.subr.mxu0 0.0
      %4047 = vmatpush1.msra.mxu0 0.0
      %4048 = vmatprep.subr.mxu0 0.0
      %4049 = vmatpush1.msra.mxu0 0.0
      %4050 = vmatprep.subr.mxu0 0.0
      %4051 = vmatpush1.msra.mxu0 0.0
      %v4052 = vand.u32 %v3398, 4294901760
      %4053 = vmatprep.subr.mxu0 %v4052
      %v4054 = vand.u32 %v3294, 4294901760
      %4055 = vmatpush1.msra.mxu0 %v4054
      %v4056 = vand.u32 %v3190, 4294901760
      %4057 = vmatprep.subr.mxu0 %v4056
      %v4058 = vand.u32 %v3086, 4294901760
      %4059 = vmatpush1.msra.mxu0 %v4058
      %v4060 = vand.u32 %v2982, 4294901760
      %4061 = vmatprep.subr.mxu0 %v4060
      %v4062 = vand.u32 %v2878, 4294901760
      %4063 = vmatpush1.msra.mxu0 %v4062
      %v4064 = vand.u32 %v2774, 4294901760
      %4065 = vmatprep.subr.mxu0 %v4064
      %v4066 = vand.u32 %v2670, 4294901760
      %4067 = vmatpush1.msra.mxu0 %v4066
      %4068 = vmatprep.subr.mxu0 0.0
      %4069 = vmatpush2.msra.mxu0 0.0
      %4070 = vmatprep.subr.mxu0 0.0
      %4071 = vmatpush2.msra.mxu0 0.0
      %4072 = vmatprep.subr.mxu0 0.0
      %4073 = vmatpush2.msra.mxu0 0.0
      %4074 = vmatprep.subr.mxu0 0.0
      %4075 = vmatpush2.msra.mxu0 0.0
      %4076 = vmatprep.subr.mxu0 0.0
      %4077 = vmatpush2.msra.mxu0 0.0
      %4078 = vmatprep.subr.mxu0 0.0
      %4079 = vmatpush2.msra.mxu0 0.0
      %4080 = vmatprep.subr.mxu0 0.0
      %4081 = vmatpush2.msra.mxu0 0.0
      %4082 = vmatprep.subr.mxu0 0.0
      %4083 = vmatpush2.msra.mxu0 0.0
      %4084 = vmatprep.subr.mxu0 0.0
      %4085 = vmatpush2.msra.mxu0 0.0
      %4086 = vmatprep.subr.mxu0 0.0
      %4087 = vmatpush2.msra.mxu0 0.0
      %4088 = vmatprep.subr.mxu0 0.0
      %4089 = vmatpush2.msra.mxu0 0.0
      %4090 = vmatprep.subr.mxu0 0.0
      %4091 = vmatpush2.msra.mxu0 0.0
      %4092 = vmatprep.subr.mxu0 0.0
      %4093 = vmatpush2.msra.mxu0 0.0
      %4094 = vmatprep.subr.mxu0 0.0
      %4095 = vmatpush2.msra.mxu0 0.0
      %4096 = vmatprep.subr.mxu0 0.0
      %4097 = vmatpush2.msra.mxu0 0.0
      %4098 = vmatprep.subr.mxu0 0.0
      %4099 = vmatpush2.msra.mxu0 0.0
      %4100 = vmatprep.mubr.f32.mxu0 0.0
      %v4101 = vand.u32 %v3428, 4294901760
      %4102 = vmatmul.mubr.f32.gmra.mxu0 %v4101
      %v4103 = vpop.f32.mrf.mxu0
      %v4104 = vadd.f32 %v4003, %v4103
      %v4105 = vpop.f32.mrf.mxu0
      %v4106 = vadd.f32 %v4005, %v4105
      %4107 = vmatprep.mubr.f32.mxu0 0.0
      %v4108 = vand.u32 %v3431, 4294901760
      %4109 = vmatmul.mubr.f32.gmra.mxu0 %v4108
      %v4110 = vpop.f32.mrf.mxu0
      %v4111 = vadd.f32 %v4010, %v4110
      %v4112 = vpop.f32.mrf.mxu0
      %v4113 = vadd.f32 %v4012, %v4112
      %4114 = vmatprep.mubr.f32.mxu0 0.0
      %v4115 = vand.u32 %v3434, 4294901760
      %4116 = vmatmul.mubr.f32.gmra.mxu0 %v4115
      %v4117 = vpop.f32.mrf.mxu0
      %v4118 = vadd.f32 %v4017, %v4117
      %v4119 = vpop.f32.mrf.mxu0
      %v4120 = vadd.f32 %v4019, %v4119
      %4121 = vmatprep.mubr.f32.mxu0 0.0
      %v4122 = vand.u32 %v3437, 4294901760
      %4123 = vmatmul.mubr.f32.gmra.mxu0 %v4122
      %v4124 = vpop.f32.mrf.mxu0
      %v4125 = vadd.f32 %v4024, %v4124
      %v4126 = vpop.f32.mrf.mxu0
      %v4127 = vadd.f32 %v4026, %v4126
      %4128 = vdwg.mxu0
      %v4129 = vand.u32 2147483647, %v4104
      %vm4130 = vcmp.le.f32.partialorder %v4129, 0.7853982
      %vm4131 = vcmp.lt.s32.totalorder %v4104, 0
      %v4132 = vand.u32 %v4104, 2139095040
      %v4133 = vshrl.u32 %v4132, 23
      %v4134 = vsub.s32 %v4133, 127
      %v4135 = vand.u32 2147483647, %v4104
      %v4136 = vand.u32 %v4135, 8388607
      %v4137 = vor.u32 %v4136, 8388608
      %v4138 = vsub.s32 0, %v4137
      %v4139 = vadd.s32 %v4134, 1
      %vm4140 = vcmp.gt.s32.totalorder %v4139, 0
      %v4141 = vsel %vm4140, %v4139, 0
      %v4142 = vshrl.u32 %v4141, 5
      %v4143 = vand.u32 %v4141, 31
      %v4144 = vsub.s32 32, %v4143
      %v4145 = vshrl.u32 683565275, %v4144
      %v4146 = vshll.u32 683565275, %v4143
      %v4147 = vshrl.u32 2475754826, %v4144
      %v4148 = vor.u32 %v4146, %v4147
      %v4149 = vshll.u32 2475754826, %v4143
      %v4150 = vshrl.u32 2131351028, %v4144
      %v4151 = vor.u32 %v4149, %v4150
      %v4152 = vshll.u32 2131351028, %v4143
      %v4153 = vshrl.u32 2102212464, %v4144
      %v4154 = vor.u32 %v4152, %v4153
      %v4155 = vshll.u32 2102212464, %v4143
      %v4156 = vshrl.u32 920167782, %v4144
      %v4157 = vor.u32 %v4155, %v4156
      %v4158 = vshll.u32 920167782, %v4143
      %v4159 = vshrl.u32 1326507024, %v4144
      %v4160 = vor.u32 %v4158, %v4159
      %vm4161 = vcmp.lt.s32.totalorder %v4142, 1
      %vm4162 = vcmp.lt.s32.totalorder %v4142, 2
      %vm4163 = vcmp.lt.s32.totalorder %v4142, 3
      %vm4164 = vcmp.lt.s32.totalorder %v4142, 4
      %v4165 = vsel %vm4161, %v4145, %v4148
      %v4166 = vsel %vm4164, %v4154, 2102212464
      %v4167 = vsel %vm4163, %v4151, %v4166
      %v4168 = vsel %vm4162, %v4165, %v4167
      %v4169 = vsel %vm4161, %v4148, %v4151
      %v4170 = vsel %vm4164, %v4157, 920167782
      %v4171 = vsel %vm4163, %v4154, %v4170
      %v4172 = vsel %vm4162, %v4169, %v4171
      %v4173 = vsel %vm4161, %v4151, %v4154
      %v4174 = vsel %vm4164, %v4160, 1326507024
      %v4175 = vsel %vm4163, %v4157, %v4174
      %v4176 = vsel %vm4162, %v4173, %v4175
      %v4177 = vshll.u32 %v4137, 8
      %v4178 = vmul.u32.u64.compose %v4177, %v4176
      %v4179 = vextract.low.u32 %v4178
      %v4180 = vextract.high.u32 %v4178
      %v4181 = vmul.u32.u64.compose %v4177, %v4172
      %v4182 = vextract.low.u32 %v4181
      %v4183 = vextract.high.u32 %v4181
      %v4184 = vmul.u32 %v4177, %v4168
      %v4185 = vadd.s32 %v4180, %v4182
      %vm4186 = vc.u32 %v4180, %v4182
      %v4187 = vadd.s32 %v4183, 1
      %v4188 = vsel %vm4186, %v4187, %v4183
      %v4189 = vadd.s32 %v4184, %v4188
      %v4190 = vadd.s32 %v4189, 536870912
      %v4191 = vshrl.u32 %v4190, 30
      %v4192 = vshll.u32 %v4191, 30
      %v4193 = vsub.s32 %v4189, %v4192
      %vm4194 = vcmp.lt.s32.totalorder %v4193, 0
      %v4195 = vsub.s32 0, %v4193
      %v4196 = vsel %vm4194, %v4195, %v4193
      %v4197 = vclz %v4196
      %v4198 = vsub.s32 %v4197, 2
      %vm4199 = vcmp.gt.s32.totalorder 0, %v4198
      %v4200 = vsel %vm4199, 0, %v4198
      %v4201 = vsub.s32 32, %v4200
      %v4202 = vshll.u32 %v4193, %v4200
      %v4203 = vshrl.u32 %v4185, %v4201
      %v4204 = vor.u32 %v4202, %v4203
      %v4205 = vsub.s32 4294967266, %v4200
      %v4206 = vadd.s32 %v4205, 127
      %v4207 = vshll.u32 %v4206, 23
      %v4208 = vor.u32 4788187, %v4207
      %v4209 = vand.u32 2147483647, %v4208
      %v4211 = vcvt.s32.f32 %v4204
      %v4212 = vmul.f32 %v4211, %v4209
      %v4213 = vxor.u32 %v4212, 2147483648
      %v4214 = vsel %vm4131, %v4213, %v4212
      %v4215 = vsub.s32 4, %v4191
      %v4216 = vsel %vm4131, %v4215, %v4191
      %v4217 = vsel %vm4130, %v4104, %v4214
      %v4218 = vsel %vm4130, 0, %v4216
      %v4219 = vcosq.f32.pop %v4217
      %v4220 = vsinq.f32.pop %v4217
      %vm4221 = vweird.f32 %v4104
      %v4222 = vadd.s32 %v4218, 3
      %v4223 = vand.u32 %v4222, 3
      %vm4224 = vcmp.lt.s32.totalorder %v4223, 2
      %vm4225 = vcmp.eq.s32.totalorder %v4223, 0
      %v4226 = vxor.u32 %v4220, 2147483648
      %v4227 = vsel %vm4225, %v4219, %v4226
      %vm4228 = vcmp.eq.s32.totalorder %v4223, 2
      %v4229 = vxor.u32 %v4219, 2147483648
      %v4230 = vsel %vm4228, %v4229, %v4220
      %v4231 = vsel %vm4224, %v4227, %v4230
      %v4232 = vsel %vm4221, nan, %v4231
      %v4233 = vand.u32 2147483647, %v4106
      %vm4234 = vcmp.le.f32.partialorder %v4233, 0.7853982
      %vm4235 = vcmp.lt.s32.totalorder %v4106, 0
      %v4236 = vand.u32 %v4106, 2139095040
      %v4237 = vshrl.u32 %v4236, 23
      %v4238 = vsub.s32 %v4237, 127
      %v4239 = vand.u32 2147483647, %v4106
      %v4240 = vand.u32 %v4239, 8388607
      %v4241 = vor.u32 %v4240, 8388608
      %v4242 = vsub.s32 0, %v4241
      %v4243 = vadd.s32 %v4238, 1
      %vm4244 = vcmp.gt.s32.totalorder %v4243, 0
      %v4245 = vsel %vm4244, %v4243, 0
      %v4246 = vshrl.u32 %v4245, 5
      %v4247 = vand.u32 %v4245, 31
      %v4248 = vsub.s32 32, %v4247
      %v4249 = vshrl.u32 683565275, %v4248
      %v4250 = vshll.u32 683565275, %v4247
      %v4251 = vshrl.u32 2475754826, %v4248
      %v4252 = vor.u32 %v4250, %v4251
      %v4253 = vshll.u32 2475754826, %v4247
      %v4254 = vshrl.u32 2131351028, %v4248
      %v4255 = vor.u32 %v4253, %v4254
      %v4256 = vshll.u32 2131351028, %v4247
      %v4257 = vshrl.u32 2102212464, %v4248
      %v4258 = vor.u32 %v4256, %v4257
      %v4259 = vshll.u32 2102212464, %v4247
      %v4260 = vshrl.u32 920167782, %v4248
      %v4261 = vor.u32 %v4259, %v4260
      %v4262 = vshll.u32 920167782, %v4247
      %v4263 = vshrl.u32 1326507024, %v4248
      %v4264 = vor.u32 %v4262, %v4263
      %vm4265 = vcmp.lt.s32.totalorder %v4246, 1
      %vm4266 = vcmp.lt.s32.totalorder %v4246, 2
      %vm4267 = vcmp.lt.s32.totalorder %v4246, 3
      %vm4268 = vcmp.lt.s32.totalorder %v4246, 4
      %v4269 = vsel %vm4265, %v4249, %v4252
      %v4270 = vsel %vm4268, %v4258, 2102212464
      %v4271 = vsel %vm4267, %v4255, %v4270
      %v4272 = vsel %vm4266, %v4269, %v4271
      %v4273 = vsel %vm4265, %v4252, %v4255
      %v4274 = vsel %vm4268, %v4261, 920167782
      %v4275 = vsel %vm4267, %v4258, %v4274
      %v4276 = vsel %vm4266, %v4273, %v4275
      %v4277 = vsel %vm4265, %v4255, %v4258
      %v4278 = vsel %vm4268, %v4264, 1326507024
      %v4279 = vsel %vm4267, %v4261, %v4278
      %v4280 = vsel %vm4266, %v4277, %v4279
      %v4281 = vshll.u32 %v4241, 8
      %v4282 = vmul.u32.u64.compose %v4281, %v4280
      %v4283 = vextract.low.u32 %v4282
      %v4284 = vextract.high.u32 %v4282
      %v4285 = vmul.u32.u64.compose %v4281, %v4276
      %v4286 = vextract.low.u32 %v4285
      %v4287 = vextract.high.u32 %v4285
      %v4288 = vmul.u32 %v4281, %v4272
      %v4289 = vadd.s32 %v4284, %v4286
      %vm4290 = vc.u32 %v4284, %v4286
      %v4291 = vadd.s32 %v4287, 1
      %v4292 = vsel %vm4290, %v4291, %v4287
      %v4293 = vadd.s32 %v4288, %v4292
      %v4294 = vadd.s32 %v4293, 536870912
      %v4295 = vshrl.u32 %v4294, 30
      %v4296 = vshll.u32 %v4295, 30
      %v4297 = vsub.s32 %v4293, %v4296
      %vm4298 = vcmp.lt.s32.totalorder %v4297, 0
      %v4299 = vsub.s32 0, %v4297
      %v4300 = vsel %vm4298, %v4299, %v4297
      %v4301 = vclz %v4300
      %v4302 = vsub.s32 %v4301, 2
      %vm4303 = vcmp.gt.s32.totalorder 0, %v4302
      %v4304 = vsel %vm4303, 0, %v4302
      %v4305 = vsub.s32 32, %v4304
      %v4306 = vshll.u32 %v4297, %v4304
      %v4307 = vshrl.u32 %v4289, %v4305
      %v4308 = vor.u32 %v4306, %v4307
      %v4309 = vsub.s32 4294967266, %v4304
      %v4310 = vadd.s32 %v4309, 127
      %v4311 = vshll.u32 %v4310, 23
      %v4312 = vor.u32 4788187, %v4311
      %v4313 = vand.u32 2147483647, %v4312
      %v4315 = vcvt.s32.f32 %v4308
      %v4316 = vmul.f32 %v4315, %v4313
      %v4317 = vxor.u32 %v4316, 2147483648
      %v4318 = vsel %vm4235, %v4317, %v4316
      %v4319 = vsub.s32 4, %v4295
      %v4320 = vsel %vm4235, %v4319, %v4295
      %v4321 = vsel %vm4234, %v4106, %v4318
      %v4322 = vsel %vm4234, 0, %v4320
      %v4323 = vcosq.f32.pop %v4321
      %v4324 = vsinq.f32.pop %v4321
      %vm4325 = vweird.f32 %v4106
      %v4326 = vadd.s32 %v4322, 3
      %v4327 = vand.u32 %v4326, 3
      %vm4328 = vcmp.lt.s32.totalorder %v4327, 2
      %vm4329 = vcmp.eq.s32.totalorder %v4327, 0
      %v4330 = vxor.u32 %v4324, 2147483648
      %v4331 = vsel %vm4329, %v4323, %v4330
      %vm4332 = vcmp.eq.s32.totalorder %v4327, 2
      %v4333 = vxor.u32 %v4323, 2147483648
      %v4334 = vsel %vm4332, %v4333, %v4324
      %v4335 = vsel %vm4328, %v4331, %v4334
      %v4336 = vsel %vm4325, nan, %v4335
      %v4337 = vand.u32 2147483647, %v4111
      %vm4338 = vcmp.le.f32.partialorder %v4337, 0.7853982
      %vm4339 = vcmp.lt.s32.totalorder %v4111, 0
      %v4340 = vand.u32 %v4111, 2139095040
      %v4341 = vshrl.u32 %v4340, 23
      %v4342 = vsub.s32 %v4341, 127
      %v4343 = vand.u32 2147483647, %v4111
      %v4344 = vand.u32 %v4343, 8388607
      %v4345 = vor.u32 %v4344, 8388608
      %v4346 = vsub.s32 0, %v4345
      %v4347 = vadd.s32 %v4342, 1
      %vm4348 = vcmp.gt.s32.totalorder %v4347, 0
      %v4349 = vsel %vm4348, %v4347, 0
      %v4350 = vshrl.u32 %v4349, 5
      %v4351 = vand.u32 %v4349, 31
      %v4352 = vsub.s32 32, %v4351
      %v4353 = vshrl.u32 683565275, %v4352
      %v4354 = vshll.u32 683565275, %v4351
      %v4355 = vshrl.u32 2475754826, %v4352
      %v4356 = vor.u32 %v4354, %v4355
      %v4357 = vshll.u32 2475754826, %v4351
      %v4358 = vshrl.u32 2131351028, %v4352
      %v4359 = vor.u32 %v4357, %v4358
      %v4360 = vshll.u32 2131351028, %v4351
      %v4361 = vshrl.u32 2102212464, %v4352
      %v4362 = vor.u32 %v4360, %v4361
      %v4363 = vshll.u32 2102212464, %v4351
      %v4364 = vshrl.u32 920167782, %v4352
      %v4365 = vor.u32 %v4363, %v4364
      %v4366 = vshll.u32 920167782, %v4351
      %v4367 = vshrl.u32 1326507024, %v4352
      %v4368 = vor.u32 %v4366, %v4367
      %vm4369 = vcmp.lt.s32.totalorder %v4350, 1
      %vm4370 = vcmp.lt.s32.totalorder %v4350, 2
      %vm4371 = vcmp.lt.s32.totalorder %v4350, 3
      %vm4372 = vcmp.lt.s32.totalorder %v4350, 4
      %v4373 = vsel %vm4369, %v4353, %v4356
      %v4374 = vsel %vm4372, %v4362, 2102212464
      %v4375 = vsel %vm4371, %v4359, %v4374
      %v4376 = vsel %vm4370, %v4373, %v4375
      %v4377 = vsel %vm4369, %v4356, %v4359
      %v4378 = vsel %vm4372, %v4365, 920167782
      %v4379 = vsel %vm4371, %v4362, %v4378
      %v4380 = vsel %vm4370, %v4377, %v4379
      %v4381 = vsel %vm4369, %v4359, %v4362
      %v4382 = vsel %vm4372, %v4368, 1326507024
      %v4383 = vsel %vm4371, %v4365, %v4382
      %v4384 = vsel %vm4370, %v4381, %v4383
      %v4385 = vshll.u32 %v4345, 8
      %v4386 = vmul.u32.u64.compose %v4385, %v4384
      %v4387 = vextract.low.u32 %v4386
      %v4388 = vextract.high.u32 %v4386
      %v4389 = vmul.u32.u64.compose %v4385, %v4380
      %v4390 = vextract.low.u32 %v4389
      %v4391 = vextract.high.u32 %v4389
      %v4392 = vmul.u32 %v4385, %v4376
      %v4393 = vadd.s32 %v4388, %v4390
      %vm4394 = vc.u32 %v4388, %v4390
      %v4395 = vadd.s32 %v4391, 1
      %v4396 = vsel %vm4394, %v4395, %v4391
      %v4397 = vadd.s32 %v4392, %v4396
      %v4398 = vadd.s32 %v4397, 536870912
      %v4399 = vshrl.u32 %v4398, 30
      %v4400 = vshll.u32 %v4399, 30
      %v4401 = vsub.s32 %v4397, %v4400
      %vm4402 = vcmp.lt.s32.totalorder %v4401, 0
      %v4403 = vsub.s32 0, %v4401
      %v4404 = vsel %vm4402, %v4403, %v4401
      %v4405 = vclz %v4404
      %v4406 = vsub.s32 %v4405, 2
      %vm4407 = vcmp.gt.s32.totalorder 0, %v4406
      %v4408 = vsel %vm4407, 0, %v4406
      %v4409 = vsub.s32 32, %v4408
      %v4410 = vshll.u32 %v4401, %v4408
      %v4411 = vshrl.u32 %v4393, %v4409
      %v4412 = vor.u32 %v4410, %v4411
      %v4413 = vsub.s32 4294967266, %v4408
      %v4414 = vadd.s32 %v4413, 127
      %v4415 = vshll.u32 %v4414, 23
      %v4416 = vor.u32 4788187, %v4415
      %v4417 = vand.u32 2147483647, %v4416
      %v4419 = vcvt.s32.f32 %v4412
      %v4420 = vmul.f32 %v4419, %v4417
      %v4421 = vxor.u32 %v4420, 2147483648
      %v4422 = vsel %vm4339, %v4421, %v4420
      %v4423 = vsub.s32 4, %v4399
      %v4424 = vsel %vm4339, %v4423, %v4399
      %v4425 = vsel %vm4338, %v4111, %v4422
      %v4426 = vsel %vm4338, 0, %v4424
      %v4427 = vcosq.f32.pop %v4425
      %v4428 = vsinq.f32.pop %v4425
      %vm4429 = vweird.f32 %v4111
      %v4430 = vadd.s32 %v4426, 3
      %v4431 = vand.u32 %v4430, 3
      %vm4432 = vcmp.lt.s32.totalorder %v4431, 2
      %vm4433 = vcmp.eq.s32.totalorder %v4431, 0
      %v4434 = vxor.u32 %v4428, 2147483648
      %v4435 = vsel %vm4433, %v4427, %v4434
      %vm4436 = vcmp.eq.s32.totalorder %v4431, 2
      %v4437 = vxor.u32 %v4427, 2147483648
      %v4438 = vsel %vm4436, %v4437, %v4428
      %v4439 = vsel %vm4432, %v4435, %v4438
      %v4440 = vsel %vm4429, nan, %v4439
      %v4441 = vand.u32 2147483647, %v4113
      %vm4442 = vcmp.le.f32.partialorder %v4441, 0.7853982
      %vm4443 = vcmp.lt.s32.totalorder %v4113, 0
      %v4444 = vand.u32 %v4113, 2139095040
      %v4445 = vshrl.u32 %v4444, 23
      %v4446 = vsub.s32 %v4445, 127
      %v4447 = vand.u32 2147483647, %v4113
      %v4448 = vand.u32 %v4447, 8388607
      %v4449 = vor.u32 %v4448, 8388608
      %v4450 = vsub.s32 0, %v4449
      %v4451 = vadd.s32 %v4446, 1
      %vm4452 = vcmp.gt.s32.totalorder %v4451, 0
      %v4453 = vsel %vm4452, %v4451, 0
      %v4454 = vshrl.u32 %v4453, 5
      %v4455 = vand.u32 %v4453, 31
      %v4456 = vsub.s32 32, %v4455
      %v4457 = vshrl.u32 683565275, %v4456
      %v4458 = vshll.u32 683565275, %v4455
      %v4459 = vshrl.u32 2475754826, %v4456
      %v4460 = vor.u32 %v4458, %v4459
      %v4461 = vshll.u32 2475754826, %v4455
      %v4462 = vshrl.u32 2131351028, %v4456
      %v4463 = vor.u32 %v4461, %v4462
      %v4464 = vshll.u32 2131351028, %v4455
      %v4465 = vshrl.u32 2102212464, %v4456
      %v4466 = vor.u32 %v4464, %v4465
      %v4467 = vshll.u32 2102212464, %v4455
      %v4468 = vshrl.u32 920167782, %v4456
      %v4469 = vor.u32 %v4467, %v4468
      %v4470 = vshll.u32 920167782, %v4455
      %v4471 = vshrl.u32 1326507024, %v4456
      %v4472 = vor.u32 %v4470, %v4471
      %vm4473 = vcmp.lt.s32.totalorder %v4454, 1
      %vm4474 = vcmp.lt.s32.totalorder %v4454, 2
      %vm4475 = vcmp.lt.s32.totalorder %v4454, 3
      %vm4476 = vcmp.lt.s32.totalorder %v4454, 4
      %v4477 = vsel %vm4473, %v4457, %v4460
      %v4478 = vsel %vm4476, %v4466, 2102212464
      %v4479 = vsel %vm4475, %v4463, %v4478
      %v4480 = vsel %vm4474, %v4477, %v4479
      %v4481 = vsel %vm4473, %v4460, %v4463
      %v4482 = vsel %vm4476, %v4469, 920167782
      %v4483 = vsel %vm4475, %v4466, %v4482
      %v4484 = vsel %vm4474, %v4481, %v4483
      %v4485 = vsel %vm4473, %v4463, %v4466
      %v4486 = vsel %vm4476, %v4472, 1326507024
      %v4487 = vsel %vm4475, %v4469, %v4486
      %v4488 = vsel %vm4474, %v4485, %v4487
      %v4489 = vshll.u32 %v4449, 8
      %v4490 = vmul.u32.u64.compose %v4489, %v4488
      %v4491 = vextract.low.u32 %v4490
      %v4492 = vextract.high.u32 %v4490
      %v4493 = vmul.u32.u64.compose %v4489, %v4484
      %v4494 = vextract.low.u32 %v4493
      %v4495 = vextract.high.u32 %v4493
      %v4496 = vmul.u32 %v4489, %v4480
      %v4497 = vadd.s32 %v4492, %v4494
      %vm4498 = vc.u32 %v4492, %v4494
      %v4499 = vadd.s32 %v4495, 1
      %v4500 = vsel %vm4498, %v4499, %v4495
      %v4501 = vadd.s32 %v4496, %v4500
      %v4502 = vadd.s32 %v4501, 536870912
      %v4503 = vshrl.u32 %v4502, 30
      %v4504 = vshll.u32 %v4503, 30
      %v4505 = vsub.s32 %v4501, %v4504
      %vm4506 = vcmp.lt.s32.totalorder %v4505, 0
      %v4507 = vsub.s32 0, %v4505
      %v4508 = vsel %vm4506, %v4507, %v4505
      %v4509 = vclz %v4508
      %v4510 = vsub.s32 %v4509, 2
      %vm4511 = vcmp.gt.s32.totalorder 0, %v4510
      %v4512 = vsel %vm4511, 0, %v4510
      %v4513 = vsub.s32 32, %v4512
      %v4514 = vshll.u32 %v4505, %v4512
      %v4515 = vshrl.u32 %v4497, %v4513
      %v4516 = vor.u32 %v4514, %v4515
      %v4517 = vsub.s32 4294967266, %v4512
      %v4518 = vadd.s32 %v4517, 127
      %v4519 = vshll.u32 %v4518, 23
      %v4520 = vor.u32 4788187, %v4519
      %v4521 = vand.u32 2147483647, %v4520
      %v4523 = vcvt.s32.f32 %v4516
      %v4524 = vmul.f32 %v4523, %v4521
      %v4525 = vxor.u32 %v4524, 2147483648
      %v4526 = vsel %vm4443, %v4525, %v4524
      %v4527 = vsub.s32 4, %v4503
      %v4528 = vsel %vm4443, %v4527, %v4503
      %v4529 = vsel %vm4442, %v4113, %v4526
      %v4530 = vsel %vm4442, 0, %v4528
      %v4531 = vcosq.f32.pop %v4529
      %v4532 = vsinq.f32.pop %v4529
      %vm4533 = vweird.f32 %v4113
      %v4534 = vadd.s32 %v4530, 3
      %v4535 = vand.u32 %v4534, 3
      %vm4536 = vcmp.lt.s32.totalorder %v4535, 2
      %vm4537 = vcmp.eq.s32.totalorder %v4535, 0
      %v4538 = vxor.u32 %v4532, 2147483648
      %v4539 = vsel %vm4537, %v4531, %v4538
      %vm4540 = vcmp.eq.s32.totalorder %v4535, 2
      %v4541 = vxor.u32 %v4531, 2147483648
      %v4542 = vsel %vm4540, %v4541, %v4532
      %v4543 = vsel %vm4536, %v4539, %v4542
      %v4544 = vsel %vm4533, nan, %v4543
      %v4545 = vand.u32 2147483647, %v4118
      %vm4546 = vcmp.le.f32.partialorder %v4545, 0.7853982
      %vm4547 = vcmp.lt.s32.totalorder %v4118, 0
      %v4548 = vand.u32 %v4118, 2139095040
      %v4549 = vshrl.u32 %v4548, 23
      %v4550 = vsub.s32 %v4549, 127
      %v4551 = vand.u32 2147483647, %v4118
      %v4552 = vand.u32 %v4551, 8388607
      %v4553 = vor.u32 %v4552, 8388608
      %v4554 = vsub.s32 0, %v4553
      %v4555 = vadd.s32 %v4550, 1
      %vm4556 = vcmp.gt.s32.totalorder %v4555, 0
      %v4557 = vsel %vm4556, %v4555, 0
      %v4558 = vshrl.u32 %v4557, 5
      %v4559 = vand.u32 %v4557, 31
      %v4560 = vsub.s32 32, %v4559
      %v4561 = vshrl.u32 683565275, %v4560
      %v4562 = vshll.u32 683565275, %v4559
      %v4563 = vshrl.u32 2475754826, %v4560
      %v4564 = vor.u32 %v4562, %v4563
      %v4565 = vshll.u32 2475754826, %v4559
      %v4566 = vshrl.u32 2131351028, %v4560
      %v4567 = vor.u32 %v4565, %v4566
      %v4568 = vshll.u32 2131351028, %v4559
      %v4569 = vshrl.u32 2102212464, %v4560
      %v4570 = vor.u32 %v4568, %v4569
      %v4571 = vshll.u32 2102212464, %v4559
      %v4572 = vshrl.u32 920167782, %v4560
      %v4573 = vor.u32 %v4571, %v4572
      %v4574 = vshll.u32 920167782, %v4559
      %v4575 = vshrl.u32 1326507024, %v4560
      %v4576 = vor.u32 %v4574, %v4575
      %vm4577 = vcmp.lt.s32.totalorder %v4558, 1
      %vm4578 = vcmp.lt.s32.totalorder %v4558, 2
      %vm4579 = vcmp.lt.s32.totalorder %v4558, 3
      %vm4580 = vcmp.lt.s32.totalorder %v4558, 4
      %v4581 = vsel %vm4577, %v4561, %v4564
      %v4582 = vsel %vm4580, %v4570, 2102212464
      %v4583 = vsel %vm4579, %v4567, %v4582
      %v4584 = vsel %vm4578, %v4581, %v4583
      %v4585 = vsel %vm4577, %v4564, %v4567
      %v4586 = vsel %vm4580, %v4573, 920167782
      %v4587 = vsel %vm4579, %v4570, %v4586
      %v4588 = vsel %vm4578, %v4585, %v4587
      %v4589 = vsel %vm4577, %v4567, %v4570
      %v4590 = vsel %vm4580, %v4576, 1326507024
      %v4591 = vsel %vm4579, %v4573, %v4590
      %v4592 = vsel %vm4578, %v4589, %v4591
      %v4593 = vshll.u32 %v4553, 8
      %v4594 = vmul.u32.u64.compose %v4593, %v4592
      %v4595 = vextract.low.u32 %v4594
      %v4596 = vextract.high.u32 %v4594
      %v4597 = vmul.u32.u64.compose %v4593, %v4588
      %v4598 = vextract.low.u32 %v4597
      %v4599 = vextract.high.u32 %v4597
      %v4600 = vmul.u32 %v4593, %v4584
      %v4601 = vadd.s32 %v4596, %v4598
      %vm4602 = vc.u32 %v4596, %v4598
      %v4603 = vadd.s32 %v4599, 1
      %v4604 = vsel %vm4602, %v4603, %v4599
      %v4605 = vadd.s32 %v4600, %v4604
      %v4606 = vadd.s32 %v4605, 536870912
      %v4607 = vshrl.u32 %v4606, 30
      %v4608 = vshll.u32 %v4607, 30
      %v4609 = vsub.s32 %v4605, %v4608
      %vm4610 = vcmp.lt.s32.totalorder %v4609, 0
      %v4611 = vsub.s32 0, %v4609
      %v4612 = vsel %vm4610, %v4611, %v4609
      %v4613 = vclz %v4612
      %v4614 = vsub.s32 %v4613, 2
      %vm4615 = vcmp.gt.s32.totalorder 0, %v4614
      %v4616 = vsel %vm4615, 0, %v4614
      %v4617 = vsub.s32 32, %v4616
      %v4618 = vshll.u32 %v4609, %v4616
      %v4619 = vshrl.u32 %v4601, %v4617
      %v4620 = vor.u32 %v4618, %v4619
      %v4621 = vsub.s32 4294967266, %v4616
      %v4622 = vadd.s32 %v4621, 127
      %v4623 = vshll.u32 %v4622, 23
      %v4624 = vor.u32 4788187, %v4623
      %v4625 = vand.u32 2147483647, %v4624
      %v4627 = vcvt.s32.f32 %v4620
      %v4628 = vmul.f32 %v4627, %v4625
      %v4629 = vxor.u32 %v4628, 2147483648
      %v4630 = vsel %vm4547, %v4629, %v4628
      %v4631 = vsub.s32 4, %v4607
      %v4632 = vsel %vm4547, %v4631, %v4607
      %v4633 = vsel %vm4546, %v4118, %v4630
      %v4634 = vsel %vm4546, 0, %v4632
      %v4635 = vcosq.f32.pop %v4633
      %v4636 = vsinq.f32.pop %v4633
      %vm4637 = vweird.f32 %v4118
      %v4638 = vadd.s32 %v4634, 3
      %v4639 = vand.u32 %v4638, 3
      %vm4640 = vcmp.lt.s32.totalorder %v4639, 2
      %vm4641 = vcmp.eq.s32.totalorder %v4639, 0
      %v4642 = vxor.u32 %v4636, 2147483648
      %v4643 = vsel %vm4641, %v4635, %v4642
      %vm4644 = vcmp.eq.s32.totalorder %v4639, 2
      %v4645 = vxor.u32 %v4635, 2147483648
      %v4646 = vsel %vm4644, %v4645, %v4636
      %v4647 = vsel %vm4640, %v4643, %v4646
      %v4648 = vsel %vm4637, nan, %v4647
      %v4649 = vand.u32 2147483647, %v4120
      %vm4650 = vcmp.le.f32.partialorder %v4649, 0.7853982
      %vm4651 = vcmp.lt.s32.totalorder %v4120, 0
      %v4652 = vand.u32 %v4120, 2139095040
      %v4653 = vshrl.u32 %v4652, 23
      %v4654 = vsub.s32 %v4653, 127
      %v4655 = vand.u32 2147483647, %v4120
      %v4656 = vand.u32 %v4655, 8388607
      %v4657 = vor.u32 %v4656, 8388608
      %v4658 = vsub.s32 0, %v4657
      %v4659 = vadd.s32 %v4654, 1
      %vm4660 = vcmp.gt.s32.totalorder %v4659, 0
      %v4661 = vsel %vm4660, %v4659, 0
      %v4662 = vshrl.u32 %v4661, 5
      %v4663 = vand.u32 %v4661, 31
      %v4664 = vsub.s32 32, %v4663
      %v4665 = vshrl.u32 683565275, %v4664
      %v4666 = vshll.u32 683565275, %v4663
      %v4667 = vshrl.u32 2475754826, %v4664
      %v4668 = vor.u32 %v4666, %v4667
      %v4669 = vshll.u32 2475754826, %v4663
      %v4670 = vshrl.u32 2131351028, %v4664
      %v4671 = vor.u32 %v4669, %v4670
      %v4672 = vshll.u32 2131351028, %v4663
      %v4673 = vshrl.u32 2102212464, %v4664
      %v4674 = vor.u32 %v4672, %v4673
      %v4675 = vshll.u32 2102212464, %v4663
      %v4676 = vshrl.u32 920167782, %v4664
      %v4677 = vor.u32 %v4675, %v4676
      %v4678 = vshll.u32 920167782, %v4663
      %v4679 = vshrl.u32 1326507024, %v4664
      %v4680 = vor.u32 %v4678, %v4679
      %vm4681 = vcmp.lt.s32.totalorder %v4662, 1
      %vm4682 = vcmp.lt.s32.totalorder %v4662, 2
      %vm4683 = vcmp.lt.s32.totalorder %v4662, 3
      %vm4684 = vcmp.lt.s32.totalorder %v4662, 4
      %v4685 = vsel %vm4681, %v4665, %v4668
      %v4686 = vsel %vm4684, %v4674, 2102212464
      %v4687 = vsel %vm4683, %v4671, %v4686
      %v4688 = vsel %vm4682, %v4685, %v4687
      %v4689 = vsel %vm4681, %v4668, %v4671
      %v4690 = vsel %vm4684, %v4677, 920167782
      %v4691 = vsel %vm4683, %v4674, %v4690
      %v4692 = vsel %vm4682, %v4689, %v4691
      %v4693 = vsel %vm4681, %v4671, %v4674
      %v4694 = vsel %vm4684, %v4680, 1326507024
      %v4695 = vsel %vm4683, %v4677, %v4694
      %v4696 = vsel %vm4682, %v4693, %v4695
      %v4697 = vshll.u32 %v4657, 8
      %v4698 = vmul.u32.u64.compose %v4697, %v4696
      %v4699 = vextract.low.u32 %v4698
      %v4700 = vextract.high.u32 %v4698
      %v4701 = vmul.u32.u64.compose %v4697, %v4692
      %v4702 = vextract.low.u32 %v4701
      %v4703 = vextract.high.u32 %v4701
      %v4704 = vmul.u32 %v4697, %v4688
      %v4705 = vadd.s32 %v4700, %v4702
      %vm4706 = vc.u32 %v4700, %v4702
      %v4707 = vadd.s32 %v4703, 1
      %v4708 = vsel %vm4706, %v4707, %v4703
      %v4709 = vadd.s32 %v4704, %v4708
      %v4710 = vadd.s32 %v4709, 536870912
      %v4711 = vshrl.u32 %v4710, 30
      %v4712 = vshll.u32 %v4711, 30
      %v4713 = vsub.s32 %v4709, %v4712
      %vm4714 = vcmp.lt.s32.totalorder %v4713, 0
      %v4715 = vsub.s32 0, %v4713
      %v4716 = vsel %vm4714, %v4715, %v4713
      %v4717 = vclz %v4716
      %v4718 = vsub.s32 %v4717, 2
      %vm4719 = vcmp.gt.s32.totalorder 0, %v4718
      %v4720 = vsel %vm4719, 0, %v4718
      %v4721 = vsub.s32 32, %v4720
      %v4722 = vshll.u32 %v4713, %v4720
      %v4723 = vshrl.u32 %v4705, %v4721
      %v4724 = vor.u32 %v4722, %v4723
      %v4725 = vsub.s32 4294967266, %v4720
      %v4726 = vadd.s32 %v4725, 127
      %v4727 = vshll.u32 %v4726, 23
      %v4728 = vor.u32 4788187, %v4727
      %v4729 = vand.u32 2147483647, %v4728
      %v4731 = vcvt.s32.f32 %v4724
      %v4732 = vmul.f32 %v4731, %v4729
      %v4733 = vxor.u32 %v4732, 2147483648
      %v4734 = vsel %vm4651, %v4733, %v4732
      %v4735 = vsub.s32 4, %v4711
      %v4736 = vsel %vm4651, %v4735, %v4711
      %v4737 = vsel %vm4650, %v4120, %v4734
      %v4738 = vsel %vm4650, 0, %v4736
      %v4739 = vcosq.f32.pop %v4737
      %v4740 = vsinq.f32.pop %v4737
      %vm4741 = vweird.f32 %v4120
      %v4742 = vadd.s32 %v4738, 3
      %v4743 = vand.u32 %v4742, 3
      %vm4744 = vcmp.lt.s32.totalorder %v4743, 2
      %vm4745 = vcmp.eq.s32.totalorder %v4743, 0
      %v4746 = vxor.u32 %v4740, 2147483648
      %v4747 = vsel %vm4745, %v4739, %v4746
      %vm4748 = vcmp.eq.s32.totalorder %v4743, 2
      %v4749 = vxor.u32 %v4739, 2147483648
      %v4750 = vsel %vm4748, %v4749, %v4740
      %v4751 = vsel %vm4744, %v4747, %v4750
      %v4752 = vsel %vm4741, nan, %v4751
      %v4753 = vand.u32 2147483647, %v4125
      %vm4754 = vcmp.le.f32.partialorder %v4753, 0.7853982
      %vm4755 = vcmp.lt.s32.totalorder %v4125, 0
      %v4756 = vand.u32 %v4125, 2139095040
      %v4757 = vshrl.u32 %v4756, 23
      %v4758 = vsub.s32 %v4757, 127
      %v4759 = vand.u32 2147483647, %v4125
      %v4760 = vand.u32 %v4759, 8388607
      %v4761 = vor.u32 %v4760, 8388608
      %v4762 = vsub.s32 0, %v4761
      %v4763 = vadd.s32 %v4758, 1
      %vm4764 = vcmp.gt.s32.totalorder %v4763, 0
      %v4765 = vsel %vm4764, %v4763, 0
      %v4766 = vshrl.u32 %v4765, 5
      %v4767 = vand.u32 %v4765, 31
      %v4768 = vsub.s32 32, %v4767
      %v4769 = vshrl.u32 683565275, %v4768
      %v4770 = vshll.u32 683565275, %v4767
      %v4771 = vshrl.u32 2475754826, %v4768
      %v4772 = vor.u32 %v4770, %v4771
      %v4773 = vshll.u32 2475754826, %v4767
      %v4774 = vshrl.u32 2131351028, %v4768
      %v4775 = vor.u32 %v4773, %v4774
      %v4776 = vshll.u32 2131351028, %v4767
      %v4777 = vshrl.u32 2102212464, %v4768
      %v4778 = vor.u32 %v4776, %v4777
      %v4779 = vshll.u32 2102212464, %v4767
      %v4780 = vshrl.u32 920167782, %v4768
      %v4781 = vor.u32 %v4779, %v4780
      %v4782 = vshll.u32 920167782, %v4767
      %v4783 = vshrl.u32 1326507024, %v4768
      %v4784 = vor.u32 %v4782, %v4783
      %vm4785 = vcmp.lt.s32.totalorder %v4766, 1
      %vm4786 = vcmp.lt.s32.totalorder %v4766, 2
      %vm4787 = vcmp.lt.s32.totalorder %v4766, 3
      %vm4788 = vcmp.lt.s32.totalorder %v4766, 4
      %v4789 = vsel %vm4785, %v4769, %v4772
      %v4790 = vsel %vm4788, %v4778, 2102212464
      %v4791 = vsel %vm4787, %v4775, %v4790
      %v4792 = vsel %vm4786, %v4789, %v4791
      %v4793 = vsel %vm4785, %v4772, %v4775
      %v4794 = vsel %vm4788, %v4781, 920167782
      %v4795 = vsel %vm4787, %v4778, %v4794
      %v4796 = vsel %vm4786, %v4793, %v4795
      %v4797 = vsel %vm4785, %v4775, %v4778
      %v4798 = vsel %vm4788, %v4784, 1326507024
      %v4799 = vsel %vm4787, %v4781, %v4798
      %v4800 = vsel %vm4786, %v4797, %v4799
      %v4801 = vshll.u32 %v4761, 8
      %v4802 = vmul.u32.u64.compose %v4801, %v4800
      %v4803 = vextract.low.u32 %v4802
      %v4804 = vextract.high.u32 %v4802
      %v4805 = vmul.u32.u64.compose %v4801, %v4796
      %v4806 = vextract.low.u32 %v4805
      %v4807 = vextract.high.u32 %v4805
      %v4808 = vmul.u32 %v4801, %v4792
      %v4809 = vadd.s32 %v4804, %v4806
      %vm4810 = vc.u32 %v4804, %v4806
      %v4811 = vadd.s32 %v4807, 1
      %v4812 = vsel %vm4810, %v4811, %v4807
      %v4813 = vadd.s32 %v4808, %v4812
      %v4814 = vadd.s32 %v4813, 536870912
      %v4815 = vshrl.u32 %v4814, 30
      %v4816 = vshll.u32 %v4815, 30
      %v4817 = vsub.s32 %v4813, %v4816
      %vm4818 = vcmp.lt.s32.totalorder %v4817, 0
      %v4819 = vsub.s32 0, %v4817
      %v4820 = vsel %vm4818, %v4819, %v4817
      %v4821 = vclz %v4820
      %v4822 = vsub.s32 %v4821, 2
      %vm4823 = vcmp.gt.s32.totalorder 0, %v4822
      %v4824 = vsel %vm4823, 0, %v4822
      %v4825 = vsub.s32 32, %v4824
      %v4826 = vshll.u32 %v4817, %v4824
      %v4827 = vshrl.u32 %v4809, %v4825
      %v4828 = vor.u32 %v4826, %v4827
      %v4829 = vsub.s32 4294967266, %v4824
      %v4830 = vadd.s32 %v4829, 127
      %v4831 = vshll.u32 %v4830, 23
      %v4832 = vor.u32 4788187, %v4831
      %v4833 = vand.u32 2147483647, %v4832
      %v4835 = vcvt.s32.f32 %v4828
      %v4836 = vmul.f32 %v4835, %v4833
      %v4837 = vxor.u32 %v4836, 2147483648
      %v4838 = vsel %vm4755, %v4837, %v4836
      %v4839 = vsub.s32 4, %v4815
      %v4840 = vsel %vm4755, %v4839, %v4815
      %v4841 = vsel %vm4754, %v4125, %v4838
      %v4842 = vsel %vm4754, 0, %v4840
      %v4843 = vcosq.f32.pop %v4841
      %v4844 = vsinq.f32.pop %v4841
      %vm4845 = vweird.f32 %v4125
      %v4846 = vadd.s32 %v4842, 3
      %v4847 = vand.u32 %v4846, 3
      %vm4848 = vcmp.lt.s32.totalorder %v4847, 2
      %vm4849 = vcmp.eq.s32.totalorder %v4847, 0
      %v4850 = vxor.u32 %v4844, 2147483648
      %v4851 = vsel %vm4849, %v4843, %v4850
      %vm4852 = vcmp.eq.s32.totalorder %v4847, 2
      %v4853 = vxor.u32 %v4843, 2147483648
      %v4854 = vsel %vm4852, %v4853, %v4844
      %v4855 = vsel %vm4848, %v4851, %v4854
      %v4856 = vsel %vm4845, nan, %v4855
      %v4857 = vand.u32 2147483647, %v4127
      %vm4858 = vcmp.le.f32.partialorder %v4857, 0.7853982
      %vm4859 = vcmp.lt.s32.totalorder %v4127, 0
      %v4860 = vand.u32 %v4127, 2139095040
      %v4861 = vshrl.u32 %v4860, 23
      %v4862 = vsub.s32 %v4861, 127
      %v4863 = vand.u32 2147483647, %v4127
      %v4864 = vand.u32 %v4863, 8388607
      %v4865 = vor.u32 %v4864, 8388608
      %v4866 = vsub.s32 0, %v4865
      %v4867 = vadd.s32 %v4862, 1
      %vm4868 = vcmp.gt.s32.totalorder %v4867, 0
      %v4869 = vsel %vm4868, %v4867, 0
      %v4870 = vshrl.u32 %v4869, 5
      %v4871 = vand.u32 %v4869, 31
      %v4872 = vsub.s32 32, %v4871
      %v4873 = vshrl.u32 683565275, %v4872
      %v4874 = vshll.u32 683565275, %v4871
      %v4875 = vshrl.u32 2475754826, %v4872
      %v4876 = vor.u32 %v4874, %v4875
      %v4877 = vshll.u32 2475754826, %v4871
      %v4878 = vshrl.u32 2131351028, %v4872
      %v4879 = vor.u32 %v4877, %v4878
      %v4880 = vshll.u32 2131351028, %v4871
      %v4881 = vshrl.u32 2102212464, %v4872
      %v4882 = vor.u32 %v4880, %v4881
      %v4883 = vshll.u32 2102212464, %v4871
      %v4884 = vshrl.u32 920167782, %v4872
      %v4885 = vor.u32 %v4883, %v4884
      %v4886 = vshll.u32 920167782, %v4871
      %v4887 = vshrl.u32 1326507024, %v4872
      %v4888 = vor.u32 %v4886, %v4887
      %vm4889 = vcmp.lt.s32.totalorder %v4870, 1
      %vm4890 = vcmp.lt.s32.totalorder %v4870, 2
      %vm4891 = vcmp.lt.s32.totalorder %v4870, 3
      %vm4892 = vcmp.lt.s32.totalorder %v4870, 4
      %v4893 = vsel %vm4889, %v4873, %v4876
      %v4894 = vsel %vm4892, %v4882, 2102212464
      %v4895 = vsel %vm4891, %v4879, %v4894
      %v4896 = vsel %vm4890, %v4893, %v4895
      %v4897 = vsel %vm4889, %v4876, %v4879
      %v4898 = vsel %vm4892, %v4885, 920167782
      %v4899 = vsel %vm4891, %v4882, %v4898
      %v4900 = vsel %vm4890, %v4897, %v4899
      %v4901 = vsel %vm4889, %v4879, %v4882
      %v4902 = vsel %vm4892, %v4888, 1326507024
      %v4903 = vsel %vm4891, %v4885, %v4902
      %v4904 = vsel %vm4890, %v4901, %v4903
      %v4905 = vshll.u32 %v4865, 8
      %v4906 = vmul.u32.u64.compose %v4905, %v4904
      %v4907 = vextract.low.u32 %v4906
      %v4908 = vextract.high.u32 %v4906
      %v4909 = vmul.u32.u64.compose %v4905, %v4900
      %v4910 = vextract.low.u32 %v4909
      %v4911 = vextract.high.u32 %v4909
      %v4912 = vmul.u32 %v4905, %v4896
      %v4913 = vadd.s32 %v4908, %v4910
      %vm4914 = vc.u32 %v4908, %v4910
      %v4915 = vadd.s32 %v4911, 1
      %v4916 = vsel %vm4914, %v4915, %v4911
      %v4917 = vadd.s32 %v4912, %v4916
      %v4918 = vadd.s32 %v4917, 536870912
      %v4919 = vshrl.u32 %v4918, 30
      %v4920 = vshll.u32 %v4919, 30
      %v4921 = vsub.s32 %v4917, %v4920
      %vm4922 = vcmp.lt.s32.totalorder %v4921, 0
      %v4923 = vsub.s32 0, %v4921
      %v4924 = vsel %vm4922, %v4923, %v4921
      %v4925 = vclz %v4924
      %v4926 = vsub.s32 %v4925, 2
      %vm4927 = vcmp.gt.s32.totalorder 0, %v4926
      %v4928 = vsel %vm4927, 0, %v4926
      %v4929 = vsub.s32 32, %v4928
      %v4930 = vshll.u32 %v4921, %v4928
      %v4931 = vshrl.u32 %v4913, %v4929
      %v4932 = vor.u32 %v4930, %v4931
      %v4933 = vsub.s32 4294967266, %v4928
      %v4934 = vadd.s32 %v4933, 127
      %v4935 = vshll.u32 %v4934, 23
      %v4936 = vor.u32 4788187, %v4935
      %v4937 = vand.u32 2147483647, %v4936
      %v4939 = vcvt.s32.f32 %v4932
      %v4940 = vmul.f32 %v4939, %v4937
      %v4941 = vxor.u32 %v4940, 2147483648
      %v4942 = vsel %vm4859, %v4941, %v4940
      %v4943 = vsub.s32 4, %v4919
      %v4944 = vsel %vm4859, %v4943, %v4919
      %v4945 = vsel %vm4858, %v4127, %v4942
      %v4946 = vsel %vm4858, 0, %v4944
      %v4947 = vcosq.f32.pop %v4945
      %v4948 = vsinq.f32.pop %v4945
      %vm4949 = vweird.f32 %v4127
      %v4950 = vadd.s32 %v4946, 3
      %v4951 = vand.u32 %v4950, 3
      %vm4952 = vcmp.lt.s32.totalorder %v4951, 2
      %vm4953 = vcmp.eq.s32.totalorder %v4951, 0
      %v4954 = vxor.u32 %v4948, 2147483648
      %v4955 = vsel %vm4953, %v4947, %v4954
      %vm4956 = vcmp.eq.s32.totalorder %v4951, 2
      %v4957 = vxor.u32 %v4947, 2147483648
      %v4958 = vsel %vm4956, %v4957, %v4948
      %v4959 = vsel %vm4952, %v4955, %v4958
      %v4960 = vsel %vm4949, nan, %v4959
      %v4961 = vld [vmem:[%s7] sm:$0x7]
      %v4962 = vld [vmem:[%s8] sm:$0x7]
      %4964 = vset.pattern.permute.xlu0 0
      %4965 = vperm.xlu0 %4964, %v4962
      %v4966 = vpop.permute.xlu0 %4965
      %v4969 = vsel %vm1864, %v4961, 0
      %4971 = vmatprep.subr.mxu0 0.0
      %4972 = vmatpush1.msra.mxu0 0.0
      %4973 = vmatprep.subr.mxu0 0.0
      %4974 = vmatpush1.msra.mxu0 0.0
      %4975 = vmatprep.subr.mxu0 0.0
      %4976 = vmatpush1.msra.mxu0 0.0
      %4977 = vmatprep.subr.mxu0 0.0
      %4978 = vmatpush1.msra.mxu0 0.0
      %4979 = vmatprep.subr.mxu0 0.0
      %4980 = vmatpush1.msra.mxu0 0.0
      %4981 = vmatprep.subr.mxu0 0.0
      %4982 = vmatpush1.msra.mxu0 0.0
      %4983 = vmatprep.subr.mxu0 0.0
      %4984 = vmatpush1.msra.mxu0 0.0
      %4985 = vmatprep.subr.mxu0 0.0
      %4986 = vmatpush1.msra.mxu0 0.0
      %4987 = vmatprep.subr.mxu0 0.0
      %4988 = vmatpush1.msra.mxu0 0.0
      %4989 = vmatprep.subr.mxu0 0.0
      %4990 = vmatpush1.msra.mxu0 0.0
      %4991 = vmatprep.subr.mxu0 0.0
      %4992 = vmatpush1.msra.mxu0 0.0
      %4993 = vmatprep.subr.mxu0 0.0
      %4994 = vmatpush1.msra.mxu0 0.0
      %v4995 = vand.u32 %v4960, 4294901760
      %4996 = vmatprep.subr.mxu0 %v4995
      %v4997 = vand.u32 %v4856, 4294901760
      %4998 = vmatpush1.msra.mxu0 %v4997
      %v4999 = vand.u32 %v4752, 4294901760
      %5000 = vmatprep.subr.mxu0 %v4999
      %v5001 = vand.u32 %v4648, 4294901760
      %5002 = vmatpush1.msra.mxu0 %v5001
      %v5003 = vand.u32 %v4544, 4294901760
      %5004 = vmatprep.subr.mxu0 %v5003
      %v5005 = vand.u32 %v4440, 4294901760
      %5006 = vmatpush1.msra.mxu0 %v5005
      %v5007 = vand.u32 %v4336, 4294901760
      %5008 = vmatprep.subr.mxu0 %v5007
      %v5009 = vand.u32 %v4232, 4294901760
      %5010 = vmatpush1.msra.mxu0 %v5009
      %5011 = vmatprep.subr.mxu0 0.0
      %5012 = vmatpush2.msra.mxu0 0.0
      %5013 = vmatprep.subr.mxu0 0.0
      %5014 = vmatpush2.msra.mxu0 0.0
      %5015 = vmatprep.subr.mxu0 0.0
      %5016 = vmatpush2.msra.mxu0 0.0
      %5017 = vmatprep.subr.mxu0 0.0
      %5018 = vmatpush2.msra.mxu0 0.0
      %5019 = vmatprep.subr.mxu0 0.0
      %5020 = vmatpush2.msra.mxu0 0.0
      %5021 = vmatprep.subr.mxu0 0.0
      %5022 = vmatpush2.msra.mxu0 0.0
      %5023 = vmatprep.subr.mxu0 0.0
      %5024 = vmatpush2.msra.mxu0 0.0
      %5025 = vmatprep.subr.mxu0 0.0
      %5026 = vmatpush2.msra.mxu0 0.0
      %5027 = vmatprep.subr.mxu0 0.0
      %5028 = vmatpush2.msra.mxu0 0.0
      %5029 = vmatprep.subr.mxu0 0.0
      %5030 = vmatpush2.msra.mxu0 0.0
      %5031 = vmatprep.subr.mxu0 0.0
      %5032 = vmatpush2.msra.mxu0 0.0
      %5033 = vmatprep.subr.mxu0 0.0
      %5034 = vmatpush2.msra.mxu0 0.0
      %5035 = vmatprep.subr.mxu0 0.0
      %5036 = vmatpush2.msra.mxu0 0.0
      %5037 = vmatprep.subr.mxu0 0.0
      %5038 = vmatpush2.msra.mxu0 0.0
      %5039 = vmatprep.subr.mxu0 0.0
      %5040 = vmatpush2.msra.mxu0 0.0
      %5041 = vmatprep.subr.mxu0 0.0
      %5042 = vmatpush2.msra.mxu0 0.0
      %5043 = vmatprep.mubr.f32.mxu0 0.0
      %v5044 = vand.u32 %v4969, 4294901760
      %v5045 = vsub.f32 %v4969, %v5044
      %v5046 = vand.u32 %v5045, 4294901760
      %v5047 = vsub.f32 %v5045, %v5046
      %v5048 = vand.u32 %v5047, 4294901760
      %5049 = vmatmul.mubr.f32.gmra.mxu0 %v5048
      %v5050 = vpop.f32.mrf.mxu0
      %v5051 = vadd.f32 %v4966, %v5050
      %v5052 = vpop.f32.mrf.mxu0
      %v5053 = vadd.f32 %v4966, %v5052
      %5054 = vdwg.mxu0
      %5055 = vmatprep.subr.mxu0 0.0
      %5056 = vmatpush1.msra.mxu0 0.0
      %5057 = vmatprep.subr.mxu0 0.0
      %5058 = vmatpush1.msra.mxu0 0.0
      %5059 = vmatprep.subr.mxu0 0.0
      %5060 = vmatpush1.msra.mxu0 0.0
      %5061 = vmatprep.subr.mxu0 0.0
      %5062 = vmatpush1.msra.mxu0 0.0
      %5063 = vmatprep.subr.mxu0 0.0
      %5064 = vmatpush1.msra.mxu0 0.0
      %5065 = vmatprep.subr.mxu0 0.0
      %5066 = vmatpush1.msra.mxu0 0.0
      %5067 = vmatprep.subr.mxu0 0.0
      %5068 = vmatpush1.msra.mxu0 0.0
      %5069 = vmatprep.subr.mxu0 0.0
      %5070 = vmatpush1.msra.mxu0 0.0
      %5071 = vmatprep.subr.mxu0 0.0
      %5072 = vmatpush1.msra.mxu0 0.0
      %5073 = vmatprep.subr.mxu0 0.0
      %5074 = vmatpush1.msra.mxu0 0.0
      %5075 = vmatprep.subr.mxu0 0.0
      %5076 = vmatpush1.msra.mxu0 0.0
      %5077 = vmatprep.subr.mxu0 0.0
      %5078 = vmatpush1.msra.mxu0 0.0
      %v5079 = vand.u32 %v4960, 4294901760
      %v5080 = vsub.f32 %v4960, %v5079
      %v5081 = vand.u32 %v5080, 4294901760
      %v5082 = vsub.f32 %v5080, %v5081
      %v5083 = vand.u32 %v5082, 4294901760
      %5084 = vmatprep.subr.mxu0 %v5083
      %v5085 = vand.u32 %v4856, 4294901760
      %v5086 = vsub.f32 %v4856, %v5085
      %v5087 = vand.u32 %v5086, 4294901760
      %v5088 = vsub.f32 %v5086, %v5087
      %v5089 = vand.u32 %v5088, 4294901760
      %5090 = vmatpush1.msra.mxu0 %v5089
      %v5091 = vand.u32 %v4752, 4294901760
      %v5092 = vsub.f32 %v4752, %v5091
      %v5093 = vand.u32 %v5092, 4294901760
      %v5094 = vsub.f32 %v5092, %v5093
      %v5095 = vand.u32 %v5094, 4294901760
      %5096 = vmatprep.subr.mxu0 %v5095
      %v5097 = vand.u32 %v4648, 4294901760
      %v5098 = vsub.f32 %v4648, %v5097
      %v5099 = vand.u32 %v5098, 4294901760
      %v5100 = vsub.f32 %v5098, %v5099
      %v5101 = vand.u32 %v5100, 4294901760
      %5102 = vmatpush1.msra.mxu0 %v5101
      %v5103 = vand.u32 %v4544, 4294901760
      %v5104 = vsub.f32 %v4544, %v5103
      %v5105 = vand.u32 %v5104, 4294901760
      %v5106 = vsub.f32 %v5104, %v5105
      %v5107 = vand.u32 %v5106, 4294901760
      %5108 = vmatprep.subr.mxu0 %v5107
      %v5109 = vand.u32 %v4440, 4294901760
      %v5110 = vsub.f32 %v4440, %v5109
      %v5111 = vand.u32 %v5110, 4294901760
      %v5112 = vsub.f32 %v5110, %v5111
      %v5113 = vand.u32 %v5112, 4294901760
      %5114 = vmatpush1.msra.mxu0 %v5113
      %v5115 = vand.u32 %v4336, 4294901760
      %v5116 = vsub.f32 %v4336, %v5115
      %v5117 = vand.u32 %v5116, 4294901760
      %v5118 = vsub.f32 %v5116, %v5117
      %v5119 = vand.u32 %v5118, 4294901760
      %5120 = vmatprep.subr.mxu0 %v5119
      %v5121 = vand.u32 %v4232, 4294901760
      %v5122 = vsub.f32 %v4232, %v5121
      %v5123 = vand.u32 %v5122, 4294901760
      %v5124 = vsub.f32 %v5122, %v5123
      %v5125 = vand.u32 %v5124, 4294901760
      %5126 = vmatpush1.msra.mxu0 %v5125
      %5127 = vmatprep.subr.mxu0 0.0
      %5128 = vmatpush2.msra.mxu0 0.0
      %5129 = vmatprep.subr.mxu0 0.0
      %5130 = vmatpush2.msra.mxu0 0.0
      %5131 = vmatprep.subr.mxu0 0.0
      %5132 = vmatpush2.msra.mxu0 0.0
      %5133 = vmatprep.subr.mxu0 0.0
      %5134 = vmatpush2.msra.mxu0 0.0
      %5135 = vmatprep.subr.mxu0 0.0
      %5136 = vmatpush2.msra.mxu0 0.0
      %5137 = vmatprep.subr.mxu0 0.0
      %5138 = vmatpush2.msra.mxu0 0.0
      %5139 = vmatprep.subr.mxu0 0.0
      %5140 = vmatpush2.msra.mxu0 0.0
      %5141 = vmatprep.subr.mxu0 0.0
      %5142 = vmatpush2.msra.mxu0 0.0
      %5143 = vmatprep.subr.mxu0 0.0
      %5144 = vmatpush2.msra.mxu0 0.0
      %5145 = vmatprep.subr.mxu0 0.0
      %5146 = vmatpush2.msra.mxu0 0.0
      %5147 = vmatprep.subr.mxu0 0.0
      %5148 = vmatpush2.msra.mxu0 0.0
      %5149 = vmatprep.subr.mxu0 0.0
      %5150 = vmatpush2.msra.mxu0 0.0
      %5151 = vmatprep.subr.mxu0 0.0
      %5152 = vmatpush2.msra.mxu0 0.0
      %5153 = vmatprep.subr.mxu0 0.0
      %5154 = vmatpush2.msra.mxu0 0.0
      %5155 = vmatprep.subr.mxu0 0.0
      %5156 = vmatpush2.msra.mxu0 0.0
      %5157 = vmatprep.subr.mxu0 0.0
      %5158 = vmatpush2.msra.mxu0 0.0
      %5159 = vmatprep.mubr.f32.mxu0 0.0
      %v5160 = vand.u32 %v4969, 4294901760
      %5161 = vmatmul.mubr.f32.gmra.mxu0 %v5160
      %v5162 = vpop.f32.mrf.mxu0
      %v5163 = vadd.f32 %v5051, %v5162
      %v5164 = vpop.f32.mrf.mxu0
      %v5165 = vadd.f32 %v5053, %v5164
      %5166 = vdwg.mxu0
      %5167 = vmatprep.subr.mxu0 0.0
      %5168 = vmatpush1.msra.mxu0 0.0
      %5169 = vmatprep.subr.mxu0 0.0
      %5170 = vmatpush1.msra.mxu0 0.0
      %5171 = vmatprep.subr.mxu0 0.0
      %5172 = vmatpush1.msra.mxu0 0.0
      %5173 = vmatprep.subr.mxu0 0.0
      %5174 = vmatpush1.msra.mxu0 0.0
      %5175 = vmatprep.subr.mxu0 0.0
      %5176 = vmatpush1.msra.mxu0 0.0
      %5177 = vmatprep.subr.mxu0 0.0
      %5178 = vmatpush1.msra.mxu0 0.0
      %5179 = vmatprep.subr.mxu0 0.0
      %5180 = vmatpush1.msra.mxu0 0.0
      %5181 = vmatprep.subr.mxu0 0.0
      %5182 = vmatpush1.msra.mxu0 0.0
      %5183 = vmatprep.subr.mxu0 0.0
      %5184 = vmatpush1.msra.mxu0 0.0
      %5185 = vmatprep.subr.mxu0 0.0
      %5186 = vmatpush1.msra.mxu0 0.0
      %5187 = vmatprep.subr.mxu0 0.0
      %5188 = vmatpush1.msra.mxu0 0.0
      %5189 = vmatprep.subr.mxu0 0.0
      %5190 = vmatpush1.msra.mxu0 0.0
      %v5191 = vand.u32 %v4960, 4294901760
      %v5192 = vsub.f32 %v4960, %v5191
      %5193 = vmatprep.subr.mxu0 %v5192
      %v5194 = vand.u32 %v4856, 4294901760
      %v5195 = vsub.f32 %v4856, %v5194
      %5196 = vmatpush1.msra.mxu0 %v5195
      %v5197 = vand.u32 %v4752, 4294901760
      %v5198 = vsub.f32 %v4752, %v5197
      %5199 = vmatprep.subr.mxu0 %v5198
      %v5200 = vand.u32 %v4648, 4294901760
      %v5201 = vsub.f32 %v4648, %v5200
      %5202 = vmatpush1.msra.mxu0 %v5201
      %v5203 = vand.u32 %v4544, 4294901760
      %v5204 = vsub.f32 %v4544, %v5203
      %5205 = vmatprep.subr.mxu0 %v5204
      %v5206 = vand.u32 %v4440, 4294901760
      %v5207 = vsub.f32 %v4440, %v5206
      %5208 = vmatpush1.msra.mxu0 %v5207
      %v5209 = vand.u32 %v4336, 4294901760
      %v5210 = vsub.f32 %v4336, %v5209
      %5211 = vmatprep.subr.mxu0 %v5210
      %v5212 = vand.u32 %v4232, 4294901760
      %v5213 = vsub.f32 %v4232, %v5212
      %5214 = vmatpush1.msra.mxu0 %v5213
      %5215 = vmatprep.subr.mxu0 0.0
      %5216 = vmatpush2.msra.mxu0 0.0
      %5217 = vmatprep.subr.mxu0 0.0
      %5218 = vmatpush2.msra.mxu0 0.0
      %5219 = vmatprep.subr.mxu0 0.0
      %5220 = vmatpush2.msra.mxu0 0.0
      %5221 = vmatprep.subr.mxu0 0.0
      %5222 = vmatpush2.msra.mxu0 0.0
      %5223 = vmatprep.subr.mxu0 0.0
      %5224 = vmatpush2.msra.mxu0 0.0
      %5225 = vmatprep.subr.mxu0 0.0
      %5226 = vmatpush2.msra.mxu0 0.0
      %5227 = vmatprep.subr.mxu0 0.0
      %5228 = vmatpush2.msra.mxu0 0.0
      %5229 = vmatprep.subr.mxu0 0.0
      %5230 = vmatpush2.msra.mxu0 0.0
      %5231 = vmatprep.subr.mxu0 0.0
      %5232 = vmatpush2.msra.mxu0 0.0
      %5233 = vmatprep.subr.mxu0 0.0
      %5234 = vmatpush2.msra.mxu0 0.0
      %5235 = vmatprep.subr.mxu0 0.0
      %5236 = vmatpush2.msra.mxu0 0.0
      %5237 = vmatprep.subr.mxu0 0.0
      %5238 = vmatpush2.msra.mxu0 0.0
      %5239 = vmatprep.subr.mxu0 0.0
      %5240 = vmatpush2.msra.mxu0 0.0
      %5241 = vmatprep.subr.mxu0 0.0
      %5242 = vmatpush2.msra.mxu0 0.0
      %5243 = vmatprep.subr.mxu0 0.0
      %5244 = vmatpush2.msra.mxu0 0.0
      %5245 = vmatprep.subr.mxu0 0.0
      %5246 = vmatpush2.msra.mxu0 0.0
      %5247 = vmatprep.mubr.f32.mxu0 0.0
      %v5248 = vand.u32 %v4969, 4294901760
      %v5249 = vsub.f32 %v4969, %v5248
      %5250 = vmatmul.mubr.f32.gmra.mxu0 %v5249
      %v5251 = vpop.f32.mrf.mxu0
      %v5252 = vadd.f32 %v5163, %v5251
      %v5253 = vpop.f32.mrf.mxu0
      %v5254 = vadd.f32 %v5165, %v5253
      %5255 = vdwg.mxu0
      %5256 = vmatprep.subr.mxu0 0.0
      %5257 = vmatpush1.msra.mxu0 0.0
      %5258 = vmatprep.subr.mxu0 0.0
      %5259 = vmatpush1.msra.mxu0 0.0
      %5260 = vmatprep.subr.mxu0 0.0
      %5261 = vmatpush1.msra.mxu0 0.0
      %5262 = vmatprep.subr.mxu0 0.0
      %5263 = vmatpush1.msra.mxu0 0.0
      %5264 = vmatprep.subr.mxu0 0.0
      %5265 = vmatpush1.msra.mxu0 0.0
      %5266 = vmatprep.subr.mxu0 0.0
      %5267 = vmatpush1.msra.mxu0 0.0
      %5268 = vmatprep.subr.mxu0 0.0
      %5269 = vmatpush1.msra.mxu0 0.0
      %5270 = vmatprep.subr.mxu0 0.0
      %5271 = vmatpush1.msra.mxu0 0.0
      %5272 = vmatprep.subr.mxu0 0.0
      %5273 = vmatpush1.msra.mxu0 0.0
      %5274 = vmatprep.subr.mxu0 0.0
      %5275 = vmatpush1.msra.mxu0 0.0
      %5276 = vmatprep.subr.mxu0 0.0
      %5277 = vmatpush1.msra.mxu0 0.0
      %5278 = vmatprep.subr.mxu0 0.0
      %5279 = vmatpush1.msra.mxu0 0.0
      %v5280 = vand.u32 %v4960, 4294901760
      %5281 = vmatprep.subr.mxu0 %v5280
      %v5282 = vand.u32 %v4856, 4294901760
      %5283 = vmatpush1.msra.mxu0 %v5282
      %v5284 = vand.u32 %v4752, 4294901760
      %5285 = vmatprep.subr.mxu0 %v5284
      %v5286 = vand.u32 %v4648, 4294901760
      %5287 = vmatpush1.msra.mxu0 %v5286
      %v5288 = vand.u32 %v4544, 4294901760
      %5289 = vmatprep.subr.mxu0 %v5288
      %v5290 = vand.u32 %v4440, 4294901760
      %5291 = vmatpush1.msra.mxu0 %v5290
      %v5292 = vand.u32 %v4336, 4294901760
      %5293 = vmatprep.subr.mxu0 %v5292
      %v5294 = vand.u32 %v4232, 4294901760
      %5295 = vmatpush1.msra.mxu0 %v5294
      %5296 = vmatprep.subr.mxu0 0.0
      %5297 = vmatpush2.msra.mxu0 0.0
      %5298 = vmatprep.subr.mxu0 0.0
      %5299 = vmatpush2.msra.mxu0 0.0
      %5300 = vmatprep.subr.mxu0 0.0
      %5301 = vmatpush2.msra.mxu0 0.0
      %5302 = vmatprep.subr.mxu0 0.0
      %5303 = vmatpush2.msra.mxu0 0.0
      %5304 = vmatprep.subr.mxu0 0.0
      %5305 = vmatpush2.msra.mxu0 0.0
      %5306 = vmatprep.subr.mxu0 0.0
      %5307 = vmatpush2.msra.mxu0 0.0
      %5308 = vmatprep.subr.mxu0 0.0
      %5309 = vmatpush2.msra.mxu0 0.0
      %5310 = vmatprep.subr.mxu0 0.0
      %5311 = vmatpush2.msra.mxu0 0.0
      %5312 = vmatprep.subr.mxu0 0.0
      %5313 = vmatpush2.msra.mxu0 0.0
      %5314 = vmatprep.subr.mxu0 0.0
      %5315 = vmatpush2.msra.mxu0 0.0
      %5316 = vmatprep.subr.mxu0 0.0
      %5317 = vmatpush2.msra.mxu0 0.0
      %5318 = vmatprep.subr.mxu0 0.0
      %5319 = vmatpush2.msra.mxu0 0.0
      %5320 = vmatprep.subr.mxu0 0.0
      %5321 = vmatpush2.msra.mxu0 0.0
      %5322 = vmatprep.subr.mxu0 0.0
      %5323 = vmatpush2.msra.mxu0 0.0
      %5324 = vmatprep.subr.mxu0 0.0
      %5325 = vmatpush2.msra.mxu0 0.0
      %5326 = vmatprep.subr.mxu0 0.0
      %5327 = vmatpush2.msra.mxu0 0.0
      %5328 = vmatprep.mubr.f32.mxu0 0.0
      %v5329 = vand.u32 %v4969, 4294901760
      %v5330 = vsub.f32 %v4969, %v5329
      %v5331 = vand.u32 %v5330, 4294901760
      %5332 = vmatmul.mubr.f32.gmra.mxu0 %v5331
      %v5333 = vpop.f32.mrf.mxu0
      %v5334 = vadd.f32 %v5252, %v5333
      %v5335 = vpop.f32.mrf.mxu0
      %v5336 = vadd.f32 %v5254, %v5335
      %5337 = vdwg.mxu0
      %5338 = vmatprep.subr.mxu0 0.0
      %5339 = vmatpush1.msra.mxu0 0.0
      %5340 = vmatprep.subr.mxu0 0.0
      %5341 = vmatpush1.msra.mxu0 0.0
      %5342 = vmatprep.subr.mxu0 0.0
      %5343 = vmatpush1.msra.mxu0 0.0
      %5344 = vmatprep.subr.mxu0 0.0
      %5345 = vmatpush1.msra.mxu0 0.0
      %5346 = vmatprep.subr.mxu0 0.0
      %5347 = vmatpush1.msra.mxu0 0.0
      %5348 = vmatprep.subr.mxu0 0.0
      %5349 = vmatpush1.msra.mxu0 0.0
      %5350 = vmatprep.subr.mxu0 0.0
      %5351 = vmatpush1.msra.mxu0 0.0
      %5352 = vmatprep.subr.mxu0 0.0
      %5353 = vmatpush1.msra.mxu0 0.0
      %5354 = vmatprep.subr.mxu0 0.0
      %5355 = vmatpush1.msra.mxu0 0.0
      %5356 = vmatprep.subr.mxu0 0.0
      %5357 = vmatpush1.msra.mxu0 0.0
      %5358 = vmatprep.subr.mxu0 0.0
      %5359 = vmatpush1.msra.mxu0 0.0
      %5360 = vmatprep.subr.mxu0 0.0
      %5361 = vmatpush1.msra.mxu0 0.0
      %v5362 = vand.u32 %v4960, 4294901760
      %v5363 = vsub.f32 %v4960, %v5362
      %v5364 = vand.u32 %v5363, 4294901760
      %5365 = vmatprep.subr.mxu0 %v5364
      %v5366 = vand.u32 %v4856, 4294901760
      %v5367 = vsub.f32 %v4856, %v5366
      %v5368 = vand.u32 %v5367, 4294901760
      %5369 = vmatpush1.msra.mxu0 %v5368
      %v5370 = vand.u32 %v4752, 4294901760
      %v5371 = vsub.f32 %v4752, %v5370
      %v5372 = vand.u32 %v5371, 4294901760
      %5373 = vmatprep.subr.mxu0 %v5372
      %v5374 = vand.u32 %v4648, 4294901760
      %v5375 = vsub.f32 %v4648, %v5374
      %v5376 = vand.u32 %v5375, 4294901760
      %5377 = vmatpush1.msra.mxu0 %v5376
      %v5378 = vand.u32 %v4544, 4294901760
      %v5379 = vsub.f32 %v4544, %v5378
      %v5380 = vand.u32 %v5379, 4294901760
      %5381 = vmatprep.subr.mxu0 %v5380
      %v5382 = vand.u32 %v4440, 4294901760
      %v5383 = vsub.f32 %v4440, %v5382
      %v5384 = vand.u32 %v5383, 4294901760
      %5385 = vmatpush1.msra.mxu0 %v5384
      %v5386 = vand.u32 %v4336, 4294901760
      %v5387 = vsub.f32 %v4336, %v5386
      %v5388 = vand.u32 %v5387, 4294901760
      %5389 = vmatprep.subr.mxu0 %v5388
      %v5390 = vand.u32 %v4232, 4294901760
      %v5391 = vsub.f32 %v4232, %v5390
      %v5392 = vand.u32 %v5391, 4294901760
      %5393 = vmatpush1.msra.mxu0 %v5392
      %5394 = vmatprep.subr.mxu0 0.0
      %5395 = vmatpush2.msra.mxu0 0.0
      %5396 = vmatprep.subr.mxu0 0.0
      %5397 = vmatpush2.msra.mxu0 0.0
      %5398 = vmatprep.subr.mxu0 0.0
      %5399 = vmatpush2.msra.mxu0 0.0
      %5400 = vmatprep.subr.mxu0 0.0
      %5401 = vmatpush2.msra.mxu0 0.0
      %5402 = vmatprep.subr.mxu0 0.0
      %5403 = vmatpush2.msra.mxu0 0.0
      %5404 = vmatprep.subr.mxu0 0.0
      %5405 = vmatpush2.msra.mxu0 0.0
      %5406 = vmatprep.subr.mxu0 0.0
      %5407 = vmatpush2.msra.mxu0 0.0
      %5408 = vmatprep.subr.mxu0 0.0
      %5409 = vmatpush2.msra.mxu0 0.0
      %5410 = vmatprep.subr.mxu0 0.0
      %5411 = vmatpush2.msra.mxu0 0.0
      %5412 = vmatprep.subr.mxu0 0.0
      %5413 = vmatpush2.msra.mxu0 0.0
      %5414 = vmatprep.subr.mxu0 0.0
      %5415 = vmatpush2.msra.mxu0 0.0
      %5416 = vmatprep.subr.mxu0 0.0
      %5417 = vmatpush2.msra.mxu0 0.0
      %5418 = vmatprep.subr.mxu0 0.0
      %5419 = vmatpush2.msra.mxu0 0.0
      %5420 = vmatprep.subr.mxu0 0.0
      %5421 = vmatpush2.msra.mxu0 0.0
      %5422 = vmatprep.subr.mxu0 0.0
      %5423 = vmatpush2.msra.mxu0 0.0
      %5424 = vmatprep.subr.mxu0 0.0
      %5425 = vmatpush2.msra.mxu0 0.0
      %5426 = vmatprep.mubr.f32.mxu0 0.0
      %v5427 = vand.u32 %v4969, 4294901760
      %5428 = vmatmul.mubr.f32.gmra.mxu0 %v5427
      %v5429 = vpop.f32.mrf.mxu0
      %v5430 = vadd.f32 %v5334, %v5429
      %v5431 = vpop.f32.mrf.mxu0
      %v5432 = vadd.f32 %v5336, %v5431
      %5433 = vdwg.mxu0
      %5434 = vmatprep.subr.mxu0 0.0
      %5435 = vmatpush1.msra.mxu0 0.0
      %5436 = vmatprep.subr.mxu0 0.0
      %5437 = vmatpush1.msra.mxu0 0.0
      %5438 = vmatprep.subr.mxu0 0.0
      %5439 = vmatpush1.msra.mxu0 0.0
      %5440 = vmatprep.subr.mxu0 0.0
      %5441 = vmatpush1.msra.mxu0 0.0
      %5442 = vmatprep.subr.mxu0 0.0
      %5443 = vmatpush1.msra.mxu0 0.0
      %5444 = vmatprep.subr.mxu0 0.0
      %5445 = vmatpush1.msra.mxu0 0.0
      %5446 = vmatprep.subr.mxu0 0.0
      %5447 = vmatpush1.msra.mxu0 0.0
      %5448 = vmatprep.subr.mxu0 0.0
      %5449 = vmatpush1.msra.mxu0 0.0
      %5450 = vmatprep.subr.mxu0 0.0
      %5451 = vmatpush1.msra.mxu0 0.0
      %5452 = vmatprep.subr.mxu0 0.0
      %5453 = vmatpush1.msra.mxu0 0.0
      %5454 = vmatprep.subr.mxu0 0.0
      %5455 = vmatpush1.msra.mxu0 0.0
      %5456 = vmatprep.subr.mxu0 0.0
      %5457 = vmatpush1.msra.mxu0 0.0
      %v5458 = vand.u32 %v4960, 4294901760
      %5459 = vmatprep.subr.mxu0 %v5458
      %v5460 = vand.u32 %v4856, 4294901760
      %5461 = vmatpush1.msra.mxu0 %v5460
      %v5462 = vand.u32 %v4752, 4294901760
      %5463 = vmatprep.subr.mxu0 %v5462
      %v5464 = vand.u32 %v4648, 4294901760
      %5465 = vmatpush1.msra.mxu0 %v5464
      %v5466 = vand.u32 %v4544, 4294901760
      %5467 = vmatprep.subr.mxu0 %v5466
      %v5468 = vand.u32 %v4440, 4294901760
      %5469 = vmatpush1.msra.mxu0 %v5468
      %v5470 = vand.u32 %v4336, 4294901760
      %5471 = vmatprep.subr.mxu0 %v5470
      %v5472 = vand.u32 %v4232, 4294901760
      %5473 = vmatpush1.msra.mxu0 %v5472
      %5474 = vmatprep.subr.mxu0 0.0
      %5475 = vmatpush2.msra.mxu0 0.0
      %5476 = vmatprep.subr.mxu0 0.0
      %5477 = vmatpush2.msra.mxu0 0.0
      %5478 = vmatprep.subr.mxu0 0.0
      %5479 = vmatpush2.msra.mxu0 0.0
      %5480 = vmatprep.subr.mxu0 0.0
      %5481 = vmatpush2.msra.mxu0 0.0
      %5482 = vmatprep.subr.mxu0 0.0
      %5483 = vmatpush2.msra.mxu0 0.0
      %5484 = vmatprep.subr.mxu0 0.0
      %5485 = vmatpush2.msra.mxu0 0.0
      %5486 = vmatprep.subr.mxu0 0.0
      %5487 = vmatpush2.msra.mxu0 0.0
      %5488 = vmatprep.subr.mxu0 0.0
      %5489 = vmatpush2.msra.mxu0 0.0
      %5490 = vmatprep.subr.mxu0 0.0
      %5491 = vmatpush2.msra.mxu0 0.0
      %5492 = vmatprep.subr.mxu0 0.0
      %5493 = vmatpush2.msra.mxu0 0.0
      %5494 = vmatprep.subr.mxu0 0.0
      %5495 = vmatpush2.msra.mxu0 0.0
      %5496 = vmatprep.subr.mxu0 0.0
      %5497 = vmatpush2.msra.mxu0 0.0
      %5498 = vmatprep.subr.mxu0 0.0
      %5499 = vmatpush2.msra.mxu0 0.0
      %5500 = vmatprep.subr.mxu0 0.0
      %5501 = vmatpush2.msra.mxu0 0.0
      %5502 = vmatprep.subr.mxu0 0.0
      %5503 = vmatpush2.msra.mxu0 0.0
      %5504 = vmatprep.subr.mxu0 0.0
      %5505 = vmatpush2.msra.mxu0 0.0
      %5506 = vmatprep.mubr.f32.mxu0 0.0
      %v5507 = vand.u32 %v4969, 4294901760
      %5508 = vmatmul.mubr.f32.gmra.mxu0 %v5507
      %v5509 = vpop.f32.mrf.mxu0
      %v5510 = vadd.f32 %v5430, %v5509
      %v5511 = vpop.f32.mrf.mxu0
      %v5512 = vadd.f32 %v5432, %v5511
      %5513 = vdwg.mxu0
      %v5514 = vand.u32 2147483647, %v5510
      %vm5515 = vcmp.le.f32.partialorder %v5514, 0.7853982
      %vm5516 = vcmp.lt.s32.totalorder %v5510, 0
      %v5517 = vand.u32 %v5510, 2139095040
      %v5518 = vshrl.u32 %v5517, 23
      %v5519 = vsub.s32 %v5518, 127
      %v5520 = vand.u32 2147483647, %v5510
      %v5521 = vand.u32 %v5520, 8388607
      %v5522 = vor.u32 %v5521, 8388608
      %v5523 = vsub.s32 0, %v5522
      %v5524 = vadd.s32 %v5519, 1
      %vm5525 = vcmp.gt.s32.totalorder %v5524, 0
      %v5526 = vsel %vm5525, %v5524, 0
      %v5527 = vshrl.u32 %v5526, 5
      %v5528 = vand.u32 %v5526, 31
      %v5529 = vsub.s32 32, %v5528
      %v5530 = vshrl.u32 683565275, %v5529
      %v5531 = vshll.u32 683565275, %v5528
      %v5532 = vshrl.u32 2475754826, %v5529
      %v5533 = vor.u32 %v5531, %v5532
      %v5534 = vshll.u32 2475754826, %v5528
      %v5535 = vshrl.u32 2131351028, %v5529
      %v5536 = vor.u32 %v5534, %v5535
      %v5537 = vshll.u32 2131351028, %v5528
      %v5538 = vshrl.u32 2102212464, %v5529
      %v5539 = vor.u32 %v5537, %v5538
      %v5540 = vshll.u32 2102212464, %v5528
      %v5541 = vshrl.u32 920167782, %v5529
      %v5542 = vor.u32 %v5540, %v5541
      %v5543 = vshll.u32 920167782, %v5528
      %v5544 = vshrl.u32 1326507024, %v5529
      %v5545 = vor.u32 %v5543, %v5544
      %vm5546 = vcmp.lt.s32.totalorder %v5527, 1
      %vm5547 = vcmp.lt.s32.totalorder %v5527, 2
      %vm5548 = vcmp.lt.s32.totalorder %v5527, 3
      %vm5549 = vcmp.lt.s32.totalorder %v5527, 4
      %v5550 = vsel %vm5546, %v5530, %v5533
      %v5551 = vsel %vm5549, %v5539, 2102212464
      %v5552 = vsel %vm5548, %v5536, %v5551
      %v5553 = vsel %vm5547, %v5550, %v5552
      %v5554 = vsel %vm5546, %v5533, %v5536
      %v5555 = vsel %vm5549, %v5542, 920167782
      %v5556 = vsel %vm5548, %v5539, %v5555
      %v5557 = vsel %vm5547, %v5554, %v5556
      %v5558 = vsel %vm5546, %v5536, %v5539
      %v5559 = vsel %vm5549, %v5545, 1326507024
      %v5560 = vsel %vm5548, %v5542, %v5559
      %v5561 = vsel %vm5547, %v5558, %v5560
      %v5562 = vshll.u32 %v5522, 8
      %v5563 = vmul.u32.u64.compose %v5562, %v5561
      %v5564 = vextract.low.u32 %v5563
      %v5565 = vextract.high.u32 %v5563
      %v5566 = vmul.u32.u64.compose %v5562, %v5557
      %v5567 = vextract.low.u32 %v5566
      %v5568 = vextract.high.u32 %v5566
      %v5569 = vmul.u32 %v5562, %v5553
      %v5570 = vadd.s32 %v5565, %v5567
      %vm5571 = vc.u32 %v5565, %v5567
      %v5572 = vadd.s32 %v5568, 1
      %v5573 = vsel %vm5571, %v5572, %v5568
      %v5574 = vadd.s32 %v5569, %v5573
      %v5575 = vadd.s32 %v5574, 536870912
      %v5576 = vshrl.u32 %v5575, 30
      %v5577 = vshll.u32 %v5576, 30
      %v5578 = vsub.s32 %v5574, %v5577
      %vm5579 = vcmp.lt.s32.totalorder %v5578, 0
      %v5580 = vsub.s32 0, %v5578
      %v5581 = vsel %vm5579, %v5580, %v5578
      %v5582 = vclz %v5581
      %v5583 = vsub.s32 %v5582, 2
      %vm5584 = vcmp.gt.s32.totalorder 0, %v5583
      %v5585 = vsel %vm5584, 0, %v5583
      %v5586 = vsub.s32 32, %v5585
      %v5587 = vshll.u32 %v5578, %v5585
      %v5588 = vshrl.u32 %v5570, %v5586
      %v5589 = vor.u32 %v5587, %v5588
      %v5590 = vsub.s32 4294967266, %v5585
      %v5591 = vadd.s32 %v5590, 127
      %v5592 = vshll.u32 %v5591, 23
      %v5593 = vor.u32 4788187, %v5592
      %v5594 = vand.u32 2147483647, %v5593
      %v5596 = vcvt.s32.f32 %v5589
      %v5597 = vmul.f32 %v5596, %v5594
      %v5598 = vxor.u32 %v5597, 2147483648
      %v5599 = vsel %vm5516, %v5598, %v5597
      %v5600 = vsub.s32 4, %v5576
      %v5601 = vsel %vm5516, %v5600, %v5576
      %v5602 = vsel %vm5515, %v5510, %v5599
      %v5603 = vsel %vm5515, 0, %v5601
      %v5604 = vcosq.f32.pop %v5602
      %v5605 = vsinq.f32.pop %v5602
      %vm5606 = vweird.f32 %v5510
      %v5607 = vadd.s32 %v5603, 3
      %v5608 = vand.u32 %v5607, 3
      %vm5609 = vcmp.lt.s32.totalorder %v5608, 2
      %vm5610 = vcmp.eq.s32.totalorder %v5608, 0
      %v5611 = vxor.u32 %v5605, 2147483648
      %v5612 = vsel %vm5610, %v5604, %v5611
      %vm5613 = vcmp.eq.s32.totalorder %v5608, 2
      %v5614 = vxor.u32 %v5604, 2147483648
      %v5615 = vsel %vm5613, %v5614, %v5605
      %v5616 = vsel %vm5609, %v5612, %v5615
      %v5617 = vsel %vm5606, nan, %v5616
      %v5618 = vand.u32 2147483647, %v5512
      %vm5619 = vcmp.le.f32.partialorder %v5618, 0.7853982
      %vm5620 = vcmp.lt.s32.totalorder %v5512, 0
      %v5621 = vand.u32 %v5512, 2139095040
      %v5622 = vshrl.u32 %v5621, 23
      %v5623 = vsub.s32 %v5622, 127
      %v5624 = vand.u32 2147483647, %v5512
      %v5625 = vand.u32 %v5624, 8388607
      %v5626 = vor.u32 %v5625, 8388608
      %v5627 = vsub.s32 0, %v5626
      %v5628 = vadd.s32 %v5623, 1
      %vm5629 = vcmp.gt.s32.totalorder %v5628, 0
      %v5630 = vsel %vm5629, %v5628, 0
      %v5631 = vshrl.u32 %v5630, 5
      %v5632 = vand.u32 %v5630, 31
      %v5633 = vsub.s32 32, %v5632
      %v5634 = vshrl.u32 683565275, %v5633
      %v5635 = vshll.u32 683565275, %v5632
      %v5636 = vshrl.u32 2475754826, %v5633
      %v5637 = vor.u32 %v5635, %v5636
      %v5638 = vshll.u32 2475754826, %v5632
      %v5639 = vshrl.u32 2131351028, %v5633
      %v5640 = vor.u32 %v5638, %v5639
      %v5641 = vshll.u32 2131351028, %v5632
      %v5642 = vshrl.u32 2102212464, %v5633
      %v5643 = vor.u32 %v5641, %v5642
      %v5644 = vshll.u32 2102212464, %v5632
      %v5645 = vshrl.u32 920167782, %v5633
      %v5646 = vor.u32 %v5644, %v5645
      %v5647 = vshll.u32 920167782, %v5632
      %v5648 = vshrl.u32 1326507024, %v5633
      %v5649 = vor.u32 %v5647, %v5648
      %vm5650 = vcmp.lt.s32.totalorder %v5631, 1
      %vm5651 = vcmp.lt.s32.totalorder %v5631, 2
      %vm5652 = vcmp.lt.s32.totalorder %v5631, 3
      %vm5653 = vcmp.lt.s32.totalorder %v5631, 4
      %v5654 = vsel %vm5650, %v5634, %v5637
      %v5655 = vsel %vm5653, %v5643, 2102212464
      %v5656 = vsel %vm5652, %v5640, %v5655
      %v5657 = vsel %vm5651, %v5654, %v5656
      %v5658 = vsel %vm5650, %v5637, %v5640
      %v5659 = vsel %vm5653, %v5646, 920167782
      %v5660 = vsel %vm5652, %v5643, %v5659
      %v5661 = vsel %vm5651, %v5658, %v5660
      %v5662 = vsel %vm5650, %v5640, %v5643
      %v5663 = vsel %vm5653, %v5649, 1326507024
      %v5664 = vsel %vm5652, %v5646, %v5663
      %v5665 = vsel %vm5651, %v5662, %v5664
      %v5666 = vshll.u32 %v5626, 8
      %v5667 = vmul.u32.u64.compose %v5666, %v5665
      %v5668 = vextract.low.u32 %v5667
      %v5669 = vextract.high.u32 %v5667
      %v5670 = vmul.u32.u64.compose %v5666, %v5661
      %v5671 = vextract.low.u32 %v5670
      %v5672 = vextract.high.u32 %v5670
      %v5673 = vmul.u32 %v5666, %v5657
      %v5674 = vadd.s32 %v5669, %v5671
      %vm5675 = vc.u32 %v5669, %v5671
      %v5676 = vadd.s32 %v5672, 1
      %v5677 = vsel %vm5675, %v5676, %v5672
      %v5678 = vadd.s32 %v5673, %v5677
      %v5679 = vadd.s32 %v5678, 536870912
      %v5680 = vshrl.u32 %v5679, 30
      %v5681 = vshll.u32 %v5680, 30
      %v5682 = vsub.s32 %v5678, %v5681
      %vm5683 = vcmp.lt.s32.totalorder %v5682, 0
      %v5684 = vsub.s32 0, %v5682
      %v5685 = vsel %vm5683, %v5684, %v5682
      %v5686 = vclz %v5685
      %v5687 = vsub.s32 %v5686, 2
      %vm5688 = vcmp.gt.s32.totalorder 0, %v5687
      %v5689 = vsel %vm5688, 0, %v5687
      %v5690 = vsub.s32 32, %v5689
      %v5691 = vshll.u32 %v5682, %v5689
      %v5692 = vshrl.u32 %v5674, %v5690
      %v5693 = vor.u32 %v5691, %v5692
      %v5694 = vsub.s32 4294967266, %v5689
      %v5695 = vadd.s32 %v5694, 127
      %v5696 = vshll.u32 %v5695, 23
      %v5697 = vor.u32 4788187, %v5696
      %v5698 = vand.u32 2147483647, %v5697
      %v5700 = vcvt.s32.f32 %v5693
      %v5701 = vmul.f32 %v5700, %v5698
      %v5702 = vxor.u32 %v5701, 2147483648
      %v5703 = vsel %vm5620, %v5702, %v5701
      %v5704 = vsub.s32 4, %v5680
      %v5705 = vsel %vm5620, %v5704, %v5680
      %v5706 = vsel %vm5619, %v5512, %v5703
      %v5707 = vsel %vm5619, 0, %v5705
      %v5708 = vcosq.f32.pop %v5706
      %v5709 = vsinq.f32.pop %v5706
      %vm5710 = vweird.f32 %v5512
      %v5711 = vadd.s32 %v5707, 3
      %v5712 = vand.u32 %v5711, 3
      %vm5713 = vcmp.lt.s32.totalorder %v5712, 2
      %vm5714 = vcmp.eq.s32.totalorder %v5712, 0
      %v5715 = vxor.u32 %v5709, 2147483648
      %v5716 = vsel %vm5714, %v5708, %v5715
      %vm5717 = vcmp.eq.s32.totalorder %v5712, 2
      %v5718 = vxor.u32 %v5708, 2147483648
      %v5719 = vsel %vm5717, %v5718, %v5709
      %v5720 = vsel %vm5713, %v5716, %v5719
      %v5721 = vsel %vm5710, nan, %v5720
      %v5722 = vxor.u32 %v5617, 2147483648
      %v5723 = vxor.u32 %v5721, 2147483648
      %v5724 = vmul.f32 %v5722, 1.442695
      %v5725 = vpow.pop %v5724
      %v5726 = vmul.f32 %v5723, 1.442695
      %v5727 = vpow.pop %v5726
      %v5728 = vadd.f32 %v5725, 1.0
      %v5729 = vadd.f32 %v5727, 1.0
      %v5730 = vrcp.pop %v5728
      %v5731 = vmul.f32 1.0, %v5730
      %v5732 = vrcp.pop %v5729
      %v5733 = vmul.f32 1.0, %v5732
      %v5736 = vcombine.low %v5731, %v5733
      %5738 = vst [vmem:[%s334] sm:$0x77] %v5736
      %s5739 = smul.u32 2, %s20
      %p5740 = scmp.lt.s32.totalorder %s5739, 3
      %s5741 = scalar_select %p5740, %s5739, 3
      %s5742 = smul.addr %s5741, 4
      %s5743 = scalar_lea.vmem %s9, %s5742
      // Predicated region
      $region57: #{siren_mlp_forward.1} parent=55 // pred_check
        %p5744 = pneg %p232
      $region58: #{siren_mlp_forward.1} parent=55 // pred_check_branch
        %5746 = sbr.rel (%p5744) target = $region60
      $region59: #{siren_mlp_forward.1} parent=55 // pred_region
        %s5747 = smul.u32 2, %s20
      $region60: #{siren_mlp_forward.1} parent=55 // pred_fallthru
        _
    $region56: #{siren_mlp_forward.1} parent=5 // pred_fallthru
      _
    %p5748 = scmp.le.s32.totalorder 2, %s15
    // Predicated region
    $region61: #{siren_mlp_forward.1} parent=5 // pred_check
      %p5749 = pneg %p5748
    $region62: #{siren_mlp_forward.1} parent=5 // pred_check_branch
      %5751 = sbr.rel (%p5749) target = $region64
    $region63: #{siren_mlp_forward.1} parent=5 // pred_region
      %s5752 = ssub.s32 %s15, 2
      // Predicated region
      $region65: #{siren_mlp_forward.1} parent=63 // pred_check
        %p5753 = pneg %p238
      $region66: #{siren_mlp_forward.1} parent=63 // pred_check_branch
        %5755 = sbr.rel (%p5753) target = $region68
      $region67: #{siren_mlp_forward.1} parent=63 // pred_region
        %s5756 = smul.u32 2, %s21
        %p5757 = scmp.lt.s32.totalorder %s5756, 3
        %s5758 = scalar_select %p5757, %s5756, 3
        %s5759 = smul.addr %s5758, 4
        %s5760 = scalar_lea.vmem %s9, %s5759
      $region68: #{siren_mlp_forward.1} parent=63 // pred_fallthru
        _
    $region64: #{siren_mlp_forward.1} parent=5 // pred_fallthru
      _
  $region6: #{siren_mlp_forward.1} parent=0 // loop_footer
    %s19 = sadd.s32 1, %s15
  $region7: #{siren_mlp_forward.1} parent=0 // loop_footer_branch
    %14 = sbr.rel target = $region3
  $region8: #{siren_mlp_forward.1} parent=0 // loop_exit
    _

</llo_original>
